<compile_context>
chip_gen: v5e
topology: v5e:2x2
jax: 0.10.0
libtpu: 0.0.40
codegen_flags: <defaults>
</compile_context>

<pallas_src>
import functools

import numpy as np

import jax
import jax.numpy as jnp
from jax.experimental import pallas as pl
from jax.experimental.pallas import tpu as pltpu

_BN_EPS = 1e-5
_SQRT_2_OVER_PI = 0.7978845608028654


def _round_up(v, m):
    return ((v + m - 1) // m) * m


# --------------------------------------------------------------------------
# In-kernel math helpers (pure jnp, safe to lower in Mosaic)
# --------------------------------------------------------------------------
def _gelu_tanh(x):
    # tanh-form GELU: transcendental goes to the EUP (its own bundle slot).
    # TODO(synk): torch nn.GELU() default is exact erf; difference < 1e-3.
    return 0.5 * x * (1.0 + jnp.tanh(_SQRT_2_OVER_PI * (x + 0.044715 * x * x * x)))


def _emit_stats(st_ref, u2d, rows_valid):
    """Per-tile per-channel (sum, sumsq) BN partials via two skinny matmuls.

    st_ref block is (1, 8, C): row 0 = sum, row 1 = sum of squares, rows 2..7
    zero.  Rows whose global index >= rows_valid (batch-padding images) are
    excluded so the BatchNorm statistics match the un-padded batch;
    rows_valid is None when the batch needs no padding (mask skipped).
    NOTE: padded batch rows are *not* zero after patch embedding; they are
    harmless only because of this mask and the final [:N] slice.
    """
    tm, c = u2d.shape
    if rows_valid is None:
        mrow = jnp.ones((1, tm), jnp.float32)
    else:
        base = pl.program_id(0) * tm
        ridx = jax.lax.broadcasted_iota(jnp.int32, (1, tm), 1) + base
        mrow = (ridx < rows_valid).astype(jnp.float32)
    s1 = jnp.dot(mrow, u2d, preferred_element_type=jnp.float32)        # (1, C)
    s2 = jnp.dot(mrow, u2d * u2d, preferred_element_type=jnp.float32)  # (1, C)
    rsel = jax.lax.broadcasted_iota(jnp.int32, (8, 1), 0)
    st_ref[0] = jnp.where(rsel == 0, s1, 0.0) + jnp.where(rsel == 1, s2, 0.0)


# --------------------------------------------------------------------------
# Pallas kernels
# --------------------------------------------------------------------------
def _patch_embed_kernel(rows_valid, x_ref, w_ref, b_ref, u_ref, st_ref):
    # u = GELU(patches @ W + b)  (pre-BN; BN moments emitted as partials).
    y = jnp.dot(x_ref[...], w_ref[...], preferred_element_type=jnp.float32) + b_ref[...]
    u = _gelu_tanh(y).astype(u_ref.dtype)
    u_ref[...] = u
    _emit_stats(st_ref, u.astype(jnp.float32), rows_valid)


def _dw_block_kernel(ks, band_h, rows_valid, u_ref, sc_ref, sh_ref, w_ref, b_ref,
                     a_ref, st_ref, hp_ref):
    # h   = BN(previous stage)           (fused multiply-add with folded stats)
    # a   = GELU(depthwise_conv(h) + b)  ('same' padding built in-kernel)
    ipt, Ho, Wo, C = u_ref.shape
    pad = (ks - 1) // 2
    Hp, Wp = hp_ref.shape[1], hp_ref.shape[2]
    off = Wp - Wo - pad                  # 8-aligned W offset of the interior

    h = u_ref[...].astype(jnp.float32) * sc_ref[...] + sh_ref[...]

    # Zero only the halo (done every step: a one-time init would miss the
    # second core's scratch under megacore sharding), then write the interior
    # at an 8-aligned W offset.  Columns [0, off-pad) are never read.
    if pad > 0:
        hp_ref[:, 0:pad, :, :] = jnp.zeros((ipt, pad, Wp, C), jnp.float32)
        hp_ref[:, pad + Ho:Hp, :, :] = jnp.zeros((ipt, pad, Wp, C), jnp.float32)
        hp_ref[:, pad:pad + Ho, off - pad:off, :] = jnp.zeros(
            (ipt, Ho, pad, C), jnp.float32)
        hp_ref[:, pad:pad + Ho, off + Wo:off + Wo + pad, :] = jnp.zeros(
            (ipt, Ho, pad, C), jnp.float32)
    hp_ref[:, pad:pad + Ho, off:off + Wo, :] = h

    bias = b_ref[...]
    # k*k tap accumulation over row bands: the band accumulator stays in vregs
    # instead of round-tripping VMEM per tap.
    # TODO(synk): express the kw shift with pltpu.roll on 8-aligned loads.
    for r0 in range(0, Ho, band_h):
        bh = min(band_h, Ho - r0)
        acc = jnp.zeros((ipt, bh, Wo, C), jnp.float32)
        for kh in range(ks):
            for kw in range(ks):
                tap = kh * ks + kw
                sl = hp_ref[:, r0 + kh:r0 + kh + bh,
                            off - pad + kw:off - pad + kw + Wo, :]
                acc = acc + sl * w_ref[tap:tap + 1, :]
        a_ref[:, r0:r0 + bh, :, :] = _gelu_tanh(acc + bias).astype(a_ref.dtype)

    # Stats from the bf16-rounded values (what the consumer actually sees).
    a2d = a_ref[...].reshape(ipt * Ho * Wo, C).astype(jnp.float32)
    _emit_stats(st_ref, a2d, rows_valid)


def _pw_block_kernel(rows_valid, a_ref, sca_ref, sha_ref, u_ref, sc_ref, sh_ref,
                     w_ref, b_ref, o_ref, st_ref):
    # z = BN(dwconv activation) + residual; w = GELU(z @ Wpw + b)  (pre-BN out)
    h = u_ref[...].astype(jnp.float32) * sc_ref[...] + sh_ref[...]
    z = a_ref[...].astype(jnp.float32) * sca_ref[...] + sha_ref[...] + h
    y = jnp.dot(z.astype(w_ref.dtype), w_ref[...],
                preferred_element_type=jnp.float32) + b_ref[...]
    w = _gelu_tanh(y).astype(o_ref.dtype)
    o_ref[...] = w
    _emit_stats(st_ref, w.astype(jnp.float32), rows_valid)


def _head_kernel(u_ref, sc_ref, sh_ref, pool_ref, w_ref, b_ref, o_ref):
    # BN(last stage) -> AdaptiveAvgPool2d((1,1)) (as a tiny matmul) -> Linear.
    h = u_ref[...].astype(jnp.float32) * sc_ref[...] + sh_ref[...]
    pooled = jnp.dot(pool_ref[...], h, preferred_element_type=jnp.float32)
    o_ref[0] = jnp.dot(pooled.astype(w_ref.dtype), w_ref[...],
                       preferred_element_type=jnp.float32) + b_ref[...]


# --------------------------------------------------------------------------
# Wrapper: layout plumbing + per-channel BN folds (O(C) glue) in plain JAX
# --------------------------------------------------------------------------
def _bn_fold(partials, gamma, beta, count):
    """Reduce per-tile (sum, sumsq) partials -> per-channel scale/shift."""
    s = jnp.sum(partials, axis=0)                       # (8, C)
    mean = s[0] / count
    var = jnp.maximum(s[1] / count - mean * mean, 0.0)  # biased var (train fwd)
    scale = gamma * jax.lax.rsqrt(var + _BN_EPS)
    shift = beta - mean * scale
    return scale.reshape(1, -1), shift.reshape(1, -1)


def conv_mixer_forward(x_nchw, params, *, kernel_size, patch_size, rows_per_tile=1024):
    f32, bf16 = jnp.float32, jnp.bfloat16
    x = jnp.transpose(x_nchw, (0, 2, 3, 1)).astype(f32)     # NCHW -> NHWC
    N, H, W, Cin = x.shape
    p = patch_size
    assert H % p == 0 and W % p == 0
    Ho, Wo = H // p, W // p
    HoWo = Ho * Wo
    dim = params["patch_w"].shape[1]
    n_classes = params["head_w"].shape[1]

    Cp = _round_up(dim, 128)            # lane-dense channel width
    NCp = _round_up(n_classes, 128)     # lane-dense head output
    K = p * p * Cin
    Kp = _round_up(K, 8)
    ktaps = kernel_size * kernel_size
    Ktp = _round_up(ktaps, 8)

    # ---- tile geometry: whole images per row tile; prefer >= 2 grid tiles
    # so the "parallel" axis can shard across v7x's two TensorCores. --------
    ipt = max(1, min(N, rows_per_tile // max(HoWo, 1)))
    if N >= 2:
        ipt = min(ipt, max(1, N // 2))
    while (ipt * HoWo) % 8 != 0:        # keep the sublane dim of 2-D tiles aligned
        ipt += 1
    TM = ipt * HoWo
    Npad = _round_up(N, ipt)
    Rpad = Npad * HoWo
    num_tiles = Npad // ipt
    R = N * HoWo                        # real rows for BatchNorm statistics
    rows_valid = None if Rpad == R else R

    # ---- pointwise kernel: independent rows -> its own (larger) row tile ---
    pw_group = 1
    for cand in range(num_tiles, 0, -1):
        if (num_tiles % cand == 0 and TM * cand <= 2048
                and (num_tiles // cand) >= min(2, num_tiles)):
            pw_group = cand
            break
    TMpw = TM * pw_group
    num_tiles_pw = num_tiles // pw_group

    # ---- channel groups for the depthwise kernel (VMEM / megacore on v7x) --
    cg = 128
    for cand in (512, 384, 256, 128):
        if cand <= Cp and Cp % cand == 0:
            cg = cand
            break
    num_cg = Cp // cg

    # ---- depthwise geometry -------------------------------------------------
    pad = (kernel_size - 1) // 2
    off = _round_up(max(pad, 1), 8)     # 8-aligned interior write offset in W
    # Band height chosen so the band accumulator stays ~<=128 KiB (in vregs).
    band_h = max(1, min(Ho, (128 * 1024) // max(1, ipt * Wo * cg * 4)))

    # ---- pack / pad parameters to lane-dense layouts -----------------------
    def pad2(a, r, c, dt):
        return jnp.zeros((r, c), dt).at[: a.shape[0], : a.shape[1]].set(a.astype(dt))

    def pad_row(a, n):                  # (m,) -> (1, n) f32
        return jnp.zeros((1, n), f32).at[0, : a.shape[0]].set(a.astype(f32))

    def pad1(a, n):                     # (m,) -> (n,) f32
        return jnp.zeros((n,), f32).at[: a.shape[0]].set(a.astype(f32))

    patch_w = pad2(params["patch_w"], Kp, Cp, bf16)
    patch_b = pad_row(params["patch_b"], Cp)
    head_w = pad2(params["head_w"], Cp, NCp, bf16)
    head_b = pad_row(params["head_b"], NCp)

    # per-tile pooling operator (block-diagonal mean over each image's rows)
    pool_np = np.zeros((ipt, TM), np.float32)
    for i in range(ipt):
        pool_np[i, i * HoWo:(i + 1) * HoWo] = 1.0 / HoWo
    pool_mat = jnp.asarray(pool_np)

    # ---- patch extraction (stride-p conv as matmul over flattened patches) --
    patches = x.reshape(N, Ho, p, Wo, p, Cin).transpose(0, 1, 3, 2, 4, 5)
    patches = pad2(patches.reshape(N * HoWo, K), Rpad, Kp, bf16)

    # ---- shared pallas_call plumbing ---------------------------------------
    # 40 MiB scoped VMEM leaves headroom on v7x's 64 MiB part; v5e/v6e
    # (128 MiB) could go higher but these tiles are sized to fit anyway.
    vmem_limit = 40 * 1024 * 1024
    cp1 = pltpu.CompilerParams(dimension_semantics=("parallel",),
                               vmem_limit_bytes=vmem_limit)
    cp2 = pltpu.CompilerParams(dimension_semantics=("parallel", "parallel"),
                               vmem_limit_bytes=vmem_limit)
    st_shape = lambda nt: jax.ShapeDtypeStruct((nt, 8, Cp), f32)

    # ---- patch embedding ----------------------------------------------------
    u, st = pl.pallas_call(
        functools.partial(_patch_embed_kernel, rows_valid),
        grid=(num_tiles,),
        in_specs=(pl.BlockSpec((TM, Kp), lambda i: (i, 0)),
                  pl.BlockSpec((Kp, Cp), lambda i: (0, 0)),
                  pl.BlockSpec((1, Cp), lambda i: (0, 0))),
        out_specs=(pl.BlockSpec((TM, Cp), lambda i: (i, 0)),
                   pl.BlockSpec((1, 8, Cp), lambda i: (i, 0, 0))),
        out_shape=(jax.ShapeDtypeStruct((Rpad, Cp), bf16), st_shape(num_tiles)),
        compiler_params=cp1,
    )(patches, patch_w, patch_b)
    sc, sh = _bn_fold(st, pad1(params["patch_g"], Cp), pad1(params["patch_be"], Cp), R)

    # ---- residual ConvMixer blocks ------------------------------------------
    u4_shape = (Npad, Ho, Wo, Cp)
    spatial_spec = pl.BlockSpec((ipt, Ho, Wo, cg), lambda i, c: (i, 0, 0, c))
    chan_spec = pl.BlockSpec((1, cg), lambda i, c: (0, c))
    dw_scratch = [pltpu.VMEM((ipt, Ho + 2 * pad, off + Wo + pad, cg), f32)]

    for blk in params["blocks"]:
        dw_w = pad2(blk["dw_w"], Ktp, Cp, f32)       # tiny; kept f32 (elementwise)
        dw_b = pad_row(blk["dw_b"], Cp)
        pw_w = pad2(blk["pw_w"], Cp, Cp, bf16)
        pw_b = pad_row(blk["pw_b"], Cp)

        # depthwise conv + GELU (+ BN moment partials); BN of the *previous*
        # stage is applied on the fly via (sc, sh).
        a4, st_a = pl.pallas_call(
            functools.partial(_dw_block_kernel, kernel_size, band_h, rows_valid),
            grid=(num_tiles, num_cg),
            in_specs=(spatial_spec, chan_spec, chan_spec,
                      pl.BlockSpec((Ktp, cg), lambda i, c: (0, c)), chan_spec),
            out_specs=(spatial_spec,
                       pl.BlockSpec((1, 8, cg), lambda i, c: (i, 0, c))),
            out_shape=(jax.ShapeDtypeStruct(u4_shape, bf16), st_shape(num_tiles)),
            scratch_shapes=dw_scratch,
            compiler_params=cp2,
        )(u.reshape(u4_shape), sc, sh, dw_w, dw_b)
        sca, sha = _bn_fold(st_a, pad1(blk["dw_g"], Cp), pad1(blk["dw_be"], Cp), R)

        # BN(dw) + residual + 1x1 conv + GELU (+ BN moment partials).
        u_new, st_w = pl.pallas_call(
            functools.partial(_pw_block_kernel, rows_valid),
            grid=(num_tiles_pw,),
            in_specs=(pl.BlockSpec((TMpw, Cp), lambda i: (i, 0)),
                      pl.BlockSpec((1, Cp), lambda i: (0, 0)),
                      pl.BlockSpec((1, Cp), lambda i: (0, 0)),
                      pl.BlockSpec((TMpw, Cp), lambda i: (i, 0)),
                      pl.BlockSpec((1, Cp), lambda i: (0, 0)),
                      pl.BlockSpec((1, Cp), lambda i: (0, 0)),
                      pl.BlockSpec((Cp, Cp), lambda i: (0, 0)),
                      pl.BlockSpec((1, Cp), lambda i: (0, 0))),
            out_specs=(pl.BlockSpec((TMpw, Cp), lambda i: (i, 0)),
                       pl.BlockSpec((1, 8, Cp), lambda i: (i, 0, 0))),
            out_shape=(jax.ShapeDtypeStruct((Rpad, Cp), bf16), st_shape(num_tiles_pw)),
            compiler_params=cp1,
        )(a4.reshape(Rpad, Cp), sca, sha, u, sc, sh, pw_w, pw_b)
        sc, sh = _bn_fold(st_w, pad1(blk["pw_g"], Cp), pad1(blk["pw_be"], Cp), R)
        u = u_new

    # ---- global average pool + linear head ----------------------------------
    logits = pl.pallas_call(
        _head_kernel,
        grid=(num_tiles,),
        in_specs=(pl.BlockSpec((TM, Cp), lambda i: (i, 0)),
                  pl.BlockSpec((1, Cp), lambda i: (0, 0)),
                  pl.BlockSpec((1, Cp), lambda i: (0, 0)),
                  pl.BlockSpec((ipt, TM), lambda i: (0, 0)),
                  pl.BlockSpec((Cp, NCp), lambda i: (0, 0)),
                  pl.BlockSpec((1, NCp), lambda i: (0, 0))),
        out_specs=pl.BlockSpec((1, ipt, NCp), lambda i: (i, 0, 0)),
        out_shape=jax.ShapeDtypeStruct((num_tiles, ipt, NCp), f32),
        compiler_params=cp1,
    )(u, sc, sh, pool_mat, head_w, head_b)
    return logits.reshape(Npad, NCp)[:N, :n_classes]


# --------------------------------------------------------------------------
# Deterministic parameter init (PyTorch shapes, repacked for the kernels)
# --------------------------------------------------------------------------
def init_params(key, dim, depth, kernel_size=5, patch_size=2, n_classes=10, in_ch=3):
    keys = jax.random.split(key, depth + 3)
    f32 = jnp.float32

    def _w(k, shape, scale):
        return scale * jax.random.normal(k, shape, f32)

    params = {}
    w = _w(keys[0], (dim, in_ch, patch_size, patch_size), 0.2)      # torch Conv2d weight
    b = _w(keys[1], (dim,), 0.05)
    params["patch_w"] = jnp.transpose(w, (2, 3, 1, 0)).reshape(
        patch_size * patch_size * in_ch, dim)                       # (kh, kw, cin) order
    params["patch_b"] = b
    params["patch_g"] = jnp.ones((dim,), f32)                       # BN gamma init
    params["patch_be"] = jnp.zeros((dim,), f32)                     # BN beta init

    blocks = []
    for d in range(depth):
        k1, k2, k3, k4 = jax.random.split(keys[2 + d], 4)
        dw = _w(k1, (dim, 1, kernel_size, kernel_size), 0.1)        # (dim,1,k,k)
        dwb = _w(k2, (dim,), 0.05)
        pw = _w(k3, (dim, dim, 1, 1), 0.15)                         # (dim,dim,1,1)
        pwb = _w(k4, (dim,), 0.05)
        blocks.append({
            "dw_w": jnp.transpose(dw[:, 0], (1, 2, 0)).reshape(kernel_size * kernel_size, dim),
            "dw_b": dwb,
            "dw_g": jnp.ones((dim,), f32),
            "dw_be": jnp.zeros((dim,), f32),
            "pw_w": jnp.transpose(pw[:, :, 0, 0], (1, 0)),          # (C_in, C_out)
            "pw_b": pwb,
            "pw_g": jnp.ones((dim,), f32),
            "pw_be": jnp.zeros((dim,), f32),
        })
    params["blocks"] = blocks

    kh1, kh2 = jax.random.split(keys[-1], 2)
    hw = _w(kh1, (n_classes, dim), 0.1)                             # torch Linear (out, in)
    hb = _w(kh2, (n_classes,), 0.05)
    params["head_w"] = jnp.transpose(hw, (1, 0))
    params["head_b"] = hb
    return params


# --------------------------------------------------------------------------
# Pure-JAX reference (same math, f32, no Pallas) for the correctness check
# --------------------------------------------------------------------------
def _reference_forward(x_nchw, params, *, kernel_size, patch_size):
    x = jnp.transpose(x_nchw, (0, 2, 3, 1)).astype(jnp.float32)
    N, H, W, Cin = x.shape
    p = patch_size
    Ho, Wo = H // p, W // p
    dim = params["patch_w"].shape[1]

    def bn(y2d, g, be):
        mean = jnp.mean(y2d, axis=0, keepdims=True)
        var = jnp.mean(jnp.square(y2d - mean), axis=0, keepdims=True)
        return (y2d - mean) * jax.lax.rsqrt(var + _BN_EPS) * g + be

    patches = x.reshape(N, Ho, p, Wo, p, Cin).transpose(0, 1, 3, 2, 4, 5)
    patches = patches.reshape(-1, p * p * Cin)
    h = bn(_gelu_tanh(patches @ params["patch_w"] + params["patch_b"]),
           params["patch_g"], params["patch_be"]).reshape(N, Ho, Wo, dim)

    pad = (kernel_size - 1) // 2
    for blk in params["blocks"]:
        hp = jnp.pad(h, ((0, 0), (pad, pad), (pad, pad), (0, 0)))
        acc = jnp.zeros_like(h)
        for kh in range(kernel_size):
            for kw in range(kernel_size):
                tap = kh * kernel_size + kw
                acc = acc + hp[:, kh:kh + Ho, kw:kw + Wo, :] * blk["dw_w"][tap]
        y = _gelu_tanh(acc + blk["dw_b"])
        h = bn(y.reshape(-1, dim), blk["dw_g"], blk["dw_be"]).reshape(N, Ho, Wo, dim) + h
        z = bn(_gelu_tanh(h.reshape(-1, dim) @ blk["pw_w"] + blk["pw_b"]),
               blk["pw_g"], blk["pw_be"])
        h = z.reshape(N, Ho, Wo, dim)

    pooled = jnp.mean(h.reshape(N, Ho * Wo, dim), axis=1)
    return pooled @ params["head_w"] + params["head_b"]


if __name__ == "__main__":
    dim, depth, kernel_size, patch_size, n_classes = 32, 2, 5, 2, 10
    key = jax.random.PRNGKey(0)
    kx, kp = jax.random.split(key)
    # N=5 -> 3 row tiles with one batch-padded image: exercises the tiled /
    # pipelined path, the cross-tile BatchNorm moment reduction and the
    # row-validity mask.
    x = jax.random.normal(kx, (5, 3, 16, 16), jnp.float32)   # NCHW, like PyTorch
    params = init_params(kp, dim, depth, kernel_size, patch_size, n_classes)

    fwd = jax.jit(functools.partial(conv_mixer_forward, kernel_size=kernel_size,
                                    patch_size=patch_size, rows_per_tile=128))
    logits = jax.block_until_ready(fwd(x, params))

    ref = _reference_forward(x, params, kernel_size=kernel_size, patch_size=patch_size)
    assert logits.shape == (5, n_classes), logits.shape
    assert bool(jnp.all(jnp.isfinite(logits)))
    max_err = float(jnp.max(jnp.abs(logits - ref)))
    # bf16 activation storage / bf16 MXU operands -> looser tolerance vs f32 ref.
    assert bool(jnp.allclose(logits, ref, atol=3e-2, rtol=3e-2)), (max_err, logits, ref)
    print("KERNEL_OK")
</pallas_src>

<mosaic_0001>
module attributes {stable_mosaic.version = 11 : i64} {
  func.func @_patch_embed_kernel(%arg0: i32, %arg1: memref<128x16xbf16, #tpu.memory_space<vmem>>, %arg2: memref<16x128xbf16, #tpu.memory_space<vmem>>, %arg3: memref<1x128xf32, #tpu.memory_space<vmem>>, %arg4: memref<128x128xbf16, #tpu.memory_space<vmem>>, %arg5: memref<1x8x128xf32, #tpu.memory_space<vmem>>) attributes {dimension_semantics = [#tpu.dimension_semantics<parallel>], iteration_bounds = array<i64: 3>, scalar_prefetch = 0 : i64, scratch_operands = 0 : i64, tpu.core_type = #tpu.core_type<tc>, window_params = [{transform_indices = @transform_0, window_bounds = array<i64: 128, 16>}, {pipeline_mode = #tpu.pipeline_mode<synchronous>, transform_indices = @transform_1, window_bounds = array<i64: 16, 128>}, {pipeline_mode = #tpu.pipeline_mode<synchronous>, transform_indices = @transform_2, window_bounds = array<i64: 1, 128>}, {transform_indices = @transform_3, window_bounds = array<i64: 128, 128>}, {transform_indices = @transform_4, window_bounds = array<i64: 1, 8, 128>}]} {
    %c0 = arith.constant 0 : index
    %c0_0 = arith.constant 0 : index
    %0 = vector.load %arg1[%c0, %c0_0] : memref<128x16xbf16, #tpu.memory_space<vmem>>, vector<128x16xbf16>
    %c0_1 = arith.constant 0 : index
    %c0_2 = arith.constant 0 : index
    %1 = vector.load %arg2[%c0_1, %c0_2] : memref<16x128xbf16, #tpu.memory_space<vmem>>, vector<16x128xbf16>
    %cst = arith.constant dense<0.000000e+00> : vector<128x128xf32>
    %2 = tpu.matmul %0, %1, %cst {dimension_numbers = #tpu.dot_dimension_numbers<[1], [0], [0], [1], [0, 0, 1, 1], [], []>} : vector<128x16xbf16>, vector<16x128xbf16>, vector<128x128xf32> -> vector<128x128xf32>
    %c0_3 = arith.constant 0 : index
    %c0_4 = arith.constant 0 : index
    %3 = vector.load %arg3[%c0_3, %c0_4] : memref<1x128xf32, #tpu.memory_space<vmem>>, vector<1x128xf32>
    %4 = vector.broadcast %3 : vector<1x128xf32> to vector<128x128xf32>
    %5 = arith.addf %2, %4 : vector<128x128xf32>
    %cst_5 = arith.constant 5.000000e-01 : f32
    %6 = vector.broadcast %cst_5 : f32 to vector<128x128xf32>
    %7 = arith.mulf %6, %5 : vector<128x128xf32>
    %cst_6 = arith.constant 4.471500e-02 : f32
    %8 = vector.broadcast %cst_6 : f32 to vector<128x128xf32>
    %9 = arith.mulf %8, %5 : vector<128x128xf32>
    %10 = arith.mulf %9, %5 : vector<128x128xf32>
    %11 = arith.mulf %10, %5 : vector<128x128xf32>
    %12 = arith.addf %5, %11 : vector<128x128xf32>
    %cst_7 = arith.constant 0.797884583 : f32
    %13 = vector.broadcast %cst_7 : f32 to vector<128x128xf32>
    %14 = arith.mulf %13, %12 : vector<128x128xf32>
    %15 = math.tanh %14 : vector<128x128xf32>
    %cst_8 = arith.constant 1.000000e+00 : f32
    %16 = vector.broadcast %cst_8 : f32 to vector<128x128xf32>
    %17 = arith.addf %16, %15 : vector<128x128xf32>
    %18 = arith.mulf %7, %17 : vector<128x128xf32>
    %19 = arith.truncf %18 : vector<128x128xf32> to vector<128x128xbf16>
    %c0_9 = arith.constant 0 : index
    %c0_10 = arith.constant 0 : index
    %20 = vector.load %arg4[%c0_9, %c0_10] : memref<128x128xbf16, #tpu.memory_space<vmem>>, vector<128x128xbf16>
    tpu.vector_store %arg4[%c0_9, %c0_10], %19 {strides = array<i32>} : memref<128x128xbf16, #tpu.memory_space<vmem>>, vector<128x128xbf16>,
    %21 = arith.extf %19 : vector<128x128xbf16> to vector<128x128xf32>
    %c128_i32 = arith.constant 128 : i32
    %22 = arith.muli %arg0, %c128_i32 : i32
    %23 = tpu.iota {dimensions = array<i32: 1>} : vector<1x128xi32>
    %24 = vector.broadcast %22 : i32 to vector<1x128xi32>
    %25 = arith.addi %23, %24 : vector<1x128xi32>
    %c320_i32 = arith.constant 320 : i32
    %26 = vector.broadcast %c320_i32 : i32 to vector<1x128xi32>
    %27 = arith.cmpi slt, %25, %26 : vector<1x128xi32>
    %28 = arith.extui %27 : vector<1x128xi1> to vector<1x128xi32>
    %29 = arith.sitofp %28 : vector<1x128xi32> to vector<1x128xf32>
    %cst_11 = arith.constant dense<0.000000e+00> : vector<1x128xf32>
    %30 = tpu.matmul %29, %21, %cst_11 {dimension_numbers = #tpu.dot_dimension_numbers<[1], [0], [0], [1], [0, 0, 1, 1], [], []>} : vector<1x128xf32>, vector<128x128xf32>, vector<1x128xf32> -> vector<1x128xf32>
    %31 = arith.mulf %21, %21 : vector<128x128xf32>
    %cst_12 = arith.constant dense<0.000000e+00> : vector<1x128xf32>
    %32 = tpu.matmul %29, %31, %cst_12 {dimension_numbers = #tpu.dot_dimension_numbers<[1], [0], [0], [1], [0, 0, 1, 1], [], []>} : vector<1x128xf32>, vector<128x128xf32>, vector<1x128xf32> -> vector<1x128xf32>
    %33 = tpu.iota {dimensions = array<i32: 0>} : vector<8x1xi32>
    %c0_i32 = arith.constant 0 : i32
    %34 = vector.broadcast %c0_i32 : i32 to vector<8x1xi32>
    %35 = arith.cmpi eq, %33, %34 : vector<8x1xi32>
    %cst_13 = arith.constant 0.000000e+00 : f32
    %36 = vector.shape_cast %35 : vector<8x1xi1> to vector<8x1xi1>
    %37 = vector.broadcast %36 : vector<8x1xi1> to vector<8x128xi1>
    %38 = vector.shape_cast %30 : vector<1x128xf32> to vector<1x128xf32>
    %39 = vector.broadcast %38 : vector<1x128xf32> to vector<8x128xf32>
    %40 = vector.broadcast %cst_13 : f32 to vector<8x128xf32>
    %41 = arith.select %37, %39, %40 : vector<8x128xi1>, vector<8x128xf32>
    %c1_i32 = arith.constant 1 : i32
    %42 = vector.broadcast %c1_i32 : i32 to vector<8x1xi32>
    %43 = arith.cmpi eq, %33, %42 : vector<8x1xi32>
    %cst_14 = arith.constant 0.000000e+00 : f32
    %44 = vector.shape_cast %43 : vector<8x1xi1> to vector<8x1xi1>
    %45 = vector.broadcast %44 : vector<8x1xi1> to vector<8x128xi1>
    %46 = vector.shape_cast %32 : vector<1x128xf32> to vector<1x128xf32>
    %47 = vector.broadcast %46 : vector<1x128xf32> to vector<8x128xf32>
    %48 = vector.broadcast %cst_14 : f32 to vector<8x128xf32>
    %49 = arith.select %45, %47, %48 : vector<8x128xi1>, vector<8x128xf32>
    %50 = arith.addf %41, %49 : vector<8x128xf32>
    %c0_15 = arith.constant 0 : index
    %c0_16 = arith.constant 0 : index
    %c0_17 = arith.constant 0 : index
    %51 = vector.load %arg5[%c0_15, %c0_16, %c0_17] : memref<1x8x128xf32, #tpu.memory_space<vmem>>, vector<1x8x128xf32>
    %52 = vector.shape_cast %51 : vector<1x8x128xf32> to vector<8x128xf32>
    %53 = vector.shape_cast %50 : vector<8x128xf32> to vector<1x8x128xf32>
    tpu.vector_store %arg5[%c0_15, %c0_16, %c0_17], %53 {strides = array<i32>} : memref<1x8x128xf32, #tpu.memory_space<vmem>>, vector<1x8x128xf32>,
    return
  }
  func.func @transform_0(%arg0: i32) -> (i32, i32) {
    %c0_i32 = arith.constant 0 : i32
    %c0_i32_0 = arith.constant 0 : i32
    return %arg0, %c0_i32 : i32, i32
  }
  func.func @transform_1(%arg0: i32) -> (i32, i32) {
    %c0_i32 = arith.constant 0 : i32
    %c0_i32_0 = arith.constant 0 : i32
    %c0_i32_1 = arith.constant 0 : i32
    return %c0_i32, %c0_i32_0 : i32, i32
  }
  func.func @transform_2(%arg0: i32) -> (i32, i32) {
    %c0_i32 = arith.constant 0 : i32
    %c0_i32_0 = arith.constant 0 : i32
    %c0_i32_1 = arith.constant 0 : i32
    return %c0_i32, %c0_i32_0 : i32, i32
  }
  func.func @transform_3(%arg0: i32) -> (i32, i32) {
    %c0_i32 = arith.constant 0 : i32
    %c0_i32_0 = arith.constant 0 : i32
    return %arg0, %c0_i32 : i32, i32
  }
  func.func @transform_4(%arg0: i32) -> (i32, i32, i32) {
    %c0_i32 = arith.constant 0 : i32
    %c0_i32_0 = arith.constant 0 : i32
    %c0_i32_1 = arith.constant 0 : i32
    return %arg0, %c0_i32, %c0_i32_0 : i32, i32, i32
  }
}

module attributes {stable_mosaic.version = 11 : i64} {
  func.func @_dw_block_kernel(%arg0: i32, %arg1: i32, %arg2: memref<2x8x8x128xbf16, #tpu.memory_space<vmem>>, %arg3: memref<1x128xf32, #tpu.memory_space<vmem>>, %arg4: memref<1x128xf32, #tpu.memory_space<vmem>>, %arg5: memref<32x128xf32, #tpu.memory_space<vmem>>, %arg6: memref<1x128xf32, #tpu.memory_space<vmem>>, %arg7: memref<2x8x8x128xbf16, #tpu.memory_space<vmem>>, %arg8: memref<1x8x128xf32, #tpu.memory_space<vmem>>, %arg9: memref<2x12x18x128xf32, #tpu.memory_space<vmem>>) attributes {dimension_semantics = [#tpu.dimension_semantics<parallel>, #tpu.dimension_semantics<parallel>], iteration_bounds = array<i64: 3, 1>, scalar_prefetch = 0 : i64, scratch_operands = 1 : i64, tpu.core_type = #tpu.core_type<tc>, window_params = [{transform_indices = @transform_0, window_bounds = array<i64: 2, 8, 8, 128>}, {transform_indices = @transform_1, window_bounds = array<i64: 1, 128>}, {transform_indices = @transform_2, window_bounds = array<i64: 1, 128>}, {transform_indices = @transform_3, window_bounds = array<i64: 32, 128>}, {transform_indices = @transform_4, window_bounds = array<i64: 1, 128>}, {transform_indices = @transform_5, window_bounds = array<i64: 2, 8, 8, 128>}, {transform_indices = @transform_6, window_bounds = array<i64: 1, 8, 128>}]} {
    %c0 = arith.constant 0 : index
    %c0_0 = arith.constant 0 : index
    %c0_1 = arith.constant 0 : index
    %c0_2 = arith.constant 0 : index
    %0 = vector.load %arg2[%c0, %c0_0, %c0_1, %c0_2] : memref<2x8x8x128xbf16, #tpu.memory_space<vmem>>, vector<2x8x8x128xbf16>
    %1 = arith.extf %0 : vector<2x8x8x128xbf16> to vector<2x8x8x128xf32>
    %c0_3 = arith.constant 0 : index
    %c0_4 = arith.constant 0 : index
    %2 = vector.load %arg3[%c0_3, %c0_4] : memref<1x128xf32, #tpu.memory_space<vmem>>, vector<1x128xf32>
    %3 = vector.shape_cast %2 : vector<1x128xf32> to vector<1x1x1x128xf32>
    %4 = vector.broadcast %3 : vector<1x1x1x128xf32> to vector<2x8x8x128xf32>
    %5 = arith.mulf %1, %4 : vector<2x8x8x128xf32>
    %c0_5 = arith.constant 0 : index
    %c0_6 = arith.constant 0 : index
    %6 = vector.load %arg4[%c0_5, %c0_6] : memref<1x128xf32, #tpu.memory_space<vmem>>, vector<1x128xf32>
    %7 = vector.shape_cast %6 : vector<1x128xf32> to vector<1x1x1x128xf32>
    %8 = vector.broadcast %7 : vector<1x1x1x128xf32> to vector<2x8x8x128xf32>
    %9 = arith.addf %5, %8 : vector<2x8x8x128xf32>
    %cst = arith.constant 0.000000e+00 : f32
    %10 = vector.broadcast %cst : f32 to vector<2x2x18x128xf32>
    %c0_7 = arith.constant 0 : index
    %c0_8 = arith.constant 0 : index
    %c0_9 = arith.constant 0 : index
    %c0_10 = arith.constant 0 : index
    %11 = vector.load %arg9[%c0_7, %c0_8, %c0_9, %c0_10] : memref<2x12x18x128xf32, #tpu.memory_space<vmem>>, vector<2x2x18x128xf32>
    tpu.vector_store %arg9[%c0_7, %c0_8, %c0_9, %c0_10], %10 {strides = array<i32>} : memref<2x12x18x128xf32, #tpu.memory_space<vmem>>, vector<2x2x18x128xf32>,
    %cst_11 = arith.constant 0.000000e+00 : f32
    %12 = vector.broadcast %cst_11 : f32 to vector<2x2x18x128xf32>
    %c0_12 = arith.constant 0 : index
    %c10 = arith.constant 10 : index
    %c0_13 = arith.constant 0 : index
    %c0_14 = arith.constant 0 : index
    %13 = vector.load %arg9[%c0_12, %c10, %c0_13, %c0_14] : memref<2x12x18x128xf32, #tpu.memory_space<vmem>>, vector<2x2x18x128xf32>
    tpu.vector_store %arg9[%c0_12, %c10, %c0_13, %c0_14], %12 {strides = array<i32>} : memref<2x12x18x128xf32, #tpu.memory_space<vmem>>, vector<2x2x18x128xf32>,
    %cst_15 = arith.constant 0.000000e+00 : f32
    %14 = vector.broadcast %cst_15 : f32 to vector<2x8x2x128xf32>
    %c0_16 = arith.constant 0 : index
    %c2 = arith.constant 2 : index
    %c6 = arith.constant 6 : index
    %c0_17 = arith.constant 0 : index
    %15 = vector.load %arg9[%c0_16, %c2, %c6, %c0_17] : memref<2x12x18x128xf32, #tpu.memory_space<vmem>>, vector<2x8x2x128xf32>
    tpu.vector_store %arg9[%c0_16, %c2, %c6, %c0_17], %14 {strides = array<i32>} : memref<2x12x18x128xf32, #tpu.memory_space<vmem>>, vector<2x8x2x128xf32>,
    %cst_18 = arith.constant 0.000000e+00 : f32
    %16 = vector.broadcast %cst_18 : f32 to vector<2x8x2x128xf32>
    %c0_19 = arith.constant 0 : index
    %c2_20 = arith.constant 2 : index
    %c16 = arith.constant 16 : index
    %c0_21 = arith.constant 0 : index
    %17 = vector.load %arg9[%c0_19, %c2_20, %c16, %c0_21] : memref<2x12x18x128xf32, #tpu.memory_space<vmem>>, vector<2x8x2x128xf32>
    tpu.vector_store %arg9[%c0_19, %c2_20, %c16, %c0_21], %16 {strides = array<i32>} : memref<2x12x18x128xf32, #tpu.memory_space<vmem>>, vector<2x8x2x128xf32>,
    %c0_22 = arith.constant 0 : index
    %c2_23 = arith.constant 2 : index
    %c8 = arith.constant 8 : index
    %c0_24 = arith.constant 0 : index
    %18 = vector.load %arg9[%c0_22, %c2_23, %c8, %c0_24] : memref<2x12x18x128xf32, #tpu.memory_space<vmem>>, vector<2x8x8x128xf32>
    tpu.vector_store %arg9[%c0_22, %c2_23, %c8, %c0_24], %9 {strides = array<i32>} : memref<2x12x18x128xf32, #tpu.memory_space<vmem>>, vector<2x8x8x128xf32>,
    %c0_25 = arith.constant 0 : index
    %c0_26 = arith.constant 0 : index
    %19 = vector.load %arg6[%c0_25, %c0_26] : memref<1x128xf32, #tpu.memory_space<vmem>>, vector<1x128xf32>
    %cst_27 = arith.constant 0.000000e+00 : f32
    %20 = vector.broadcast %cst_27 : f32 to vector<2x8x8x128xf32>
    %c0_28 = arith.constant 0 : index
    %c0_29 = arith.constant 0 : index
    %c6_30 = arith.constant 6 : index
    %c0_31 = arith.constant 0 : index
    %21 = vector.load %arg9[%c0_28, %c0_29, %c6_30, %c0_31] : memref<2x12x18x128xf32, #tpu.memory_space<vmem>>, vector<2x8x8x128xf32>
    %c0_32 = arith.constant 0 : index
    %c0_33 = arith.constant 0 : index
    %22 = vector.load %arg5[%c0_32, %c0_33] : memref<32x128xf32, #tpu.memory_space<vmem>>, vector<1x128xf32>
    %23 = vector.shape_cast %22 : vector<1x128xf32> to vector<1x1x1x128xf32>
    %24 = vector.broadcast %23 : vector<1x1x1x128xf32> to vector<2x8x8x128xf32>
    %25 = arith.mulf %21, %24 : vector<2x8x8x128xf32>
    %26 = arith.addf %20, %25 : vector<2x8x8x128xf32>
    %c0_34 = arith.constant 0 : index
    %c0_35 = arith.constant 0 : index
    %c7 = arith.constant 7 : index
    %c0_36 = arith.constant 0 : index
    %27 = vector.load %arg9[%c0_34, %c0_35, %c7, %c0_36] : memref<2x12x18x128xf32, #tpu.memory_space<vmem>>, vector<2x8x8x128xf32>
    %c1 = arith.constant 1 : index
    %c0_37 = arith.constant 0 : index
    %28 = vector.load %arg5[%c1, %c0_37] : memref<32x128xf32, #tpu.memory_space<vmem>>, vector<1x128xf32>
    %29 = vector.shape_cast %28 : vector<1x128xf32> to vector<1x1x1x128xf32>
    %30 = vector.broadcast %29 : vector<1x1x1x128xf32> to vector<2x8x8x128xf32>
    %31 = arith.mulf %27, %30 : vector<2x8x8x128xf32>
    %32 = arith.addf %26, %31 : vector<2x8x8x128xf32>
    %c0_38 = arith.constant 0 : index
    %c0_39 = arith.constant 0 : index
    %c8_40 = arith.constant 8 : index
    %c0_41 = arith.constant 0 : index
    %33 = vector.load %arg9[%c0_38, %c0_39, %c8_40, %c0_41] : memref<2x12x18x128xf32, #tpu.memory_space<vmem>>, vector<2x8x8x128xf32>
    %c2_42 = arith.constant 2 : index
    %c0_43 = arith.constant 0 : index
    %34 = vector.load %arg5[%c2_42, %c0_43] : memref<32x128xf32, #tpu.memory_space<vmem>>, vector<1x128xf32>
    %35 = vector.shape_cast %34 : vector<1x128xf32> to vector<1x1x1x128xf32>
    %36 = vector.broadcast %35 : vector<1x1x1x128xf32> to vector<2x8x8x128xf32>
    %37 = arith.mulf %33, %36 : vector<2x8x8x128xf32>
    %38 = arith.addf %32, %37 : vector<2x8x8x128xf32>
    %c0_44 = arith.constant 0 : index
    %c0_45 = arith.constant 0 : index
    %c9 = arith.constant 9 : index
    %c0_46 = arith.constant 0 : index
    %39 = vector.load %arg9[%c0_44, %c0_45, %c9, %c0_46] : memref<2x12x18x128xf32, #tpu.memory_space<vmem>>, vector<2x8x8x128xf32>
    %c3 = arith.constant 3 : index
    %c0_47 = arith.constant 0 : index
    %40 = vector.load %arg5[%c3, %c0_47] : memref<32x128xf32, #tpu.memory_space<vmem>>, vector<1x128xf32>
    %41 = vector.shape_cast %40 : vector<1x128xf32> to vector<1x1x1x128xf32>
    %42 = vector.broadcast %41 : vector<1x1x1x128xf32> to vector<2x8x8x128xf32>
    %43 = arith.mulf %39, %42 : vector<2x8x8x128xf32>
    %44 = arith.addf %38, %43 : vector<2x8x8x128xf32>
    %c0_48 = arith.constant 0 : index
    %c0_49 = arith.constant 0 : index
    %c10_50 = arith.constant 10 : index
    %c0_51 = arith.constant 0 : index
    %45 = vector.load %arg9[%c0_48, %c0_49, %c10_50, %c0_51] : memref<2x12x18x128xf32, #tpu.memory_space<vmem>>, vector<2x8x8x128xf32>
    %c4 = arith.constant 4 : index
    %c0_52 = arith.constant 0 : index
    %46 = vector.load %arg5[%c4, %c0_52] : memref<32x128xf32, #tpu.memory_space<vmem>>, vector<1x128xf32>
    %47 = vector.shape_cast %46 : vector<1x128xf32> to vector<1x1x1x128xf32>
    %48 = vector.broadcast %47 : vector<1x1x1x128xf32> to vector<2x8x8x128xf32>
    %49 = arith.mulf %45, %48 : vector<2x8x8x128xf32>
    %50 = arith.addf %44, %49 : vector<2x8x8x128xf32>
    %c0_53 = arith.constant 0 : index
    %c1_54 = arith.constant 1 : index
    %c6_55 = arith.constant 6 : index
    %c0_56 = arith.constant 0 : index
    %51 = vector.load %arg9[%c0_53, %c1_54, %c6_55, %c0_56] : memref<2x12x18x128xf32, #tpu.memory_space<vmem>>, vector<2x8x8x128xf32>
    %c5 = arith.constant 5 : index
    %c0_57 = arith.constant 0 : index
    %52 = vector.load %arg5[%c5, %c0_57] : memref<32x128xf32, #tpu.memory_space<vmem>>, vector<1x128xf32>
    %53 = vector.shape_cast %52 : vector<1x128xf32> to vector<1x1x1x128xf32>
    %54 = vector.broadcast %53 : vector<1x1x1x128xf32> to vector<2x8x8x128xf32>
    %55 = arith.mulf %51, %54 : vector<2x8x8x128xf32>
    %56 = arith.addf %50, %55 : vector<2x8x8x128xf32>
    %c0_58 = arith.constant 0 : index
    %c1_59 = arith.constant 1 : index
    %c7_60 = arith.constant 7 : index
    %c0_61 = arith.constant 0 : index
    %57 = vector.load %arg9[%c0_58, %c1_59, %c7_60, %c0_61] : memref<2x12x18x128xf32, #tpu.memory_space<vmem>>, vector<2x8x8x128xf32>
    %c6_62 = arith.constant 6 : index
    %c0_63 = arith.constant 0 : index
    %58 = vector.load %arg5[%c6_62, %c0_63] : memref<32x128xf32, #tpu.memory_space<vmem>>, vector<1x128xf32>
    %59 = vector.shape_cast %58 : vector<1x128xf32> to vector<1x1x1x128xf32>
    %60 = vector.broadcast %59 : vector<1x1x1x128xf32> to vector<2x8x8x128xf32>
    %61 = arith.mulf %57, %60 : vector<2x8x8x128xf32>
    %62 = arith.addf %56, %61 : vector<2x8x8x128xf32>
    %c0_64 = arith.constant 0 : index
    %c1_65 = arith.constant 1 : index
    %c8_66 = arith.constant 8 : index
    %c0_67 = arith.constant 0 : index
    %63 = vector.load %arg9[%c0_64, %c1_65, %c8_66, %c0_67] : memref<2x12x18x128xf32, #tpu.memory_space<vmem>>, vector<2x8x8x128xf32>
    %c7_68 = arith.constant 7 : index
    %c0_69 = arith.constant 0 : index
    %64 = vector.load %arg5[%c7_68, %c0_69] : memref<32x128xf32, #tpu.memory_space<vmem>>, vector<1x128xf32>
    %65 = vector.shape_cast %64 : vector<1x128xf32> to vector<1x1x1x128xf32>
    %66 = vector.broadcast %65 : vector<1x1x1x128xf32> to vector<2x8x8x128xf32>
    %67 = arith.mulf %63, %66 : vector<2x8x8x128xf32>
    %68 = arith.addf %62, %67 : vector<2x8x8x128xf32>
    %c0_70 = arith.constant 0 : index
    %c1_71 = arith.constant 1 : index
    %c9_72 = arith.constant 9 : index
    %c0_73 = arith.constant 0 : index
    %69 = vector.load %arg9[%c0_70, %c1_71, %c9_72, %c0_73] : memref<2x12x18x128xf32, #tpu.memory_space<vmem>>, vector<2x8x8x128xf32>
    %c8_74 = arith.constant 8 : index
    %c0_75 = arith.constant 0 : index
    %70 = vector.load %arg5[%c8_74, %c0_75] : memref<32x128xf32, #tpu.memory_space<vmem>>, vector<1x128xf32>
    %71 = vector.shape_cast %70 : vector<1x128xf32> to vector<1x1x1x128xf32>
    %72 = vector.broadcast %71 : vector<1x1x1x128xf32> to vector<2x8x8x128xf32>
    %73 = arith.mulf %69, %72 : vector<2x8x8x128xf32>
    %74 = arith.addf %68, %73 : vector<2x8x8x128xf32>
    %c0_76 = arith.constant 0 : index
    %c1_77 = arith.constant 1 : index
    %c10_78 = arith.constant 10 : index
    %c0_79 = arith.constant 0 : index
    %75 = vector.load %arg9[%c0_76, %c1_77, %c10_78, %c0_79] : memref<2x12x18x128xf32, #tpu.memory_space<vmem>>, vector<2x8x8x128xf32>
    %c9_80 = arith.constant 9 : index
    %c0_81 = arith.constant 0 : index
    %76 = vector.load %arg5[%c9_80, %c0_81] : memref<32x128xf32, #tpu.memory_space<vmem>>, vector<1x128xf32>
    %77 = vector.shape_cast %76 : vector<1x128xf32> to vector<1x1x1x128xf32>
    %78 = vector.broadcast %77 : vector<1x1x1x128xf32> to vector<2x8x8x128xf32>
    %79 = arith.mulf %75, %78 : vector<2x8x8x128xf32>
    %80 = arith.addf %74, %79 : vector<2x8x8x128xf32>
    %c0_82 = arith.constant 0 : index
    %c2_83 = arith.constant 2 : index
    %c6_84 = arith.constant 6 : index
    %c0_85 = arith.constant 0 : index
    %81 = vector.load %arg9[%c0_82, %c2_83, %c6_84, %c0_85] : memref<2x12x18x128xf32, #tpu.memory_space<vmem>>, vector<2x8x8x128xf32>
    %c10_86 = arith.constant 10 : index
    %c0_87 = arith.constant 0 : index
    %82 = vector.load %arg5[%c10_86, %c0_87] : memref<32x128xf32, #tpu.memory_space<vmem>>, vector<1x128xf32>
    %83 = vector.shape_cast %82 : vector<1x128xf32> to vector<1x1x1x128xf32>
    %84 = vector.broadcast %83 : vector<1x1x1x128xf32> to vector<2x8x8x128xf32>
    %85 = arith.mulf %81, %84 : vector<2x8x8x128xf32>
    %86 = arith.addf %80, %85 : vector<2x8x8x128xf32>
    %c0_88 = arith.constant 0 : index
    %c2_89 = arith.constant 2 : index
    %c7_90 = arith.constant 7 : index
    %c0_91 = arith.constant 0 : index
    %87 = vector.load %arg9[%c0_88, %c2_89, %c7_90, %c0_91] : memref<2x12x18x128xf32, #tpu.memory_space<vmem>>, vector<2x8x8x128xf32>
    %c11 = arith.constant 11 : index
    %c0_92 = arith.constant 0 : index
    %88 = vector.load %arg5[%c11, %c0_92] : memref<32x128xf32, #tpu.memory_space<vmem>>, vector<1x128xf32>
    %89 = vector.shape_cast %88 : vector<1x128xf32> to vector<1x1x1x128xf32>
    %90 = vector.broadcast %89 : vector<1x1x1x128xf32> to vector<2x8x8x128xf32>
    %91 = arith.mulf %87, %90 : vector<2x8x8x128xf32>
    %92 = arith.addf %86, %91 : vector<2x8x8x128xf32>
    %c0_93 = arith.constant 0 : index
    %c2_94 = arith.constant 2 : index
    %c8_95 = arith.constant 8 : index
    %c0_96 = arith.constant 0 : index
    %93 = vector.load %arg9[%c0_93, %c2_94, %c8_95, %c0_96] : memref<2x12x18x128xf32, #tpu.memory_space<vmem>>, vector<2x8x8x128xf32>
    %c12 = arith.constant 12 : index
    %c0_97 = arith.constant 0 : index
    %94 = vector.load %arg5[%c12, %c0_97] : memref<32x128xf32, #tpu.memory_space<vmem>>, vector<1x128xf32>
    %95 = vector.shape_cast %94 : vector<1x128xf32> to vector<1x1x1x128xf32>
    %96 = vector.broadcast %95 : vector<1x1x1x128xf32> to vector<2x8x8x128xf32>
    %97 = arith.mulf %93, %96 : vector<2x8x8x128xf32>
    %98 = arith.addf %92, %97 : vector<2x8x8x128xf32>
    %c0_98 = arith.constant 0 : index
    %c2_99 = arith.constant 2 : index
    %c9_100 = arith.constant 9 : index
    %c0_101 = arith.constant 0 : index
    %99 = vector.load %arg9[%c0_98, %c2_99, %c9_100, %c0_101] : memref<2x12x18x128xf32, #tpu.memory_space<vmem>>, vector<2x8x8x128xf32>
    %c13 = arith.constant 13 : index
    %c0_102 = arith.constant 0 : index
    %100 = vector.load %arg5[%c13, %c0_102] : memref<32x128xf32, #tpu.memory_space<vmem>>, vector<1x128xf32>
    %101 = vector.shape_cast %100 : vector<1x128xf32> to vector<1x1x1x128xf32>
    %102 = vector.broadcast %101 : vector<1x1x1x128xf32> to vector<2x8x8x128xf32>
    %103 = arith.mulf %99, %102 : vector<2x8x8x128xf32>
    %104 = arith.addf %98, %103 : vector<2x8x8x128xf32>
    %c0_103 = arith.constant 0 : index
    %c2_104 = arith.constant 2 : index
    %c10_105 = arith.constant 10 : index
    %c0_106 = arith.constant 0 : index
    %105 = vector.load %arg9[%c0_103, %c2_104, %c10_105, %c0_106] : memref<2x12x18x128xf32, #tpu.memory_space<vmem>>, vector<2x8x8x128xf32>
    %c14 = arith.constant 14 : index
    %c0_107 = arith.constant 0 : index
    %106 = vector.load %arg5[%c14, %c0_107] : memref<32x128xf32, #tpu.memory_space<vmem>>, vector<1x128xf32>
    %107 = vector.shape_cast %106 : vector<1x128xf32> to vector<1x1x1x128xf32>
    %108 = vector.broadcast %107 : vector<1x1x1x128xf32> to vector<2x8x8x128xf32>
    %109 = arith.mulf %105, %108 : vector<2x8x8x128xf32>
    %110 = arith.addf %104, %109 : vector<2x8x8x128xf32>
    %c0_108 = arith.constant 0 : index
    %c3_109 = arith.constant 3 : index
    %c6_110 = arith.constant 6 : index
    %c0_111 = arith.constant 0 : index
    %111 = vector.load %arg9[%c0_108, %c3_109, %c6_110, %c0_111] : memref<2x12x18x128xf32, #tpu.memory_space<vmem>>, vector<2x8x8x128xf32>
    %c15 = arith.constant 15 : index
    %c0_112 = arith.constant 0 : index
    %112 = vector.load %arg5[%c15, %c0_112] : memref<32x128xf32, #tpu.memory_space<vmem>>, vector<1x128xf32>
    %113 = vector.shape_cast %112 : vector<1x128xf32> to vector<1x1x1x128xf32>
    %114 = vector.broadcast %113 : vector<1x1x1x128xf32> to vector<2x8x8x128xf32>
    %115 = arith.mulf %111, %114 : vector<2x8x8x128xf32>
    %116 = arith.addf %110, %115 : vector<2x8x8x128xf32>
    %c0_113 = arith.constant 0 : index
    %c3_114 = arith.constant 3 : index
    %c7_115 = arith.constant 7 : index
    %c0_116 = arith.constant 0 : index
    %117 = vector.load %arg9[%c0_113, %c3_114, %c7_115, %c0_116] : memref<2x12x18x128xf32, #tpu.memory_space<vmem>>, vector<2x8x8x128xf32>
    %c16_117 = arith.constant 16 : index
    %c0_118 = arith.constant 0 : index
    %118 = vector.load %arg5[%c16_117, %c0_118] : memref<32x128xf32, #tpu.memory_space<vmem>>, vector<1x128xf32>
    %119 = vector.shape_cast %118 : vector<1x128xf32> to vector<1x1x1x128xf32>
    %120 = vector.broadcast %119 : vector<1x1x1x128xf32> to vector<2x8x8x128xf32>
    %121 = arith.mulf %117, %120 : vector<2x8x8x128xf32>
    %122 = arith.addf %116, %121 : vector<2x8x8x128xf32>
    %c0_119 = arith.constant 0 : index
    %c3_120 = arith.constant 3 : index
    %c8_121 = arith.constant 8 : index
    %c0_122 = arith.constant 0 : index
    %123 = vector.load %arg9[%c0_119, %c3_120, %c8_121, %c0_122] : memref<2x12x18x128xf32, #tpu.memory_space<vmem>>, vector<2x8x8x128xf32>
    %c17 = arith.constant 17 : index
    %c0_123 = arith.constant 0 : index
    %124 = vector.load %arg5[%c17, %c0_123] : memref<32x128xf32, #tpu.memory_space<vmem>>, vector<1x128xf32>
    %125 = vector.shape_cast %124 : vector<1x128xf32> to vector<1x1x1x128xf32>
    %126 = vector.broadcast %125 : vector<1x1x1x128xf32> to vector<2x8x8x128xf32>
    %127 = arith.mulf %123, %126 : vector<2x8x8x128xf32>
    %128 = arith.addf %122, %127 : vector<2x8x8x128xf32>
    %c0_124 = arith.constant 0 : index
    %c3_125 = arith.constant 3 : index
    %c9_126 = arith.constant 9 : index
    %c0_127 = arith.constant 0 : index
    %129 = vector.load %arg9[%c0_124, %c3_125, %c9_126, %c0_127] : memref<2x12x18x128xf32, #tpu.memory_space<vmem>>, vector<2x8x8x128xf32>
    %c18 = arith.constant 18 : index
    %c0_128 = arith.constant 0 : index
    %130 = vector.load %arg5[%c18, %c0_128] : memref<32x128xf32, #tpu.memory_space<vmem>>, vector<1x128xf32>
    %131 = vector.shape_cast %130 : vector<1x128xf32> to vector<1x1x1x128xf32>
    %132 = vector.broadcast %131 : vector<1x1x1x128xf32> to vector<2x8x8x128xf32>
    %133 = arith.mulf %129, %132 : vector<2x8x8x128xf32>
    %134 = arith.addf %128, %133 : vector<2x8x8x128xf32>
    %c0_129 = arith.constant 0 : index
    %c3_130 = arith.constant 3 : index
    %c10_131 = arith.constant 10 : index
    %c0_132 = arith.constant 0 : index
    %135 = vector.load %arg9[%c0_129, %c3_130, %c10_131, %c0_132] : memref<2x12x18x128xf32, #tpu.memory_space<vmem>>, vector<2x8x8x128xf32>
    %c19 = arith.constant 19 : index
    %c0_133 = arith.constant 0 : index
    %136 = vector.load %arg5[%c19, %c0_133] : memref<32x128xf32, #tpu.memory_space<vmem>>, vector<1x128xf32>
    %137 = vector.shape_cast %136 : vector<1x128xf32> to vector<1x1x1x128xf32>
    %138 = vector.broadcast %137 : vector<1x1x1x128xf32> to vector<2x8x8x128xf32>
    %139 = arith.mulf %135, %138 : vector<2x8x8x128xf32>
    %140 = arith.addf %134, %139 : vector<2x8x8x128xf32>
    %c0_134 = arith.constant 0 : index
    %c4_135 = arith.constant 4 : index
    %c6_136 = arith.constant 6 : index
    %c0_137 = arith.constant 0 : index
    %141 = vector.load %arg9[%c0_134, %c4_135, %c6_136, %c0_137] : memref<2x12x18x128xf32, #tpu.memory_space<vmem>>, vector<2x8x8x128xf32>
    %c20 = arith.constant 20 : index
    %c0_138 = arith.constant 0 : index
    %142 = vector.load %arg5[%c20, %c0_138] : memref<32x128xf32, #tpu.memory_space<vmem>>, vector<1x128xf32>
    %143 = vector.shape_cast %142 : vector<1x128xf32> to vector<1x1x1x128xf32>
    %144 = vector.broadcast %143 : vector<1x1x1x128xf32> to vector<2x8x8x128xf32>
    %145 = arith.mulf %141, %144 : vector<2x8x8x128xf32>
    %146 = arith.addf %140, %145 : vector<2x8x8x128xf32>
    %c0_139 = arith.constant 0 : index
    %c4_140 = arith.constant 4 : index
    %c7_141 = arith.constant 7 : index
    %c0_142 = arith.constant 0 : index
    %147 = vector.load %arg9[%c0_139, %c4_140, %c7_141, %c0_142] : memref<2x12x18x128xf32, #tpu.memory_space<vmem>>, vector<2x8x8x128xf32>
    %c21 = arith.constant 21 : index
    %c0_143 = arith.constant 0 : index
    %148 = vector.load %arg5[%c21, %c0_143] : memref<32x128xf32, #tpu.memory_space<vmem>>, vector<1x128xf32>
    %149 = vector.shape_cast %148 : vector<1x128xf32> to vector<1x1x1x128xf32>
    %150 = vector.broadcast %149 : vector<1x1x1x128xf32> to vector<2x8x8x128xf32>
    %151 = arith.mulf %147, %150 : vector<2x8x8x128xf32>
    %152 = arith.addf %146, %151 : vector<2x8x8x128xf32>
    %c0_144 = arith.constant 0 : index
    %c4_145 = arith.constant 4 : index
    %c8_146 = arith.constant 8 : index
    %c0_147 = arith.constant 0 : index
    %153 = vector.load %arg9[%c0_144, %c4_145, %c8_146, %c0_147] : memref<2x12x18x128xf32, #tpu.memory_space<vmem>>, vector<2x8x8x128xf32>
    %c22 = arith.constant 22 : index
    %c0_148 = arith.constant 0 : index
    %154 = vector.load %arg5[%c22, %c0_148] : memref<32x128xf32, #tpu.memory_space<vmem>>, vector<1x128xf32>
    %155 = vector.shape_cast %154 : vector<1x128xf32> to vector<1x1x1x128xf32>
    %156 = vector.broadcast %155 : vector<1x1x1x128xf32> to vector<2x8x8x128xf32>
    %157 = arith.mulf %153, %156 : vector<2x8x8x128xf32>
    %158 = arith.addf %152, %157 : vector<2x8x8x128xf32>
    %c0_149 = arith.constant 0 : index
    %c4_150 = arith.constant 4 : index
    %c9_151 = arith.constant 9 : index
    %c0_152 = arith.constant 0 : index
    %159 = vector.load %arg9[%c0_149, %c4_150, %c9_151, %c0_152] : memref<2x12x18x128xf32, #tpu.memory_space<vmem>>, vector<2x8x8x128xf32>
    %c23 = arith.constant 23 : index
    %c0_153 = arith.constant 0 : index
    %160 = vector.load %arg5[%c23, %c0_153] : memref<32x128xf32, #tpu.memory_space<vmem>>, vector<1x128xf32>
    %161 = vector.shape_cast %160 : vector<1x128xf32> to vector<1x1x1x128xf32>
    %162 = vector.broadcast %161 : vector<1x1x1x128xf32> to vector<2x8x8x128xf32>
    %163 = arith.mulf %159, %162 : vector<2x8x8x128xf32>
    %164 = arith.addf %158, %163 : vector<2x8x8x128xf32>
    %c0_154 = arith.constant 0 : index
    %c4_155 = arith.constant 4 : index
    %c10_156 = arith.constant 10 : index
    %c0_157 = arith.constant 0 : index
    %165 = vector.load %arg9[%c0_154, %c4_155, %c10_156, %c0_157] : memref<2x12x18x128xf32, #tpu.memory_space<vmem>>, vector<2x8x8x128xf32>
    %c24 = arith.constant 24 : index
    %c0_158 = arith.constant 0 : index
    %166 = vector.load %arg5[%c24, %c0_158] : memref<32x128xf32, #tpu.memory_space<vmem>>, vector<1x128xf32>
    %167 = vector.shape_cast %166 : vector<1x128xf32> to vector<1x1x1x128xf32>
    %168 = vector.broadcast %167 : vector<1x1x1x128xf32> to vector<2x8x8x128xf32>
    %169 = arith.mulf %165, %168 : vector<2x8x8x128xf32>
    %170 = arith.addf %164, %169 : vector<2x8x8x128xf32>
    %171 = vector.shape_cast %19 : vector<1x128xf32> to vector<1x1x1x128xf32>
    %172 = vector.broadcast %171 : vector<1x1x1x128xf32> to vector<2x8x8x128xf32>
    %173 = arith.addf %170, %172 : vector<2x8x8x128xf32>
    %cst_159 = arith.constant 5.000000e-01 : f32
    %174 = vector.broadcast %cst_159 : f32 to vector<2x8x8x128xf32>
    %175 = arith.mulf %174, %173 : vector<2x8x8x128xf32>
    %cst_160 = arith.constant 4.471500e-02 : f32
    %176 = vector.broadcast %cst_160 : f32 to vector<2x8x8x128xf32>
    %177 = arith.mulf %176, %173 : vector<2x8x8x128xf32>
    %178 = arith.mulf %177, %173 : vector<2x8x8x128xf32>
    %179 = arith.mulf %178, %173 : vector<2x8x8x128xf32>
    %180 = arith.addf %173, %179 : vector<2x8x8x128xf32>
    %cst_161 = arith.constant 0.797884583 : f32
    %181 = vector.broadcast %cst_161 : f32 to vector<2x8x8x128xf32>
    %182 = arith.mulf %181, %180 : vector<2x8x8x128xf32>
    %183 = math.tanh %182 : vector<2x8x8x128xf32>
    %cst_162 = arith.constant 1.000000e+00 : f32
    %184 = vector.broadcast %cst_162 : f32 to vector<2x8x8x128xf32>
    %185 = arith.addf %184, %183 : vector<2x8x8x128xf32>
    %186 = arith.mulf %175, %185 : vector<2x8x8x128xf32>
    %187 = arith.truncf %186 : vector<2x8x8x128xf32> to vector<2x8x8x128xbf16>
    %c0_163 = arith.constant 0 : index
    %c0_164 = arith.constant 0 : index
    %c0_165 = arith.constant 0 : index
    %c0_166 = arith.constant 0 : index
    %188 = vector.load %arg7[%c0_163, %c0_164, %c0_165, %c0_166] : memref<2x8x8x128xbf16, #tpu.memory_space<vmem>>, vector<2x8x8x128xbf16>
    tpu.vector_store %arg7[%c0_163, %c0_164, %c0_165, %c0_166], %187 {strides = array<i32>} : memref<2x8x8x128xbf16, #tpu.memory_space<vmem>>, vector<2x8x8x128xbf16>,
    %c0_167 = arith.constant 0 : index
    %c0_168 = arith.constant 0 : index
    %c0_169 = arith.constant 0 : index
    %c0_170 = arith.constant 0 : index
    %189 = vector.load %arg7[%c0_167, %c0_168, %c0_169, %c0_170] : memref<2x8x8x128xbf16, #tpu.memory_space<vmem>>, vector<2x8x8x128xbf16>
    %190 = vector.shape_cast %189 : vector<2x8x8x128xbf16> to vector<128x128xbf16>
    %191 = arith.extf %190 : vector<128x128xbf16> to vector<128x128xf32>
    %c128_i32 = arith.constant 128 : i32
    %192 = arith.muli %arg0, %c128_i32 : i32
    %193 = tpu.iota {dimensions = array<i32: 1>} : vector<1x128xi32>
    %194 = vector.broadcast %192 : i32 to vector<1x128xi32>
    %195 = arith.addi %193, %194 : vector<1x128xi32>
    %c320_i32 = arith.constant 320 : i32
    %196 = vector.broadcast %c320_i32 : i32 to vector<1x128xi32>
    %197 = arith.cmpi slt, %195, %196 : vector<1x128xi32>
    %198 = arith.extui %197 : vector<1x128xi1> to vector<1x128xi32>
    %199 = arith.sitofp %198 : vector<1x128xi32> to vector<1x128xf32>
    %cst_171 = arith.constant dense<0.000000e+00> : vector<1x128xf32>
    %200 = tpu.matmul %199, %191, %cst_171 {dimension_numbers = #tpu.dot_dimension_numbers<[1], [0], [0], [1], [0, 0, 1, 1], [], []>} : vector<1x128xf32>, vector<128x128xf32>, vector<1x128xf32> -> vector<1x128xf32>
    %201 = arith.mulf %191, %191 : vector<128x128xf32>
    %cst_172 = arith.constant dense<0.000000e+00> : vector<1x128xf32>
    %202 = tpu.matmul %199, %201, %cst_172 {dimension_numbers = #tpu.dot_dimension_numbers<[1], [0], [0], [1], [0, 0, 1, 1], [], []>} : vector<1x128xf32>, vector<128x128xf32>, vector<1x128xf32> -> vector<1x128xf32>
    %203 = tpu.iota {dimensions = array<i32: 0>} : vector<8x1xi32>
    %c0_i32 = arith.constant 0 : i32
    %204 = vector.broadcast %c0_i32 : i32 to vector<8x1xi32>
    %205 = arith.cmpi eq, %203, %204 : vector<8x1xi32>
    %cst_173 = arith.constant 0.000000e+00 : f32
    %206 = vector.shape_cast %205 : vector<8x1xi1> to vector<8x1xi1>
    %207 = vector.broadcast %206 : vector<8x1xi1> to vector<8x128xi1>
    %208 = vector.shape_cast %200 : vector<1x128xf32> to vector<1x128xf32>
    %209 = vector.broadcast %208 : vector<1x128xf32> to vector<8x128xf32>
    %210 = vector.broadcast %cst_173 : f32 to vector<8x128xf32>
    %211 = arith.select %207, %209, %210 : vector<8x128xi1>, vector<8x128xf32>
    %c1_i32 = arith.constant 1 : i32
    %212 = vector.broadcast %c1_i32 : i32 to vector<8x1xi32>
    %213 = arith.cmpi eq, %203, %212 : vector<8x1xi32>
    %cst_174 = arith.constant 0.000000e+00 : f32
    %214 = vector.shape_cast %213 : vector<8x1xi1> to vector<8x1xi1>
    %215 = vector.broadcast %214 : vector<8x1xi1> to vector<8x128xi1>
    %216 = vector.shape_cast %202 : vector<1x128xf32> to vector<1x128xf32>
    %217 = vector.broadcast %216 : vector<1x128xf32> to vector<8x128xf32>
    %218 = vector.broadcast %cst_174 : f32 to vector<8x128xf32>
    %219 = arith.select %215, %217, %218 : vector<8x128xi1>, vector<8x128xf32>
    %220 = arith.addf %211, %219 : vector<8x128xf32>
    %c0_175 = arith.constant 0 : index
    %c0_176 = arith.constant 0 : index
    %c0_177 = arith.constant 0 : index
    %221 = vector.load %arg8[%c0_175, %c0_176, %c0_177] : memref<1x8x128xf32, #tpu.memory_space<vmem>>, vector<1x8x128xf32>
    %222 = vector.shape_cast %221 : vector<1x8x128xf32> to vector<8x128xf32>
    %223 = vector.shape_cast %220 : vector<8x128xf32> to vector<1x8x128xf32>
    tpu.vector_store %arg8[%c0_175, %c0_176, %c0_177], %223 {strides = array<i32>} : memref<1x8x128xf32, #tpu.memory_space<vmem>>, vector<1x8x128xf32>,
    return
  }
  func.func @transform_0(%arg0: i32, %arg1: i32) -> (i32, i32, i32, i32) {
    %c0_i32 = arith.constant 0 : i32
    %c0_i32_0 = arith.constant 0 : i32
    %c0_i32_1 = arith.constant 0 : i32
    return %arg0, %c0_i32, %c0_i32_0, %arg1 : i32, i32, i32, i32
  }
  func.func @transform_1(%arg0: i32, %arg1: i32) -> (i32, i32) {
    %c0_i32 = arith.constant 0 : i32
    %c0_i32_0 = arith.constant 0 : i32
    return %c0_i32, %arg1 : i32, i32
  }
  func.func @transform_2(%arg0: i32, %arg1: i32) -> (i32, i32) {
    %c0_i32 = arith.constant 0 : i32
    %c0_i32_0 = arith.constant 0 : i32
    return %c0_i32, %arg1 : i32, i32
  }
  func.func @transform_3(%arg0: i32, %arg1: i32) -> (i32, i32) {
    %c0_i32 = arith.constant 0 : i32
    %c0_i32_0 = arith.constant 0 : i32
    return %c0_i32, %arg1 : i32, i32
  }
  func.func @transform_4(%arg0: i32, %arg1: i32) -> (i32, i32) {
    %c0_i32 = arith.constant 0 : i32
    %c0_i32_0 = arith.constant 0 : i32
    return %c0_i32, %arg1 : i32, i32
  }
  func.func @transform_5(%arg0: i32, %arg1: i32) -> (i32, i32, i32, i32) {
    %c0_i32 = arith.constant 0 : i32
    %c0_i32_0 = arith.constant 0 : i32
    %c0_i32_1 = arith.constant 0 : i32
    return %arg0, %c0_i32, %c0_i32_0, %arg1 : i32, i32, i32, i32
  }
  func.func @transform_6(%arg0: i32, %arg1: i32) -> (i32, i32, i32) {
    %c0_i32 = arith.constant 0 : i32
    %c0_i32_0 = arith.constant 0 : i32
    return %arg0, %c0_i32, %arg1 : i32, i32, i32
  }
}

module attributes {stable_mosaic.version = 11 : i64} {
  func.func @_pw_block_kernel(%arg0: i32, %arg1: memref<128x128xbf16, #tpu.memory_space<vmem>>, %arg2: memref<1x128xf32, #tpu.memory_space<vmem>>, %arg3: memref<1x128xf32, #tpu.memory_space<vmem>>, %arg4: memref<128x128xbf16, #tpu.memory_space<vmem>>, %arg5: memref<1x128xf32, #tpu.memory_space<vmem>>, %arg6: memref<1x128xf32, #tpu.memory_space<vmem>>, %arg7: memref<128x128xbf16, #tpu.memory_space<vmem>>, %arg8: memref<1x128xf32, #tpu.memory_space<vmem>>, %arg9: memref<128x128xbf16, #tpu.memory_space<vmem>>, %arg10: memref<1x8x128xf32, #tpu.memory_space<vmem>>) attributes {dimension_semantics = [#tpu.dimension_semantics<parallel>], iteration_bounds = array<i64: 3>, scalar_prefetch = 0 : i64, scratch_operands = 0 : i64, tpu.core_type = #tpu.core_type<tc>, window_params = [{transform_indices = @transform_0, window_bounds = array<i64: 128, 128>}, {pipeline_mode = #tpu.pipeline_mode<synchronous>, transform_indices = @transform_1, window_bounds = array<i64: 1, 128>}, {pipeline_mode = #tpu.pipeline_mode<synchronous>, transform_indices = @transform_2, window_bounds = array<i64: 1, 128>}, {transform_indices = @transform_3, window_bounds = array<i64: 128, 128>}, {pipeline_mode = #tpu.pipeline_mode<synchronous>, transform_indices = @transform_4, window_bounds = array<i64: 1, 128>}, {pipeline_mode = #tpu.pipeline_mode<synchronous>, transform_indices = @transform_5, window_bounds = array<i64: 1, 128>}, {pipeline_mode = #tpu.pipeline_mode<synchronous>, transform_indices = @transform_6, window_bounds = array<i64: 128, 128>}, {pipeline_mode = #tpu.pipeline_mode<synchronous>, transform_indices = @transform_7, window_bounds = array<i64: 1, 128>}, {transform_indices = @transform_8, window_bounds = array<i64: 128, 128>}, {transform_indices = @transform_9, window_bounds = array<i64: 1, 8, 128>}]} {
    %c0 = arith.constant 0 : index
    %c0_0 = arith.constant 0 : index
    %0 = vector.load %arg4[%c0, %c0_0] : memref<128x128xbf16, #tpu.memory_space<vmem>>, vector<128x128xbf16>
    %1 = arith.extf %0 : vector<128x128xbf16> to vector<128x128xf32>
    %c0_1 = arith.constant 0 : index
    %c0_2 = arith.constant 0 : index
    %2 = vector.load %arg5[%c0_1, %c0_2] : memref<1x128xf32, #tpu.memory_space<vmem>>, vector<1x128xf32>
    %3 = vector.broadcast %2 : vector<1x128xf32> to vector<128x128xf32>
    %4 = arith.mulf %1, %3 : vector<128x128xf32>
    %c0_3 = arith.constant 0 : index
    %c0_4 = arith.constant 0 : index
    %5 = vector.load %arg6[%c0_3, %c0_4] : memref<1x128xf32, #tpu.memory_space<vmem>>, vector<1x128xf32>
    %6 = vector.broadcast %5 : vector<1x128xf32> to vector<128x128xf32>
    %7 = arith.addf %4, %6 : vector<128x128xf32>
    %c0_5 = arith.constant 0 : index
    %c0_6 = arith.constant 0 : index
    %8 = vector.load %arg1[%c0_5, %c0_6] : memref<128x128xbf16, #tpu.memory_space<vmem>>, vector<128x128xbf16>
    %9 = arith.extf %8 : vector<128x128xbf16> to vector<128x128xf32>
    %c0_7 = arith.constant 0 : index
    %c0_8 = arith.constant 0 : index
    %10 = vector.load %arg2[%c0_7, %c0_8] : memref<1x128xf32, #tpu.memory_space<vmem>>, vector<1x128xf32>
    %11 = vector.broadcast %10 : vector<1x128xf32> to vector<128x128xf32>
    %12 = arith.mulf %9, %11 : vector<128x128xf32>
    %c0_9 = arith.constant 0 : index
    %c0_10 = arith.constant 0 : index
    %13 = vector.load %arg3[%c0_9, %c0_10] : memref<1x128xf32, #tpu.memory_space<vmem>>, vector<1x128xf32>
    %14 = vector.broadcast %13 : vector<1x128xf32> to vector<128x128xf32>
    %15 = arith.addf %12, %14 : vector<128x128xf32>
    %16 = arith.addf %15, %7 : vector<128x128xf32>
    %17 = arith.truncf %16 : vector<128x128xf32> to vector<128x128xbf16>
    %c0_11 = arith.constant 0 : index
    %c0_12 = arith.constant 0 : index
    %18 = vector.load %arg7[%c0_11, %c0_12] : memref<128x128xbf16, #tpu.memory_space<vmem>>, vector<128x128xbf16>
    %cst = arith.constant dense<0.000000e+00> : vector<128x128xf32>
    %19 = tpu.matmul %17, %18, %cst {dimension_numbers = #tpu.dot_dimension_numbers<[1], [0], [0], [1], [0, 0, 1, 1], [], []>} : vector<128x128xbf16>, vector<128x128xbf16>, vector<128x128xf32> -> vector<128x128xf32>
    %c0_13 = arith.constant 0 : index
    %c0_14 = arith.constant 0 : index
    %20 = vector.load %arg8[%c0_13, %c0_14] : memref<1x128xf32, #tpu.memory_space<vmem>>, vector<1x128xf32>
    %21 = vector.broadcast %20 : vector<1x128xf32> to vector<128x128xf32>
    %22 = arith.addf %19, %21 : vector<128x128xf32>
    %cst_15 = arith.constant 5.000000e-01 : f32
    %23 = vector.broadcast %cst_15 : f32 to vector<128x128xf32>
    %24 = arith.mulf %23, %22 : vector<128x128xf32>
    %cst_16 = arith.constant 4.471500e-02 : f32
    %25 = vector.broadcast %cst_16 : f32 to vector<128x128xf32>
    %26 = arith.mulf %25, %22 : vector<128x128xf32>
    %27 = arith.mulf %26, %22 : vector<128x128xf32>
    %28 = arith.mulf %27, %22 : vector<128x128xf32>
    %29 = arith.addf %22, %28 : vector<128x128xf32>
    %cst_17 = arith.constant 0.797884583 : f32
    %30 = vector.broadcast %cst_17 : f32 to vector<128x128xf32>
    %31 = arith.mulf %30, %29 : vector<128x128xf32>
    %32 = math.tanh %31 : vector<128x128xf32>
    %cst_18 = arith.constant 1.000000e+00 : f32
    %33 = vector.broadcast %cst_18 : f32 to vector<128x128xf32>
    %34 = arith.addf %33, %32 : vector<128x128xf32>
    %35 = arith.mulf %24, %34 : vector<128x128xf32>
    %36 = arith.truncf %35 : vector<128x128xf32> to vector<128x128xbf16>
    %c0_19 = arith.constant 0 : index
    %c0_20 = arith.constant 0 : index
    %37 = vector.load %arg9[%c0_19, %c0_20] : memref<128x128xbf16, #tpu.memory_space<vmem>>, vector<128x128xbf16>
    tpu.vector_store %arg9[%c0_19, %c0_20], %36 {strides = array<i32>} : memref<128x128xbf16, #tpu.memory_space<vmem>>, vector<128x128xbf16>,
    %38 = arith.extf %36 : vector<128x128xbf16> to vector<128x128xf32>
    %c128_i32 = arith.constant 128 : i32
    %39 = arith.muli %arg0, %c128_i32 : i32
    %40 = tpu.iota {dimensions = array<i32: 1>} : vector<1x128xi32>
    %41 = vector.broadcast %39 : i32 to vector<1x128xi32>
    %42 = arith.addi %40, %41 : vector<1x128xi32>
    %c320_i32 = arith.constant 320 : i32
    %43 = vector.broadcast %c320_i32 : i32 to vector<1x128xi32>
    %44 = arith.cmpi slt, %42, %43 : vector<1x128xi32>
    %45 = arith.extui %44 : vector<1x128xi1> to vector<1x128xi32>
    %46 = arith.sitofp %45 : vector<1x128xi32> to vector<1x128xf32>
    %cst_21 = arith.constant dense<0.000000e+00> : vector<1x128xf32>
    %47 = tpu.matmul %46, %38, %cst_21 {dimension_numbers = #tpu.dot_dimension_numbers<[1], [0], [0], [1], [0, 0, 1, 1], [], []>} : vector<1x128xf32>, vector<128x128xf32>, vector<1x128xf32> -> vector<1x128xf32>
    %48 = arith.mulf %38, %38 : vector<128x128xf32>
    %cst_22 = arith.constant dense<0.000000e+00> : vector<1x128xf32>
    %49 = tpu.matmul %46, %48, %cst_22 {dimension_numbers = #tpu.dot_dimension_numbers<[1], [0], [0], [1], [0, 0, 1, 1], [], []>} : vector<1x128xf32>, vector<128x128xf32>, vector<1x128xf32> -> vector<1x128xf32>
    %50 = tpu.iota {dimensions = array<i32: 0>} : vector<8x1xi32>
    %c0_i32 = arith.constant 0 : i32
    %51 = vector.broadcast %c0_i32 : i32 to vector<8x1xi32>
    %52 = arith.cmpi eq, %50, %51 : vector<8x1xi32>
    %cst_23 = arith.constant 0.000000e+00 : f32
    %53 = vector.shape_cast %52 : vector<8x1xi1> to vector<8x1xi1>
    %54 = vector.broadcast %53 : vector<8x1xi1> to vector<8x128xi1>
    %55 = vector.shape_cast %47 : vector<1x128xf32> to vector<1x128xf32>
    %56 = vector.broadcast %55 : vector<1x128xf32> to vector<8x128xf32>
    %57 = vector.broadcast %cst_23 : f32 to vector<8x128xf32>
    %58 = arith.select %54, %56, %57 : vector<8x128xi1>, vector<8x128xf32>
    %c1_i32 = arith.constant 1 : i32
    %59 = vector.broadcast %c1_i32 : i32 to vector<8x1xi32>
    %60 = arith.cmpi eq, %50, %59 : vector<8x1xi32>
    %cst_24 = arith.constant 0.000000e+00 : f32
    %61 = vector.shape_cast %60 : vector<8x1xi1> to vector<8x1xi1>
    %62 = vector.broadcast %61 : vector<8x1xi1> to vector<8x128xi1>
    %63 = vector.shape_cast %49 : vector<1x128xf32> to vector<1x128xf32>
    %64 = vector.broadcast %63 : vector<1x128xf32> to vector<8x128xf32>
    %65 = vector.broadcast %cst_24 : f32 to vector<8x128xf32>
    %66 = arith.select %62, %64, %65 : vector<8x128xi1>, vector<8x128xf32>
    %67 = arith.addf %58, %66 : vector<8x128xf32>
    %c0_25 = arith.constant 0 : index
    %c0_26 = arith.constant 0 : index
    %c0_27 = arith.constant 0 : index
    %68 = vector.load %arg10[%c0_25, %c0_26, %c0_27] : memref<1x8x128xf32, #tpu.memory_space<vmem>>, vector<1x8x128xf32>
    %69 = vector.shape_cast %68 : vector<1x8x128xf32> to vector<8x128xf32>
    %70 = vector.shape_cast %67 : vector<8x128xf32> to vector<1x8x128xf32>
    tpu.vector_store %arg10[%c0_25, %c0_26, %c0_27], %70 {strides = array<i32>} : memref<1x8x128xf32, #tpu.memory_space<vmem>>, vector<1x8x128xf32>,
    return
  }
  func.func @transform_0(%arg0: i32) -> (i32, i32) {
    %c0_i32 = arith.constant 0 : i32
    %c0_i32_0 = arith.constant 0 : i32
    return %arg0, %c0_i32 : i32, i32
  }
  func.func @transform_1(%arg0: i32) -> (i32, i32) {
    %c0_i32 = arith.constant 0 : i32
    %c0_i32_0 = arith.constant 0 : i32
    %c0_i32_1 = arith.constant 0 : i32
    return %c0_i32, %c0_i32_0 : i32, i32
  }
  func.func @transform_2(%arg0: i32) -> (i32, i32) {
    %c0_i32 = arith.constant 0 : i32
    %c0_i32_0 = arith.constant 0 : i32
    %c0_i32_1 = arith.constant 0 : i32
    return %c0_i32, %c0_i32_0 : i32, i32
  }
  func.func @transform_3(%arg0: i32) -> (i32, i32) {
    %c0_i32 = arith.constant 0 : i32
    %c0_i32_0 = arith.constant 0 : i32
    return %arg0, %c0_i32 : i32, i32
  }
  func.func @transform_4(%arg0: i32) -> (i32, i32) {
    %c0_i32 = arith.constant 0 : i32
    %c0_i32_0 = arith.constant 0 : i32
    %c0_i32_1 = arith.constant 0 : i32
    return %c0_i32, %c0_i32_0 : i32, i32
  }
  func.func @transform_5(%arg0: i32) -> (i32, i32) {
    %c0_i32 = arith.constant 0 : i32
    %c0_i32_0 = arith.constant 0 : i32
    %c0_i32_1 = arith.constant 0 : i32
    return %c0_i32, %c0_i32_0 : i32, i32
  }
  func.func @transform_6(%arg0: i32) -> (i32, i32) {
    %c0_i32 = arith.constant 0 : i32
    %c0_i32_0 = arith.constant 0 : i32
    %c0_i32_1 = arith.constant 0 : i32
    return %c0_i32, %c0_i32_0 : i32, i32
  }
  func.func @transform_7(%arg0: i32) -> (i32, i32) {
    %c0_i32 = arith.constant 0 : i32
    %c0_i32_0 = arith.constant 0 : i32
    %c0_i32_1 = arith.constant 0 : i32
    return %c0_i32, %c0_i32_0 : i32, i32
  }
  func.func @transform_8(%arg0: i32) -> (i32, i32) {
    %c0_i32 = arith.constant 0 : i32
    %c0_i32_0 = arith.constant 0 : i32
    return %arg0, %c0_i32 : i32, i32
  }
  func.func @transform_9(%arg0: i32) -> (i32, i32, i32) {
    %c0_i32 = arith.constant 0 : i32
    %c0_i32_0 = arith.constant 0 : i32
    %c0_i32_1 = arith.constant 0 : i32
    return %arg0, %c0_i32, %c0_i32_0 : i32, i32, i32
  }
}

module attributes {stable_mosaic.version = 11 : i64} {
  func.func @_head_kernel(%arg0: i32, %arg1: memref<128x128xbf16, #tpu.memory_space<vmem>>, %arg2: memref<1x128xf32, #tpu.memory_space<vmem>>, %arg3: memref<1x128xf32, #tpu.memory_space<vmem>>, %arg4: memref<2x128xf32, #tpu.memory_space<vmem>>, %arg5: memref<128x128xbf16, #tpu.memory_space<vmem>>, %arg6: memref<1x128xf32, #tpu.memory_space<vmem>>, %arg7: memref<1x2x128xf32, #tpu.memory_space<vmem>>) attributes {dimension_semantics = [#tpu.dimension_semantics<parallel>], iteration_bounds = array<i64: 3>, scalar_prefetch = 0 : i64, scratch_operands = 0 : i64, tpu.core_type = #tpu.core_type<tc>, window_params = [{transform_indices = @transform_0, window_bounds = array<i64: 128, 128>}, {pipeline_mode = #tpu.pipeline_mode<synchronous>, transform_indices = @transform_1, window_bounds = array<i64: 1, 128>}, {pipeline_mode = #tpu.pipeline_mode<synchronous>, transform_indices = @transform_2, window_bounds = array<i64: 1, 128>}, {pipeline_mode = #tpu.pipeline_mode<synchronous>, transform_indices = @transform_3, window_bounds = array<i64: 2, 128>}, {pipeline_mode = #tpu.pipeline_mode<synchronous>, transform_indices = @transform_4, window_bounds = array<i64: 128, 128>}, {pipeline_mode = #tpu.pipeline_mode<synchronous>, transform_indices = @transform_5, window_bounds = array<i64: 1, 128>}, {transform_indices = @transform_6, window_bounds = array<i64: 1, 2, 128>}]} {
    %c0 = arith.constant 0 : index
    %c0_0 = arith.constant 0 : index
    %0 = vector.load %arg1[%c0, %c0_0] : memref<128x128xbf16, #tpu.memory_space<vmem>>, vector<128x128xbf16>
    %1 = arith.extf %0 : vector<128x128xbf16> to vector<128x128xf32>
    %c0_1 = arith.constant 0 : index
    %c0_2 = arith.constant 0 : index
    %2 = vector.load %arg2[%c0_1, %c0_2] : memref<1x128xf32, #tpu.memory_space<vmem>>, vector<1x128xf32>
    %3 = vector.broadcast %2 : vector<1x128xf32> to vector<128x128xf32>
    %4 = arith.mulf %1, %3 : vector<128x128xf32>
    %c0_3 = arith.constant 0 : index
    %c0_4 = arith.constant 0 : index
    %5 = vector.load %arg3[%c0_3, %c0_4] : memref<1x128xf32, #tpu.memory_space<vmem>>, vector<1x128xf32>
    %6 = vector.broadcast %5 : vector<1x128xf32> to vector<128x128xf32>
    %7 = arith.addf %4, %6 : vector<128x128xf32>
    %c0_5 = arith.constant 0 : index
    %c0_6 = arith.constant 0 : index
    %8 = vector.load %arg4[%c0_5, %c0_6] : memref<2x128xf32, #tpu.memory_space<vmem>>, vector<2x128xf32>
    %cst = arith.constant dense<0.000000e+00> : vector<2x128xf32>
    %9 = tpu.matmul %8, %7, %cst {dimension_numbers = #tpu.dot_dimension_numbers<[1], [0], [0], [1], [0, 0, 1, 1], [], []>} : vector<2x128xf32>, vector<128x128xf32>, vector<2x128xf32> -> vector<2x128xf32>
    %10 = arith.truncf %9 : vector<2x128xf32> to vector<2x128xbf16>
    %c0_7 = arith.constant 0 : index
    %c0_8 = arith.constant 0 : index
    %11 = vector.load %arg5[%c0_7, %c0_8] : memref<128x128xbf16, #tpu.memory_space<vmem>>, vector<128x128xbf16>
    %cst_9 = arith.constant dense<0.000000e+00> : vector<2x128xf32>
    %12 = tpu.matmul %10, %11, %cst_9 {dimension_numbers = #tpu.dot_dimension_numbers<[1], [0], [0], [1], [0, 0, 1, 1], [], []>} : vector<2x128xbf16>, vector<128x128xbf16>, vector<2x128xf32> -> vector<2x128xf32>
    %c0_10 = arith.constant 0 : index
    %c0_11 = arith.constant 0 : index
    %13 = vector.load %arg6[%c0_10, %c0_11] : memref<1x128xf32, #tpu.memory_space<vmem>>, vector<1x128xf32>
    %14 = vector.broadcast %13 : vector<1x128xf32> to vector<2x128xf32>
    %15 = arith.addf %12, %14 : vector<2x128xf32>
    %c0_12 = arith.constant 0 : index
    %c0_13 = arith.constant 0 : index
    %c0_14 = arith.constant 0 : index
    %16 = vector.load %arg7[%c0_12, %c0_13, %c0_14] : memref<1x2x128xf32, #tpu.memory_space<vmem>>, vector<1x2x128xf32>
    %17 = vector.shape_cast %16 : vector<1x2x128xf32> to vector<2x128xf32>
    %18 = vector.shape_cast %15 : vector<2x128xf32> to vector<1x2x128xf32>
    tpu.vector_store %arg7[%c0_12, %c0_13, %c0_14], %18 {strides = array<i32>} : memref<1x2x128xf32, #tpu.memory_space<vmem>>, vector<1x2x128xf32>,
    return
  }
  func.func @transform_0(%arg0: i32) -> (i32, i32) {
    %c0_i32 = arith.constant 0 : i32
    %c0_i32_0 = arith.constant 0 : i32
    return %arg0, %c0_i32 : i32, i32
  }
  func.func @transform_1(%arg0: i32) -> (i32, i32) {
    %c0_i32 = arith.constant 0 : i32
    %c0_i32_0 = arith.constant 0 : i32
    %c0_i32_1 = arith.constant 0 : i32
    return %c0_i32, %c0_i32_0 : i32, i32
  }
  func.func @transform_2(%arg0: i32) -> (i32, i32) {
    %c0_i32 = arith.constant 0 : i32
    %c0_i32_0 = arith.constant 0 : i32
    %c0_i32_1 = arith.constant 0 : i32
    return %c0_i32, %c0_i32_0 : i32, i32
  }
  func.func @transform_3(%arg0: i32) -> (i32, i32) {
    %c0_i32 = arith.constant 0 : i32
    %c0_i32_0 = arith.constant 0 : i32
    %c0_i32_1 = arith.constant 0 : i32
    return %c0_i32, %c0_i32_0 : i32, i32
  }
  func.func @transform_4(%arg0: i32) -> (i32, i32) {
    %c0_i32 = arith.constant 0 : i32
    %c0_i32_0 = arith.constant 0 : i32
    %c0_i32_1 = arith.constant 0 : i32
    return %c0_i32, %c0_i32_0 : i32, i32
  }
  func.func @transform_5(%arg0: i32) -> (i32, i32) {
    %c0_i32 = arith.constant 0 : i32
    %c0_i32_0 = arith.constant 0 : i32
    %c0_i32_1 = arith.constant 0 : i32
    return %c0_i32, %c0_i32_0 : i32, i32
  }
  func.func @transform_6(%arg0: i32) -> (i32, i32, i32) {
    %c0_i32 = arith.constant 0 : i32
    %c0_i32_0 = arith.constant 0 : i32
    %c0_i32_1 = arith.constant 0 : i32
    return %arg0, %c0_i32, %c0_i32_0 : i32, i32, i32
  }
}

</mosaic_0001>

<llo_original>
// kernel: conv_mixer_forward.6
$region0: #{conv_mixer_forward.6}
  #allocation0 [shape = 'u32[]', space=smem, size = 0x4, offset = 0x4, fixed_abs, tag = 'smem constant byte address 0x4 - core index']
  #allocation1 [shape = 'u32[72,128]{1,0:T(1,128)}', space=vmem, size = 0x9000, scoped, tag = 'internal scratch']
  %s0 = inlined_call_operand.vmem [shape: bf16[384,16], index: 0, kind: input, shape index: {}]
  %s1 = inlined_call_operand.vmem [shape: bf16[16,128], index: 1, kind: input, shape index: {}]
  %s2 = inlined_call_operand.vmem [shape: f32[1,128], index: 2, kind: input, shape index: {}]
  %s3 = inlined_call_operand.vmem [shape: bf16[384,128], index: 3, kind: output, shape index: {0}]
  %s4 = inlined_call_operand.vmem [shape: f32[3,8,128], index: 4, kind: output, shape index: {1}]
  %5 = xla_tuple %s3, %s4
  %s6 = sld [smem:[#allocation0]]
  $region53: #{conv_mixer_forward.6} parent=0
    _
  %s8 = ssub.s32 1, %s6
  %s9 = scalar_select 0, %s8, %s6
  loop: start=0, step=1, limit=5
  $region2: #{conv_mixer_forward.6} parent=0 // loop_pre_header
    _
  $region3: #{conv_mixer_forward.6} parent=0 // loop_header
    %s11 = sphi 0, %s15
    %p12 = scmp.ge.s32.totalorder %s11, 5
    %s21 = sphi 0, %s23
    %s24 = sphi 0, %s21
    %s25 = sphi 0, %s24
    %s41 = sphi 0, %s25
    %s45 = sphi 0, %s45
    %s47 = sphi 0, %s45
    %s48 = sphi 0, %s47
    %s62 = sphi 0, %s48
    %s66 = sphi 0, %s66
    %s68 = sphi 0, %s66
    %s69 = sphi 0, %s68
    %s83 = sphi 0, %s69
    %s89 = sphi 0, %s91
    %s92 = sphi 0, %s89
    %s93 = sphi 0, %s92
    %s109 = sphi 0, %s93
    %s115 = sphi 0, %s117
    %s118 = sphi 0, %s115
    %s119 = sphi 0, %s118
    %s135 = sphi 0, %s119
  $region4: #{conv_mixer_forward.6} parent=0 // loop_header_branch
    %14 = sbr.rel (%p12) target = $region8
  $region5: #{conv_mixer_forward.6} parent=0 // loop_body
    %s16 = ssub.s32 %s11, 1
    %s17 = ssub.s32 %s11, 2
    %s18 = sadd.s32 %s11, 1
    %s19 = ssub.s32 %s11, %s18
    %p20 = scmp.eq.s32.totalorder %s19, 0
    %s22 = sadd.s32 %s21, 1
    %s23 = scalar_select %p20, %s21, %s22
    %p26 = pneg %p20
    %p27 = scmp.eq.s32.totalorder %s11, 2
    %p28 = por %p26, %p27
    %p29 = scmp.ne.s32.totalorder %s21, %s24
    %p30 = scmp.eq.s32.totalorder %s11, 0
    %p31 = por %p29, %p30
    %p32 = scmp.ne.s32.totalorder %s21, %s24
    %p33 = scmp.eq.s32.totalorder %s16, 2
    %p34 = por %p32, %p33
    %p35 = scmp.ne.s32.totalorder %s24, %s25
    %p36 = scmp.eq.s32.totalorder %s16, 0
    %p37 = por %p35, %p36
    %p38 = scmp.ne.s32.totalorder %s24, %s25
    %p39 = scmp.eq.s32.totalorder %s17, 2
    %p40 = por %p38, %p39
    %p42 = scmp.ne.s32.totalorder %s25, %s41
    %p43 = scmp.eq.s32.totalorder %s17, 0
    %p44 = por %p42, %p43
    %s46 = sadd.s32 %s45, 1
    %p49 = scmp.eq.s32.totalorder %s11, 2
    %p50 = scmp.ne.s32.totalorder %s45, %s47
    %p51 = scmp.eq.s32.totalorder %s11, 0
    %p52 = por %p50, %p51
    %p53 = scmp.ne.s32.totalorder %s45, %s47
    %p54 = scmp.eq.s32.totalorder %s16, 2
    %p55 = por %p53, %p54
    %p56 = scmp.ne.s32.totalorder %s47, %s48
    %p57 = scmp.eq.s32.totalorder %s16, 0
    %p58 = por %p56, %p57
    %p59 = scmp.ne.s32.totalorder %s47, %s48
    %p60 = scmp.eq.s32.totalorder %s17, 2
    %p61 = por %p59, %p60
    %p63 = scmp.ne.s32.totalorder %s48, %s62
    %p64 = scmp.eq.s32.totalorder %s17, 0
    %p65 = por %p63, %p64
    %s67 = sadd.s32 %s66, 1
    %p70 = scmp.eq.s32.totalorder %s11, 2
    %p71 = scmp.ne.s32.totalorder %s66, %s68
    %p72 = scmp.eq.s32.totalorder %s11, 0
    %p73 = por %p71, %p72
    %p74 = scmp.ne.s32.totalorder %s66, %s68
    %p75 = scmp.eq.s32.totalorder %s16, 2
    %p76 = por %p74, %p75
    %p77 = scmp.ne.s32.totalorder %s68, %s69
    %p78 = scmp.eq.s32.totalorder %s16, 0
    %p79 = por %p77, %p78
    %p80 = scmp.ne.s32.totalorder %s68, %s69
    %p81 = scmp.eq.s32.totalorder %s17, 2
    %p82 = por %p80, %p81
    %p84 = scmp.ne.s32.totalorder %s69, %s83
    %p85 = scmp.eq.s32.totalorder %s17, 0
    %p86 = por %p84, %p85
    %s87 = ssub.s32 %s11, %s18
    %p88 = scmp.eq.s32.totalorder %s87, 0
    %s90 = sadd.s32 %s89, 1
    %s91 = scalar_select %p88, %s89, %s90
    %p94 = pneg %p88
    %p95 = scmp.eq.s32.totalorder %s11, 2
    %p96 = por %p94, %p95
    %p97 = scmp.ne.s32.totalorder %s89, %s92
    %p98 = scmp.eq.s32.totalorder %s11, 0
    %p99 = por %p97, %p98
    %p100 = scmp.ne.s32.totalorder %s89, %s92
    %p101 = scmp.eq.s32.totalorder %s16, 2
    %p102 = por %p100, %p101
    %p103 = scmp.ne.s32.totalorder %s92, %s93
    %p104 = scmp.eq.s32.totalorder %s16, 0
    %p105 = por %p103, %p104
    %p106 = scmp.ne.s32.totalorder %s92, %s93
    %p107 = scmp.eq.s32.totalorder %s17, 2
    %p108 = por %p106, %p107
    %p110 = scmp.ne.s32.totalorder %s93, %s109
    %p111 = scmp.eq.s32.totalorder %s17, 0
    %p112 = por %p110, %p111
    %s113 = ssub.s32 %s11, %s18
    %p114 = scmp.eq.s32.totalorder %s113, 0
    %s116 = sadd.s32 %s115, 1
    %s117 = scalar_select %p114, %s115, %s116
    %p120 = pneg %p114
    %p121 = scmp.eq.s32.totalorder %s11, 2
    %p122 = por %p120, %p121
    %p123 = scmp.ne.s32.totalorder %s115, %s118
    %p124 = scmp.eq.s32.totalorder %s11, 0
    %p125 = por %p123, %p124
    %p126 = scmp.ne.s32.totalorder %s115, %s118
    %p127 = scmp.eq.s32.totalorder %s16, 2
    %p128 = por %p126, %p127
    %p129 = scmp.ne.s32.totalorder %s118, %s119
    %p130 = scmp.eq.s32.totalorder %s16, 0
    %p131 = por %p129, %p130
    %p132 = scmp.ne.s32.totalorder %s118, %s119
    %p133 = scmp.eq.s32.totalorder %s17, 2
    %p134 = por %p132, %p133
    %p136 = scmp.ne.s32.totalorder %s119, %s135
    %p137 = scmp.eq.s32.totalorder %s17, 0
    %p138 = por %p136, %p137
    %p139 = scmp.le.s32.totalorder 1, %s11
    %p140 = scmp.lt.s32.totalorder %s11, 4
    %p141 = pnand %p139, %p140
    %p142 = pneg %p141
    // Predicated region
    $region9: #{conv_mixer_forward.6} parent=5 // pred_check
      _
    $region10: #{conv_mixer_forward.6} parent=5 // pred_check_branch
      %144 = sbr.rel (%p141) target = $region12
    $region11: #{conv_mixer_forward.6} parent=5 // pred_region
      %s145 = ssub.s32 %s11, 1
      // Predicated region
      $region13: #{conv_mixer_forward.6} parent=11 // pred_check
        %p146 = pneg %p58
      $region14: #{conv_mixer_forward.6} parent=11 // pred_check_branch
        %148 = sbr.rel (%p146) target = $region16
      $region15: #{conv_mixer_forward.6} parent=11 // pred_region
        _
      $region16: #{conv_mixer_forward.6} parent=11 // pred_fallthru
        _
      // Predicated region
      $region17: #{conv_mixer_forward.6} parent=11 // pred_check
        %p149 = pneg %p79
      $region18: #{conv_mixer_forward.6} parent=11 // pred_check_branch
        %151 = sbr.rel (%p149) target = $region20
      $region19: #{conv_mixer_forward.6} parent=11 // pred_region
        _
      $region20: #{conv_mixer_forward.6} parent=11 // pred_fallthru
        _
    $region12: #{conv_mixer_forward.6} parent=5 // pred_fallthru
      _
    %p152 = scmp.lt.s32.totalorder %s11, 3
    // Predicated region
    $region21: #{conv_mixer_forward.6} parent=5 // pred_check
      %p153 = pneg %p152
    $region22: #{conv_mixer_forward.6} parent=5 // pred_check_branch
      %155 = sbr.rel (%p153) target = $region24
    $region23: #{conv_mixer_forward.6} parent=5 // pred_region
      // Predicated region
      $region25: #{conv_mixer_forward.6} parent=23 // pred_check
        %p156 = pneg %p31
      $region26: #{conv_mixer_forward.6} parent=23 // pred_check_branch
        %158 = sbr.rel (%p156) target = $region28
      $region27: #{conv_mixer_forward.6} parent=23 // pred_region
        %s159 = smul.u32 16, %s11
        %p160 = scmp.lt.s32.totalorder %s159, 47
        %s161 = scalar_select %p160, %s159, 47
        %s162 = smul.addr %s161, 4
        %s163 = scalar_lea.vmem %s0, %s162
        %s164 = smul.u32 16, %s11
      $region28: #{conv_mixer_forward.6} parent=23 // pred_fallthru
        _
    $region24: #{conv_mixer_forward.6} parent=5 // pred_fallthru
      _
    %p165 = scmp.le.s32.totalorder 1, %s11
    %p166 = scmp.lt.s32.totalorder %s11, 4
    %p167 = pnand %p165, %p166
    %p168 = pneg %p167
    // Predicated region
    $region29: #{conv_mixer_forward.6} parent=5 // pred_check
      _
    $region30: #{conv_mixer_forward.6} parent=5 // pred_check_branch
      %170 = sbr.rel (%p167) target = $region32
    $region31: #{conv_mixer_forward.6} parent=5 // pred_region
      %s171 = ssub.s32 %s11, 1
      %s172 = smul.u32 16, %s16
      %p173 = scmp.lt.s32.totalorder %s172, 47
      %s174 = scalar_select %p173, %s172, 47
      %s175 = smul.addr %s174, 4
      %s176 = scalar_lea.vmem %s0, %s175
      %p177 = pneg %p37
      %p178 = pneg %p34
      %p179 = pneg %p58
      %p180 = pneg %p55
      %p181 = pneg %p79
      %p182 = pneg %p76
      %p183 = pneg %p105
      %p184 = pneg %p102
      %s185 = smul.u32 16, %s16
      %p186 = scmp.lt.s32.totalorder %s185, 47
      %s187 = scalar_select %p186, %s185, 47
      %s188 = smul.addr %s187, 4
      %s189 = scalar_lea.vmem %s3, %s188
      %p190 = pneg %p131
      %p191 = pneg %p128
      %p192 = scmp.lt.s32.totalorder %s16, 2
      %s193 = scalar_select %p192, %s16, 2
      %s194 = smul.addr %s193, 8
      %s195 = scalar_lea.vmem %s4, %s194
      %s196 = smul.u32 16, %s16
      %p197 = scmp.lt.s32.totalorder %s196, 47
      %s198 = scalar_select %p197, %s196, 47
      %s199 = smul.addr %s198, 4
      %s200 = scalar_lea.vmem %s0, %s199
      %s201 = smul.u32 16, %s16
      %s202 = smul.u32 16, %s16
      %p203 = scmp.lt.s32.totalorder %s202, 47
      %s204 = scalar_select %p203, %s202, 47
      %s205 = smul.addr %s204, 4
      %s206 = scalar_lea.vmem %s3, %s205
      %s207 = smul.u32 16, %s16
      %p208 = scmp.lt.s32.totalorder %s16, 2
      %s209 = scalar_select %p208, %s16, 2
      %s210 = smul.addr %s209, 8
      %s211 = scalar_lea.vmem %s4, %s210
      %v213 = vld [vmem:[%s200] sm:$0xf]
      %v214 = vld [vmem:[%s200 + $0x4] sm:$0xf]
      %v215 = vld [vmem:[%s200 + $0x8] sm:$0xf]
      %v216 = vld [vmem:[%s200 + $0xc] sm:$0xf]
      %v217 = vld [vmem:[%s200 + $0x10] sm:$0xf]
      %v218 = vld [vmem:[%s200 + $0x14] sm:$0xf]
      %v219 = vld [vmem:[%s200 + $0x18] sm:$0xf]
      %v220 = vld [vmem:[%s200 + $0x1c] sm:$0xf]
      %v221 = vld [vmem:[%s200 + $0x20] sm:$0xf]
      %v222 = vld [vmem:[%s200 + $0x24] sm:$0xf]
      %v223 = vld [vmem:[%s200 + $0x28] sm:$0xf]
      %v224 = vld [vmem:[%s200 + $0x2c] sm:$0xf]
      %v225 = vld [vmem:[%s200 + $0x30] sm:$0xf]
      %v226 = vld [vmem:[%s200 + $0x34] sm:$0xf]
      %v227 = vld [vmem:[%s200 + $0x38] sm:$0xf]
      %v228 = vld [vmem:[%s200 + $0x3c] sm:$0xf]
      %v229 = vld [vmem:[%s1] sm:$0xf]
      %v230 = vld [vmem:[%s1 + $0x4] sm:$0xf]
      %v231 = vld [vmem:[%s2] sm:$0x1]
      %v233 = vperm.slane %v231, 0
      %v251 = vunpack.c.l.b16 %v213
      %v252 = vunpack.c.l.b16 %v214
      %v253 = vunpack.c.l.b16 %v215
      %v254 = vunpack.c.l.b16 %v216
      %v255 = vunpack.c.l.b16 %v217
      %v256 = vunpack.c.l.b16 %v218
      %v257 = vunpack.c.l.b16 %v219
      %v258 = vunpack.c.l.b16 %v220
      %v259 = vunpack.c.l.b16 %v221
      %v260 = vunpack.c.l.b16 %v222
      %v261 = vunpack.c.l.b16 %v223
      %v262 = vunpack.c.l.b16 %v224
      %v263 = vunpack.c.l.b16 %v225
      %v264 = vunpack.c.l.b16 %v226
      %v265 = vunpack.c.l.b16 %v227
      %v266 = vunpack.c.l.b16 %v228
      %v267 = vpack.c.b16 %v252, %v251
      %v268 = vpack.c.b16 %v254, %v253
      %v269 = vpack.c.b16 %v256, %v255
      %v270 = vpack.c.b16 %v258, %v257
      %v271 = vpack.c.b16 %v260, %v259
      %v272 = vpack.c.b16 %v262, %v261
      %v273 = vpack.c.b16 %v264, %v263
      %v274 = vpack.c.b16 %v266, %v265
      %v277 = vunpack.c.l.b16 %v229
      %v278 = vunpack.c.l.b16 %v230
      %v279 = vpack.c.b16 %v278, %v277
      %vm281 = vcmask 130048
      %v283 = vsel %vm281, %v267, 0
      %v286 = vsel %vm281, %v268, 0
      %v289 = vsel %vm281, %v269, 0
      %v292 = vsel %vm281, %v270, 0
      %v295 = vsel %vm281, %v271, 0
      %v298 = vsel %vm281, %v272, 0
      %v301 = vsel %vm281, %v273, 0
      %v304 = vsel %vm281, %v274, 0
      %306 = vmatpush.bf16.msra.mxu0 0
      %307 = vmatpush.bf16.msra.mxu0 0
      %308 = vmatpush.bf16.msra.mxu0 0
      %309 = vmatpush.bf16.msra.mxu0 0
      %310 = vmatpush.bf16.msra.mxu0 0
      %311 = vmatpush.bf16.msra.mxu0 0
      %312 = vmatpush.bf16.msra.mxu0 0
      %313 = vmatpush.bf16.msra.mxu0 %v279
      %314 = vmatmul.bf16.gmra.mxu0 %v283
      %v315 = vpop.f32.mrf.mxu0
      %v316 = vadd.f32 %v233, %v315
      %v317 = vpop.f32.mrf.mxu0
      %v318 = vadd.f32 %v233, %v317
      %319 = vmatmul.bf16.gmra.mxu0 %v286
      %v320 = vpop.f32.mrf.mxu0
      %v321 = vadd.f32 %v233, %v320
      %v322 = vpop.f32.mrf.mxu0
      %v323 = vadd.f32 %v233, %v322
      %324 = vmatmul.bf16.gmra.mxu0 %v289
      %v325 = vpop.f32.mrf.mxu0
      %v326 = vadd.f32 %v233, %v325
      %v327 = vpop.f32.mrf.mxu0
      %v328 = vadd.f32 %v233, %v327
      %329 = vmatmul.bf16.gmra.mxu0 %v292
      %v330 = vpop.f32.mrf.mxu0
      %v331 = vadd.f32 %v233, %v330
      %v332 = vpop.f32.mrf.mxu0
      %v333 = vadd.f32 %v233, %v332
      %334 = vmatmul.bf16.gmra.mxu0 %v295
      %v335 = vpop.f32.mrf.mxu0
      %v336 = vadd.f32 %v233, %v335
      %v337 = vpop.f32.mrf.mxu0
      %v338 = vadd.f32 %v233, %v337
      %339 = vmatmul.bf16.gmra.mxu0 %v298
      %v340 = vpop.f32.mrf.mxu0
      %v341 = vadd.f32 %v233, %v340
      %v342 = vpop.f32.mrf.mxu0
      %v343 = vadd.f32 %v233, %v342
      %344 = vmatmul.bf16.gmra.mxu0 %v301
      %v345 = vpop.f32.mrf.mxu0
      %v346 = vadd.f32 %v233, %v345
      %v347 = vpop.f32.mrf.mxu0
      %v348 = vadd.f32 %v233, %v347
      %349 = vmatmul.bf16.gmra.mxu0 %v304
      %v350 = vpop.f32.mrf.mxu0
      %v351 = vadd.f32 %v233, %v350
      %v352 = vpop.f32.mrf.mxu0
      %v353 = vadd.f32 %v233, %v352
      %354 = vdwg.mxu0
      %v355 = vmul.f32 %v316, 0.5
      %v356 = vmul.f32 %v318, 0.5
      %v357 = vmul.f32 %v321, 0.5
      %v358 = vmul.f32 %v323, 0.5
      %v359 = vmul.f32 %v326, 0.5
      %v360 = vmul.f32 %v328, 0.5
      %v361 = vmul.f32 %v331, 0.5
      %v362 = vmul.f32 %v333, 0.5
      %v363 = vmul.f32 %v336, 0.5
      %v364 = vmul.f32 %v338, 0.5
      %v365 = vmul.f32 %v341, 0.5
      %v366 = vmul.f32 %v343, 0.5
      %v367 = vmul.f32 %v346, 0.5
      %v368 = vmul.f32 %v348, 0.5
      %v369 = vmul.f32 %v351, 0.5
      %v370 = vmul.f32 %v353, 0.5
      %v371 = vmul.f32 %v316, 0.044715
      %v372 = vmul.f32 %v318, 0.044715
      %v373 = vmul.f32 %v321, 0.044715
      %v374 = vmul.f32 %v323, 0.044715
      %v375 = vmul.f32 %v326, 0.044715
      %v376 = vmul.f32 %v328, 0.044715
      %v377 = vmul.f32 %v331, 0.044715
      %v378 = vmul.f32 %v333, 0.044715
      %v379 = vmul.f32 %v336, 0.044715
      %v380 = vmul.f32 %v338, 0.044715
      %v381 = vmul.f32 %v341, 0.044715
      %v382 = vmul.f32 %v343, 0.044715
      %v383 = vmul.f32 %v346, 0.044715
      %v384 = vmul.f32 %v348, 0.044715
      %v385 = vmul.f32 %v351, 0.044715
      %v386 = vmul.f32 %v353, 0.044715
      %v387 = vmul.f32 %v371, %v316
      %v388 = vmul.f32 %v372, %v318
      %v389 = vmul.f32 %v373, %v321
      %v390 = vmul.f32 %v374, %v323
      %v391 = vmul.f32 %v375, %v326
      %v392 = vmul.f32 %v376, %v328
      %v393 = vmul.f32 %v377, %v331
      %v394 = vmul.f32 %v378, %v333
      %v395 = vmul.f32 %v379, %v336
      %v396 = vmul.f32 %v380, %v338
      %v397 = vmul.f32 %v381, %v341
      %v398 = vmul.f32 %v382, %v343
      %v399 = vmul.f32 %v383, %v346
      %v400 = vmul.f32 %v384, %v348
      %v401 = vmul.f32 %v385, %v351
      %v402 = vmul.f32 %v386, %v353
      %v403 = vmul.f32 %v387, %v316
      %v404 = vmul.f32 %v388, %v318
      %v405 = vmul.f32 %v389, %v321
      %v406 = vmul.f32 %v390, %v323
      %v407 = vmul.f32 %v391, %v326
      %v408 = vmul.f32 %v392, %v328
      %v409 = vmul.f32 %v393, %v331
      %v410 = vmul.f32 %v394, %v333
      %v411 = vmul.f32 %v395, %v336
      %v412 = vmul.f32 %v396, %v338
      %v413 = vmul.f32 %v397, %v341
      %v414 = vmul.f32 %v398, %v343
      %v415 = vmul.f32 %v399, %v346
      %v416 = vmul.f32 %v400, %v348
      %v417 = vmul.f32 %v401, %v351
      %v418 = vmul.f32 %v402, %v353
      %v419 = vadd.f32 %v316, %v403
      %v420 = vadd.f32 %v318, %v404
      %v421 = vadd.f32 %v321, %v405
      %v422 = vadd.f32 %v323, %v406
      %v423 = vadd.f32 %v326, %v407
      %v424 = vadd.f32 %v328, %v408
      %v425 = vadd.f32 %v331, %v409
      %v426 = vadd.f32 %v333, %v410
      %v427 = vadd.f32 %v336, %v411
      %v428 = vadd.f32 %v338, %v412
      %v429 = vadd.f32 %v341, %v413
      %v430 = vadd.f32 %v343, %v414
      %v431 = vadd.f32 %v346, %v415
      %v432 = vadd.f32 %v348, %v416
      %v433 = vadd.f32 %v351, %v417
      %v434 = vadd.f32 %v353, %v418
      %v435 = vmul.f32 %v419, 0.7978846
      %v436 = vmul.f32 %v420, 0.7978846
      %v437 = vmul.f32 %v421, 0.7978846
      %v438 = vmul.f32 %v422, 0.7978846
      %v439 = vmul.f32 %v423, 0.7978846
      %v440 = vmul.f32 %v424, 0.7978846
      %v441 = vmul.f32 %v425, 0.7978846
      %v442 = vmul.f32 %v426, 0.7978846
      %v443 = vmul.f32 %v427, 0.7978846
      %v444 = vmul.f32 %v428, 0.7978846
      %v445 = vmul.f32 %v429, 0.7978846
      %v446 = vmul.f32 %v430, 0.7978846
      %v447 = vmul.f32 %v431, 0.7978846
      %v448 = vmul.f32 %v432, 0.7978846
      %v449 = vmul.f32 %v433, 0.7978846
      %v450 = vmul.f32 %v434, 0.7978846
      %v451 = vtanh.pop %v435
      %v452 = vtanh.pop %v436
      %v453 = vtanh.pop %v437
      %v454 = vtanh.pop %v438
      %v455 = vtanh.pop %v439
      %v456 = vtanh.pop %v440
      %v457 = vtanh.pop %v441
      %v458 = vtanh.pop %v442
      %v459 = vtanh.pop %v443
      %v460 = vtanh.pop %v444
      %v461 = vtanh.pop %v445
      %v462 = vtanh.pop %v446
      %v463 = vtanh.pop %v447
      %v464 = vtanh.pop %v448
      %v465 = vtanh.pop %v449
      %v466 = vtanh.pop %v450
      %v467 = vadd.f32 %v451, 1.0
      %v468 = vadd.f32 %v452, 1.0
      %v469 = vadd.f32 %v453, 1.0
      %v470 = vadd.f32 %v454, 1.0
      %v471 = vadd.f32 %v455, 1.0
      %v472 = vadd.f32 %v456, 1.0
      %v473 = vadd.f32 %v457, 1.0
      %v474 = vadd.f32 %v458, 1.0
      %v475 = vadd.f32 %v459, 1.0
      %v476 = vadd.f32 %v460, 1.0
      %v477 = vadd.f32 %v461, 1.0
      %v478 = vadd.f32 %v462, 1.0
      %v479 = vadd.f32 %v463, 1.0
      %v480 = vadd.f32 %v464, 1.0
      %v481 = vadd.f32 %v465, 1.0
      %v482 = vadd.f32 %v466, 1.0
      %v483 = vmul.f32 %v355, %v467
      %v484 = vmul.f32 %v356, %v468
      %v485 = vmul.f32 %v357, %v469
      %v486 = vmul.f32 %v358, %v470
      %v487 = vmul.f32 %v359, %v471
      %v488 = vmul.f32 %v360, %v472
      %v489 = vmul.f32 %v361, %v473
      %v490 = vmul.f32 %v362, %v474
      %v491 = vmul.f32 %v363, %v475
      %v492 = vmul.f32 %v364, %v476
      %v493 = vmul.f32 %v365, %v477
      %v494 = vmul.f32 %v366, %v478
      %v495 = vmul.f32 %v367, %v479
      %v496 = vmul.f32 %v368, %v480
      %v497 = vmul.f32 %v369, %v481
      %v498 = vmul.f32 %v370, %v482
      %v499 = vpack.c.bf16 %v483, %v483
      %v500 = vpack.c.bf16 %v484, %v484
      %v501 = vpack.c.bf16 %v485, %v485
      %v502 = vpack.c.bf16 %v486, %v486
      %v503 = vpack.c.bf16 %v487, %v487
      %v504 = vpack.c.bf16 %v488, %v488
      %v505 = vpack.c.bf16 %v489, %v489
      %v506 = vpack.c.bf16 %v490, %v490
      %v507 = vpack.c.bf16 %v491, %v491
      %v508 = vpack.c.bf16 %v492, %v492
      %v509 = vpack.c.bf16 %v493, %v493
      %v510 = vpack.c.bf16 %v494, %v494
      %v511 = vpack.c.bf16 %v495, %v495
      %v512 = vpack.c.bf16 %v496, %v496
      %v513 = vpack.c.bf16 %v497, %v497
      %v514 = vpack.c.bf16 %v498, %v498
      %515 = vst [vmem:[%s206] sm:$0xf] %v499
      %516 = vst [vmem:[%s206 + $0x4] sm:$0xf] %v500
      %517 = vst [vmem:[%s206 + $0x8] sm:$0xf] %v501
      %518 = vst [vmem:[%s206 + $0xc] sm:$0xf] %v502
      %519 = vst [vmem:[%s206 + $0x10] sm:$0xf] %v503
      %520 = vst [vmem:[%s206 + $0x14] sm:$0xf] %v504
      %521 = vst [vmem:[%s206 + $0x18] sm:$0xf] %v505
      %522 = vst [vmem:[%s206 + $0x1c] sm:$0xf] %v506
      %523 = vst [vmem:[%s206 + $0x20] sm:$0xf] %v507
      %524 = vst [vmem:[%s206 + $0x24] sm:$0xf] %v508
      %525 = vst [vmem:[%s206 + $0x28] sm:$0xf] %v509
      %526 = vst [vmem:[%s206 + $0x2c] sm:$0xf] %v510
      %527 = vst [vmem:[%s206 + $0x30] sm:$0xf] %v511
      %528 = vst [vmem:[%s206 + $0x34] sm:$0xf] %v512
      %529 = vst [vmem:[%s206 + $0x38] sm:$0xf] %v513
      %530 = vst [vmem:[%s206 + $0x3c] sm:$0xf] %v514
      %v531 = vunpack.c.l.bf16 %v499
      %v532 = vunpack.c.l.bf16 %v500
      %v533 = vunpack.c.l.bf16 %v501
      %v534 = vunpack.c.l.bf16 %v502
      %v535 = vunpack.c.l.bf16 %v503
      %v536 = vunpack.c.l.bf16 %v504
      %v537 = vunpack.c.l.bf16 %v505
      %v538 = vunpack.c.l.bf16 %v506
      %v539 = vunpack.c.l.bf16 %v507
      %v540 = vunpack.c.l.bf16 %v508
      %v541 = vunpack.c.l.bf16 %v509
      %v542 = vunpack.c.l.bf16 %v510
      %v543 = vunpack.c.l.bf16 %v511
      %v544 = vunpack.c.l.bf16 %v512
      %v545 = vunpack.c.l.bf16 %v513
      %v546 = vunpack.c.l.bf16 %v514
      %s547 = smul.u32 %s16, 128
      %v548 = vlaneseq
      %v549 = vand.u32 %v548, 127
      %v550 = vstv %s547
      %v551 = vadd.s32 %v549, %v550
      %vm552 = vcmp.lt.s32.totalorder %v551, 320
      %v553 = vsel %vm552, 1, 0
      %v554 = vcvt.s32.f32 %v553
      %555 = vmatpush.msra.mxu0 %v546
      %556 = vmatpush.msra.mxu0 %v545
      %557 = vmatpush.msra.mxu0 %v544
      %558 = vmatpush.msra.mxu0 %v543
      %559 = vmatpush.msra.mxu0 %v542
      %560 = vmatpush.msra.mxu0 %v541
      %561 = vmatpush.msra.mxu0 %v540
      %562 = vmatpush.msra.mxu0 %v539
      %563 = vmatpush.msra.mxu0 %v538
      %564 = vmatpush.msra.mxu0 %v537
      %565 = vmatpush.msra.mxu0 %v536
      %566 = vmatpush.msra.mxu0 %v535
      %567 = vmatpush.msra.mxu0 %v534
      %568 = vmatpush.msra.mxu0 %v533
      %569 = vmatpush.msra.mxu0 %v532
      %570 = vmatpush.msra.mxu0 %v531
      %571 = vmatmul.f32.gmra.mxu0 %v554
      %v572 = vpop.f32.mrf.mxu0
      %v573 = vadd.f32 0.0, %v572
      %574 = vdwg.mxu0
      %v575 = vmul.f32 %v531, %v531
      %v576 = vmul.f32 %v532, %v532
      %v577 = vmul.f32 %v533, %v533
      %v578 = vmul.f32 %v534, %v534
      %v579 = vmul.f32 %v535, %v535
      %v580 = vmul.f32 %v536, %v536
      %v581 = vmul.f32 %v537, %v537
      %v582 = vmul.f32 %v538, %v538
      %v583 = vmul.f32 %v539, %v539
      %v584 = vmul.f32 %v540, %v540
      %v585 = vmul.f32 %v541, %v541
      %v586 = vmul.f32 %v542, %v542
      %v587 = vmul.f32 %v543, %v543
      %v588 = vmul.f32 %v544, %v544
      %v589 = vmul.f32 %v545, %v545
      %v590 = vmul.f32 %v546, %v546
      %591 = vmatpush.msra.mxu0 %v590
      %592 = vmatpush.msra.mxu0 %v589
      %593 = vmatpush.msra.mxu0 %v588
      %594 = vmatpush.msra.mxu0 %v587
      %595 = vmatpush.msra.mxu0 %v586
      %596 = vmatpush.msra.mxu0 %v585
      %597 = vmatpush.msra.mxu0 %v584
      %598 = vmatpush.msra.mxu0 %v583
      %599 = vmatpush.msra.mxu0 %v582
      %600 = vmatpush.msra.mxu0 %v581
      %601 = vmatpush.msra.mxu0 %v580
      %602 = vmatpush.msra.mxu0 %v579
      %603 = vmatpush.msra.mxu0 %v578
      %604 = vmatpush.msra.mxu0 %v577
      %605 = vmatpush.msra.mxu0 %v576
      %606 = vmatpush.msra.mxu0 %v575
      %607 = vmatmul.f32.gmra.mxu0 %v554
      %v608 = vpop.f32.mrf.mxu0
      %v609 = vadd.f32 0.0, %v608
      %610 = vdwg.mxu0
      %v611 = vlaneseq
      %v612 = vshrl.u32 %v611, 7
      %vm613 = vcmp.eq.s32.totalorder %v612, 0
      %v614 = vsel %vm613, 1, 0
      %vm615 = vcmp.eq.s32.totalorder %v614, 1
      %v616 = vperm.slane %v573, 0
      %v617 = vsel %vm615, %v616, 0.0
      %vm618 = vcmp.eq.s32.totalorder %v612, 1
      %v619 = vsel %vm618, 1, 0
      %vm620 = vcmp.eq.s32.totalorder %v619, 1
      %v621 = vperm.slane %v609, 0
      %v622 = vsel %vm620, %v621, 0.0
      %v623 = vadd.f32 %v617, %v622
      %624 = vst [vmem:[%s211] sm:$0xff] %v623
      %s625 = smul.u32 16, %s16
      %p626 = scmp.lt.s32.totalorder %s625, 47
      %s627 = scalar_select %p626, %s625, 47
      %s628 = smul.addr %s627, 4
      %s629 = scalar_lea.vmem %s3, %s628
      %p630 = scmp.lt.s32.totalorder %s16, 2
      %s631 = scalar_select %p630, %s16, 2
      %s632 = smul.addr %s631, 8
      %s633 = scalar_lea.vmem %s4, %s632
      // Predicated region
      $region33: #{conv_mixer_forward.6} parent=31 // pred_check
        %p634 = pneg %p102
      $region34: #{conv_mixer_forward.6} parent=31 // pred_check_branch
        %636 = sbr.rel (%p634) target = $region36
      $region35: #{conv_mixer_forward.6} parent=31 // pred_region
        %s637 = smul.u32 16, %s16
      $region36: #{conv_mixer_forward.6} parent=31 // pred_fallthru
        _
      // Predicated region
      $region37: #{conv_mixer_forward.6} parent=31 // pred_check
        %p638 = pneg %p128
      $region38: #{conv_mixer_forward.6} parent=31 // pred_check_branch
        %640 = sbr.rel (%p638) target = $region40
      $region39: #{conv_mixer_forward.6} parent=31 // pred_region
        _
      $region40: #{conv_mixer_forward.6} parent=31 // pred_fallthru
        _
    $region32: #{conv_mixer_forward.6} parent=5 // pred_fallthru
      _
    %p641 = scmp.le.s32.totalorder 2, %s11
    // Predicated region
    $region41: #{conv_mixer_forward.6} parent=5 // pred_check
      %p642 = pneg %p641
    $region42: #{conv_mixer_forward.6} parent=5 // pred_check_branch
      %644 = sbr.rel (%p642) target = $region44
    $region43: #{conv_mixer_forward.6} parent=5 // pred_region
      %s645 = ssub.s32 %s11, 2
      // Predicated region
      $region45: #{conv_mixer_forward.6} parent=43 // pred_check
        %p646 = pneg %p108
      $region46: #{conv_mixer_forward.6} parent=43 // pred_check_branch
        %648 = sbr.rel (%p646) target = $region48
      $region47: #{conv_mixer_forward.6} parent=43 // pred_region
        %s649 = smul.u32 16, %s17
        %p650 = scmp.lt.s32.totalorder %s649, 47
        %s651 = scalar_select %p650, %s649, 47
        %s652 = smul.addr %s651, 4
        %s653 = scalar_lea.vmem %s3, %s652
      $region48: #{conv_mixer_forward.6} parent=43 // pred_fallthru
        _
      // Predicated region
      $region49: #{conv_mixer_forward.6} parent=43 // pred_check
        %p654 = pneg %p134
      $region50: #{conv_mixer_forward.6} parent=43 // pred_check_branch
        %656 = sbr.rel (%p654) target = $region52
      $region51: #{conv_mixer_forward.6} parent=43 // pred_region
        %p657 = scmp.lt.s32.totalorder %s17, 2
        %s658 = scalar_select %p657, %s17, 2
        %s659 = smul.addr %s658, 8
        %s660 = scalar_lea.vmem %s4, %s659
      $region52: #{conv_mixer_forward.6} parent=43 // pred_fallthru
        _
    $region44: #{conv_mixer_forward.6} parent=5 // pred_fallthru
      _
  $region6: #{conv_mixer_forward.6} parent=0 // loop_footer
    %s15 = sadd.s32 1, %s11
  $region7: #{conv_mixer_forward.6} parent=0 // loop_footer_branch
    %10 = sbr.rel target = $region3
  $region8: #{conv_mixer_forward.6} parent=0 // loop_exit
    _

// kernel: conv_mixer_forward.8
$region0: #{conv_mixer_forward.8}
  #allocation0 [shape = 'u32[]', space=smem, size = 0x4, offset = 0x4, fixed_abs, tag = 'smem constant byte address 0x4 - core index']
  #allocation1 [shape = 'u32[72,128]{1,0:T(1,128)}', space=vmem, size = 0x9000, scoped, tag = 'internal scratch']
  %s0 = inlined_call_operand.vmem [shape: bf16[384,128], index: 0, kind: input, shape index: {}]
  %s1 = inlined_call_operand.vmem [shape: f32[1,128], index: 1, kind: input, shape index: {}]
  %s2 = inlined_call_operand.vmem [shape: f32[1,128], index: 2, kind: input, shape index: {}]
  %s3 = inlined_call_operand.vmem [shape: bf16[384,128], index: 3, kind: input, shape index: {}]
  %s4 = inlined_call_operand.vmem [shape: f32[1,128], index: 4, kind: input, shape index: {}]
  %s5 = inlined_call_operand.vmem [shape: f32[1,128], index: 5, kind: input, shape index: {}]
  %s6 = inlined_call_operand.vmem [shape: bf16[128,128], index: 6, kind: input, shape index: {}]
  %s7 = inlined_call_operand.vmem [shape: f32[1,128], index: 7, kind: input, shape index: {}]
  %s8 = inlined_call_operand.vmem [shape: bf16[384,128], index: 8, kind: output, shape index: {0}]
  %s9 = inlined_call_operand.vmem [shape: f32[3,8,128], index: 9, kind: output, shape index: {1}]
  %10 = xla_tuple %s8, %s9
  %s11 = sld [smem:[#allocation0]]
  $region73: #{conv_mixer_forward.8} parent=0
    _
  %s13 = ssub.s32 1, %s11
  %s14 = scalar_select 0, %s13, %s11
  loop: start=0, step=1, limit=5
  $region2: #{conv_mixer_forward.8} parent=0 // loop_pre_header
    _
  $region3: #{conv_mixer_forward.8} parent=0 // loop_header
    %s16 = sphi 0, %s20
    %p17 = scmp.ge.s32.totalorder %s16, 5
    %s26 = sphi 0, %s28
    %s29 = sphi 0, %s26
    %s30 = sphi 0, %s29
    %s46 = sphi 0, %s30
    %s50 = sphi 0, %s50
    %s52 = sphi 0, %s50
    %s53 = sphi 0, %s52
    %s67 = sphi 0, %s53
    %s71 = sphi 0, %s71
    %s73 = sphi 0, %s71
    %s74 = sphi 0, %s73
    %s88 = sphi 0, %s74
    %s94 = sphi 0, %s96
    %s97 = sphi 0, %s94
    %s98 = sphi 0, %s97
    %s114 = sphi 0, %s98
    %s118 = sphi 0, %s118
    %s120 = sphi 0, %s118
    %s121 = sphi 0, %s120
    %s135 = sphi 0, %s121
    %s139 = sphi 0, %s139
    %s141 = sphi 0, %s139
    %s142 = sphi 0, %s141
    %s156 = sphi 0, %s142
    %s160 = sphi 0, %s160
    %s162 = sphi 0, %s160
    %s163 = sphi 0, %s162
    %s177 = sphi 0, %s163
    %s181 = sphi 0, %s181
    %s183 = sphi 0, %s181
    %s184 = sphi 0, %s183
    %s198 = sphi 0, %s184
    %s204 = sphi 0, %s206
    %s207 = sphi 0, %s204
    %s208 = sphi 0, %s207
    %s224 = sphi 0, %s208
    %s230 = sphi 0, %s232
    %s233 = sphi 0, %s230
    %s234 = sphi 0, %s233
    %s250 = sphi 0, %s234
  $region4: #{conv_mixer_forward.8} parent=0 // loop_header_branch
    %19 = sbr.rel (%p17) target = $region8
  $region5: #{conv_mixer_forward.8} parent=0 // loop_body
    %s21 = ssub.s32 %s16, 1
    %s22 = ssub.s32 %s16, 2
    %s23 = sadd.s32 %s16, 1
    %s24 = ssub.s32 %s16, %s23
    %p25 = scmp.eq.s32.totalorder %s24, 0
    %s27 = sadd.s32 %s26, 1
    %s28 = scalar_select %p25, %s26, %s27
    %p31 = pneg %p25
    %p32 = scmp.eq.s32.totalorder %s16, 2
    %p33 = por %p31, %p32
    %p34 = scmp.ne.s32.totalorder %s26, %s29
    %p35 = scmp.eq.s32.totalorder %s16, 0
    %p36 = por %p34, %p35
    %p37 = scmp.ne.s32.totalorder %s26, %s29
    %p38 = scmp.eq.s32.totalorder %s21, 2
    %p39 = por %p37, %p38
    %p40 = scmp.ne.s32.totalorder %s29, %s30
    %p41 = scmp.eq.s32.totalorder %s21, 0
    %p42 = por %p40, %p41
    %p43 = scmp.ne.s32.totalorder %s29, %s30
    %p44 = scmp.eq.s32.totalorder %s22, 2
    %p45 = por %p43, %p44
    %p47 = scmp.ne.s32.totalorder %s30, %s46
    %p48 = scmp.eq.s32.totalorder %s22, 0
    %p49 = por %p47, %p48
    %s51 = sadd.s32 %s50, 1
    %p54 = scmp.eq.s32.totalorder %s16, 2
    %p55 = scmp.ne.s32.totalorder %s50, %s52
    %p56 = scmp.eq.s32.totalorder %s16, 0
    %p57 = por %p55, %p56
    %p58 = scmp.ne.s32.totalorder %s50, %s52
    %p59 = scmp.eq.s32.totalorder %s21, 2
    %p60 = por %p58, %p59
    %p61 = scmp.ne.s32.totalorder %s52, %s53
    %p62 = scmp.eq.s32.totalorder %s21, 0
    %p63 = por %p61, %p62
    %p64 = scmp.ne.s32.totalorder %s52, %s53
    %p65 = scmp.eq.s32.totalorder %s22, 2
    %p66 = por %p64, %p65
    %p68 = scmp.ne.s32.totalorder %s53, %s67
    %p69 = scmp.eq.s32.totalorder %s22, 0
    %p70 = por %p68, %p69
    %s72 = sadd.s32 %s71, 1
    %p75 = scmp.eq.s32.totalorder %s16, 2
    %p76 = scmp.ne.s32.totalorder %s71, %s73
    %p77 = scmp.eq.s32.totalorder %s16, 0
    %p78 = por %p76, %p77
    %p79 = scmp.ne.s32.totalorder %s71, %s73
    %p80 = scmp.eq.s32.totalorder %s21, 2
    %p81 = por %p79, %p80
    %p82 = scmp.ne.s32.totalorder %s73, %s74
    %p83 = scmp.eq.s32.totalorder %s21, 0
    %p84 = por %p82, %p83
    %p85 = scmp.ne.s32.totalorder %s73, %s74
    %p86 = scmp.eq.s32.totalorder %s22, 2
    %p87 = por %p85, %p86
    %p89 = scmp.ne.s32.totalorder %s74, %s88
    %p90 = scmp.eq.s32.totalorder %s22, 0
    %p91 = por %p89, %p90
    %s92 = ssub.s32 %s16, %s23
    %p93 = scmp.eq.s32.totalorder %s92, 0
    %s95 = sadd.s32 %s94, 1
    %s96 = scalar_select %p93, %s94, %s95
    %p99 = pneg %p93
    %p100 = scmp.eq.s32.totalorder %s16, 2
    %p101 = por %p99, %p100
    %p102 = scmp.ne.s32.totalorder %s94, %s97
    %p103 = scmp.eq.s32.totalorder %s16, 0
    %p104 = por %p102, %p103
    %p105 = scmp.ne.s32.totalorder %s94, %s97
    %p106 = scmp.eq.s32.totalorder %s21, 2
    %p107 = por %p105, %p106
    %p108 = scmp.ne.s32.totalorder %s97, %s98
    %p109 = scmp.eq.s32.totalorder %s21, 0
    %p110 = por %p108, %p109
    %p111 = scmp.ne.s32.totalorder %s97, %s98
    %p112 = scmp.eq.s32.totalorder %s22, 2
    %p113 = por %p111, %p112
    %p115 = scmp.ne.s32.totalorder %s98, %s114
    %p116 = scmp.eq.s32.totalorder %s22, 0
    %p117 = por %p115, %p116
    %s119 = sadd.s32 %s118, 1
    %p122 = scmp.eq.s32.totalorder %s16, 2
    %p123 = scmp.ne.s32.totalorder %s118, %s120
    %p124 = scmp.eq.s32.totalorder %s16, 0
    %p125 = por %p123, %p124
    %p126 = scmp.ne.s32.totalorder %s118, %s120
    %p127 = scmp.eq.s32.totalorder %s21, 2
    %p128 = por %p126, %p127
    %p129 = scmp.ne.s32.totalorder %s120, %s121
    %p130 = scmp.eq.s32.totalorder %s21, 0
    %p131 = por %p129, %p130
    %p132 = scmp.ne.s32.totalorder %s120, %s121
    %p133 = scmp.eq.s32.totalorder %s22, 2
    %p134 = por %p132, %p133
    %p136 = scmp.ne.s32.totalorder %s121, %s135
    %p137 = scmp.eq.s32.totalorder %s22, 0
    %p138 = por %p136, %p137
    %s140 = sadd.s32 %s139, 1
    %p143 = scmp.eq.s32.totalorder %s16, 2
    %p144 = scmp.ne.s32.totalorder %s139, %s141
    %p145 = scmp.eq.s32.totalorder %s16, 0
    %p146 = por %p144, %p145
    %p147 = scmp.ne.s32.totalorder %s139, %s141
    %p148 = scmp.eq.s32.totalorder %s21, 2
    %p149 = por %p147, %p148
    %p150 = scmp.ne.s32.totalorder %s141, %s142
    %p151 = scmp.eq.s32.totalorder %s21, 0
    %p152 = por %p150, %p151
    %p153 = scmp.ne.s32.totalorder %s141, %s142
    %p154 = scmp.eq.s32.totalorder %s22, 2
    %p155 = por %p153, %p154
    %p157 = scmp.ne.s32.totalorder %s142, %s156
    %p158 = scmp.eq.s32.totalorder %s22, 0
    %p159 = por %p157, %p158
    %s161 = sadd.s32 %s160, 1
    %p164 = scmp.eq.s32.totalorder %s16, 2
    %p165 = scmp.ne.s32.totalorder %s160, %s162
    %p166 = scmp.eq.s32.totalorder %s16, 0
    %p167 = por %p165, %p166
    %p168 = scmp.ne.s32.totalorder %s160, %s162
    %p169 = scmp.eq.s32.totalorder %s21, 2
    %p170 = por %p168, %p169
    %p171 = scmp.ne.s32.totalorder %s162, %s163
    %p172 = scmp.eq.s32.totalorder %s21, 0
    %p173 = por %p171, %p172
    %p174 = scmp.ne.s32.totalorder %s162, %s163
    %p175 = scmp.eq.s32.totalorder %s22, 2
    %p176 = por %p174, %p175
    %p178 = scmp.ne.s32.totalorder %s163, %s177
    %p179 = scmp.eq.s32.totalorder %s22, 0
    %p180 = por %p178, %p179
    %s182 = sadd.s32 %s181, 1
    %p185 = scmp.eq.s32.totalorder %s16, 2
    %p186 = scmp.ne.s32.totalorder %s181, %s183
    %p187 = scmp.eq.s32.totalorder %s16, 0
    %p188 = por %p186, %p187
    %p189 = scmp.ne.s32.totalorder %s181, %s183
    %p190 = scmp.eq.s32.totalorder %s21, 2
    %p191 = por %p189, %p190
    %p192 = scmp.ne.s32.totalorder %s183, %s184
    %p193 = scmp.eq.s32.totalorder %s21, 0
    %p194 = por %p192, %p193
    %p195 = scmp.ne.s32.totalorder %s183, %s184
    %p196 = scmp.eq.s32.totalorder %s22, 2
    %p197 = por %p195, %p196
    %p199 = scmp.ne.s32.totalorder %s184, %s198
    %p200 = scmp.eq.s32.totalorder %s22, 0
    %p201 = por %p199, %p200
    %s202 = ssub.s32 %s16, %s23
    %p203 = scmp.eq.s32.totalorder %s202, 0
    %s205 = sadd.s32 %s204, 1
    %s206 = scalar_select %p203, %s204, %s205
    %p209 = pneg %p203
    %p210 = scmp.eq.s32.totalorder %s16, 2
    %p211 = por %p209, %p210
    %p212 = scmp.ne.s32.totalorder %s204, %s207
    %p213 = scmp.eq.s32.totalorder %s16, 0
    %p214 = por %p212, %p213
    %p215 = scmp.ne.s32.totalorder %s204, %s207
    %p216 = scmp.eq.s32.totalorder %s21, 2
    %p217 = por %p215, %p216
    %p218 = scmp.ne.s32.totalorder %s207, %s208
    %p219 = scmp.eq.s32.totalorder %s21, 0
    %p220 = por %p218, %p219
    %p221 = scmp.ne.s32.totalorder %s207, %s208
    %p222 = scmp.eq.s32.totalorder %s22, 2
    %p223 = por %p221, %p222
    %p225 = scmp.ne.s32.totalorder %s208, %s224
    %p226 = scmp.eq.s32.totalorder %s22, 0
    %p227 = por %p225, %p226
    %s228 = ssub.s32 %s16, %s23
    %p229 = scmp.eq.s32.totalorder %s228, 0
    %s231 = sadd.s32 %s230, 1
    %s232 = scalar_select %p229, %s230, %s231
    %p235 = pneg %p229
    %p236 = scmp.eq.s32.totalorder %s16, 2
    %p237 = por %p235, %p236
    %p238 = scmp.ne.s32.totalorder %s230, %s233
    %p239 = scmp.eq.s32.totalorder %s16, 0
    %p240 = por %p238, %p239
    %p241 = scmp.ne.s32.totalorder %s230, %s233
    %p242 = scmp.eq.s32.totalorder %s21, 2
    %p243 = por %p241, %p242
    %p244 = scmp.ne.s32.totalorder %s233, %s234
    %p245 = scmp.eq.s32.totalorder %s21, 0
    %p246 = por %p244, %p245
    %p247 = scmp.ne.s32.totalorder %s233, %s234
    %p248 = scmp.eq.s32.totalorder %s22, 2
    %p249 = por %p247, %p248
    %p251 = scmp.ne.s32.totalorder %s234, %s250
    %p252 = scmp.eq.s32.totalorder %s22, 0
    %p253 = por %p251, %p252
    %p254 = scmp.le.s32.totalorder 1, %s16
    %p255 = scmp.lt.s32.totalorder %s16, 4
    %p256 = pnand %p254, %p255
    %p257 = pneg %p256
    // Predicated region
    $region9: #{conv_mixer_forward.8} parent=5 // pred_check
      _
    $region10: #{conv_mixer_forward.8} parent=5 // pred_check_branch
      %259 = sbr.rel (%p256) target = $region12
    $region11: #{conv_mixer_forward.8} parent=5 // pred_region
      %s260 = ssub.s32 %s16, 1
      // Predicated region
      $region13: #{conv_mixer_forward.8} parent=11 // pred_check
        %p261 = pneg %p63
      $region14: #{conv_mixer_forward.8} parent=11 // pred_check_branch
        %263 = sbr.rel (%p261) target = $region16
      $region15: #{conv_mixer_forward.8} parent=11 // pred_region
        _
      $region16: #{conv_mixer_forward.8} parent=11 // pred_fallthru
        _
      // Predicated region
      $region17: #{conv_mixer_forward.8} parent=11 // pred_check
        %p264 = pneg %p84
      $region18: #{conv_mixer_forward.8} parent=11 // pred_check_branch
        %266 = sbr.rel (%p264) target = $region20
      $region19: #{conv_mixer_forward.8} parent=11 // pred_region
        _
      $region20: #{conv_mixer_forward.8} parent=11 // pred_fallthru
        _
      // Predicated region
      $region21: #{conv_mixer_forward.8} parent=11 // pred_check
        %p267 = pneg %p131
      $region22: #{conv_mixer_forward.8} parent=11 // pred_check_branch
        %269 = sbr.rel (%p267) target = $region24
      $region23: #{conv_mixer_forward.8} parent=11 // pred_region
        _
      $region24: #{conv_mixer_forward.8} parent=11 // pred_fallthru
        _
      // Predicated region
      $region25: #{conv_mixer_forward.8} parent=11 // pred_check
        %p270 = pneg %p152
      $region26: #{conv_mixer_forward.8} parent=11 // pred_check_branch
        %272 = sbr.rel (%p270) target = $region28
      $region27: #{conv_mixer_forward.8} parent=11 // pred_region
        _
      $region28: #{conv_mixer_forward.8} parent=11 // pred_fallthru
        _
      // Predicated region
      $region29: #{conv_mixer_forward.8} parent=11 // pred_check
        %p273 = pneg %p173
      $region30: #{conv_mixer_forward.8} parent=11 // pred_check_branch
        %275 = sbr.rel (%p273) target = $region32
      $region31: #{conv_mixer_forward.8} parent=11 // pred_region
        _
      $region32: #{conv_mixer_forward.8} parent=11 // pred_fallthru
        _
      // Predicated region
      $region33: #{conv_mixer_forward.8} parent=11 // pred_check
        %p276 = pneg %p194
      $region34: #{conv_mixer_forward.8} parent=11 // pred_check_branch
        %278 = sbr.rel (%p276) target = $region36
      $region35: #{conv_mixer_forward.8} parent=11 // pred_region
        _
      $region36: #{conv_mixer_forward.8} parent=11 // pred_fallthru
        _
    $region12: #{conv_mixer_forward.8} parent=5 // pred_fallthru
      _
    %p279 = scmp.lt.s32.totalorder %s16, 3
    // Predicated region
    $region37: #{conv_mixer_forward.8} parent=5 // pred_check
      %p280 = pneg %p279
    $region38: #{conv_mixer_forward.8} parent=5 // pred_check_branch
      %282 = sbr.rel (%p280) target = $region40
    $region39: #{conv_mixer_forward.8} parent=5 // pred_region
      // Predicated region
      $region41: #{conv_mixer_forward.8} parent=39 // pred_check
        %p283 = pneg %p36
      $region42: #{conv_mixer_forward.8} parent=39 // pred_check_branch
        %285 = sbr.rel (%p283) target = $region44
      $region43: #{conv_mixer_forward.8} parent=39 // pred_region
        %s286 = smul.u32 16, %s16
        %p287 = scmp.lt.s32.totalorder %s286, 47
        %s288 = scalar_select %p287, %s286, 47
        %s289 = smul.addr %s288, 4
        %s290 = scalar_lea.vmem %s0, %s289
        %s291 = smul.u32 16, %s16
      $region44: #{conv_mixer_forward.8} parent=39 // pred_fallthru
        _
      // Predicated region
      $region45: #{conv_mixer_forward.8} parent=39 // pred_check
        %p292 = pneg %p104
      $region46: #{conv_mixer_forward.8} parent=39 // pred_check_branch
        %294 = sbr.rel (%p292) target = $region48
      $region47: #{conv_mixer_forward.8} parent=39 // pred_region
        %s295 = smul.u32 16, %s16
        %p296 = scmp.lt.s32.totalorder %s295, 47
        %s297 = scalar_select %p296, %s295, 47
        %s298 = smul.addr %s297, 4
        %s299 = scalar_lea.vmem %s3, %s298
        %s300 = smul.u32 16, %s16
      $region48: #{conv_mixer_forward.8} parent=39 // pred_fallthru
        _
    $region40: #{conv_mixer_forward.8} parent=5 // pred_fallthru
      _
    %p301 = scmp.le.s32.totalorder 1, %s16
    %p302 = scmp.lt.s32.totalorder %s16, 4
    %p303 = pnand %p301, %p302
    %p304 = pneg %p303
    // Predicated region
    $region49: #{conv_mixer_forward.8} parent=5 // pred_check
      _
    $region50: #{conv_mixer_forward.8} parent=5 // pred_check_branch
      %306 = sbr.rel (%p303) target = $region52
    $region51: #{conv_mixer_forward.8} parent=5 // pred_region
      %s307 = ssub.s32 %s16, 1
      %s308 = smul.u32 16, %s21
      %p309 = scmp.lt.s32.totalorder %s308, 47
      %s310 = scalar_select %p309, %s308, 47
      %s311 = smul.addr %s310, 4
      %s312 = scalar_lea.vmem %s0, %s311
      %p313 = pneg %p42
      %p314 = pneg %p39
      %p315 = pneg %p63
      %p316 = pneg %p60
      %p317 = pneg %p84
      %p318 = pneg %p81
      %s319 = smul.u32 16, %s21
      %p320 = scmp.lt.s32.totalorder %s319, 47
      %s321 = scalar_select %p320, %s319, 47
      %s322 = smul.addr %s321, 4
      %s323 = scalar_lea.vmem %s3, %s322
      %p324 = pneg %p110
      %p325 = pneg %p107
      %p326 = pneg %p131
      %p327 = pneg %p128
      %p328 = pneg %p152
      %p329 = pneg %p149
      %p330 = pneg %p173
      %p331 = pneg %p170
      %p332 = pneg %p194
      %p333 = pneg %p191
      %p334 = pneg %p220
      %p335 = pneg %p217
      %s336 = smul.u32 16, %s21
      %p337 = scmp.lt.s32.totalorder %s336, 47
      %s338 = scalar_select %p337, %s336, 47
      %s339 = smul.addr %s338, 4
      %s340 = scalar_lea.vmem %s8, %s339
      %p341 = pneg %p246
      %p342 = pneg %p243
      %p343 = scmp.lt.s32.totalorder %s21, 2
      %s344 = scalar_select %p343, %s21, 2
      %s345 = smul.addr %s344, 8
      %s346 = scalar_lea.vmem %s9, %s345
      %s347 = smul.u32 16, %s21
      %p348 = scmp.lt.s32.totalorder %s347, 47
      %s349 = scalar_select %p348, %s347, 47
      %s350 = smul.addr %s349, 4
      %s351 = scalar_lea.vmem %s0, %s350
      %s352 = smul.u32 16, %s21
      %s353 = smul.u32 16, %s21
      %p354 = scmp.lt.s32.totalorder %s353, 47
      %s355 = scalar_select %p354, %s353, 47
      %s356 = smul.addr %s355, 4
      %s357 = scalar_lea.vmem %s3, %s356
      %s358 = smul.u32 16, %s21
      %s359 = smul.u32 16, %s21
      %p360 = scmp.lt.s32.totalorder %s359, 47
      %s361 = scalar_select %p360, %s359, 47
      %s362 = smul.addr %s361, 4
      %s363 = scalar_lea.vmem %s8, %s362
      %s364 = smul.u32 16, %s21
      %p365 = scmp.lt.s32.totalorder %s21, 2
      %s366 = scalar_select %p365, %s21, 2
      %s367 = smul.addr %s366, 8
      %s368 = scalar_lea.vmem %s9, %s367
      %v369 = vld [vmem:[%s357] sm:$0xf]
      %v370 = vld [vmem:[%s357 + $0x4] sm:$0xf]
      %v371 = vld [vmem:[%s357 + $0x8] sm:$0xf]
      %v372 = vld [vmem:[%s357 + $0xc] sm:$0xf]
      %v373 = vld [vmem:[%s357 + $0x10] sm:$0xf]
      %v374 = vld [vmem:[%s357 + $0x14] sm:$0xf]
      %v375 = vld [vmem:[%s357 + $0x18] sm:$0xf]
      %v376 = vld [vmem:[%s357 + $0x1c] sm:$0xf]
      %v377 = vld [vmem:[%s357 + $0x20] sm:$0xf]
      %v378 = vld [vmem:[%s357 + $0x24] sm:$0xf]
      %v379 = vld [vmem:[%s357 + $0x28] sm:$0xf]
      %v380 = vld [vmem:[%s357 + $0x2c] sm:$0xf]
      %v381 = vld [vmem:[%s357 + $0x30] sm:$0xf]
      %v382 = vld [vmem:[%s357 + $0x34] sm:$0xf]
      %v383 = vld [vmem:[%s357 + $0x38] sm:$0xf]
      %v384 = vld [vmem:[%s357 + $0x3c] sm:$0xf]
      %v385 = vunpack.c.l.bf16 %v369
      %v386 = vunpack.c.l.bf16 %v370
      %v387 = vunpack.c.l.bf16 %v371
      %v388 = vunpack.c.l.bf16 %v372
      %v389 = vunpack.c.l.bf16 %v373
      %v390 = vunpack.c.l.bf16 %v374
      %v391 = vunpack.c.l.bf16 %v375
      %v392 = vunpack.c.l.bf16 %v376
      %v393 = vunpack.c.l.bf16 %v377
      %v394 = vunpack.c.l.bf16 %v378
      %v395 = vunpack.c.l.bf16 %v379
      %v396 = vunpack.c.l.bf16 %v380
      %v397 = vunpack.c.l.bf16 %v381
      %v398 = vunpack.c.l.bf16 %v382
      %v399 = vunpack.c.l.bf16 %v383
      %v400 = vunpack.c.l.bf16 %v384
      %v401 = vld [vmem:[%s4] sm:$0x1]
      %v403 = vperm.slane %v401, 0
      %v405 = vmul.f32 %v385, %v403
      %v406 = vmul.f32 %v386, %v403
      %v407 = vmul.f32 %v387, %v403
      %v408 = vmul.f32 %v388, %v403
      %v409 = vmul.f32 %v389, %v403
      %v410 = vmul.f32 %v390, %v403
      %v411 = vmul.f32 %v391, %v403
      %v412 = vmul.f32 %v392, %v403
      %v413 = vmul.f32 %v393, %v403
      %v414 = vmul.f32 %v394, %v403
      %v415 = vmul.f32 %v395, %v403
      %v416 = vmul.f32 %v396, %v403
      %v417 = vmul.f32 %v397, %v403
      %v418 = vmul.f32 %v398, %v403
      %v419 = vmul.f32 %v399, %v403
      %v420 = vmul.f32 %v400, %v403
      %v421 = vld [vmem:[%s5] sm:$0x1]
      %v423 = vperm.slane %v421, 0
      %v425 = vadd.f32 %v405, %v423
      %v426 = vadd.f32 %v406, %v423
      %v427 = vadd.f32 %v407, %v423
      %v428 = vadd.f32 %v408, %v423
      %v429 = vadd.f32 %v409, %v423
      %v430 = vadd.f32 %v410, %v423
      %v431 = vadd.f32 %v411, %v423
      %v432 = vadd.f32 %v412, %v423
      %v433 = vadd.f32 %v413, %v423
      %v434 = vadd.f32 %v414, %v423
      %v435 = vadd.f32 %v415, %v423
      %v436 = vadd.f32 %v416, %v423
      %v437 = vadd.f32 %v417, %v423
      %v438 = vadd.f32 %v418, %v423
      %v439 = vadd.f32 %v419, %v423
      %v440 = vadd.f32 %v420, %v423
      %v441 = vld [vmem:[%s351] sm:$0xf]
      %v442 = vld [vmem:[%s351 + $0x4] sm:$0xf]
      %v443 = vld [vmem:[%s351 + $0x8] sm:$0xf]
      %v444 = vld [vmem:[%s351 + $0xc] sm:$0xf]
      %v445 = vld [vmem:[%s351 + $0x10] sm:$0xf]
      %v446 = vld [vmem:[%s351 + $0x14] sm:$0xf]
      %v447 = vld [vmem:[%s351 + $0x18] sm:$0xf]
      %v448 = vld [vmem:[%s351 + $0x1c] sm:$0xf]
      %v449 = vld [vmem:[%s351 + $0x20] sm:$0xf]
      %v450 = vld [vmem:[%s351 + $0x24] sm:$0xf]
      %v451 = vld [vmem:[%s351 + $0x28] sm:$0xf]
      %v452 = vld [vmem:[%s351 + $0x2c] sm:$0xf]
      %v453 = vld [vmem:[%s351 + $0x30] sm:$0xf]
      %v454 = vld [vmem:[%s351 + $0x34] sm:$0xf]
      %v455 = vld [vmem:[%s351 + $0x38] sm:$0xf]
      %v456 = vld [vmem:[%s351 + $0x3c] sm:$0xf]
      %v457 = vunpack.c.l.bf16 %v441
      %v458 = vunpack.c.l.bf16 %v442
      %v459 = vunpack.c.l.bf16 %v443
      %v460 = vunpack.c.l.bf16 %v444
      %v461 = vunpack.c.l.bf16 %v445
      %v462 = vunpack.c.l.bf16 %v446
      %v463 = vunpack.c.l.bf16 %v447
      %v464 = vunpack.c.l.bf16 %v448
      %v465 = vunpack.c.l.bf16 %v449
      %v466 = vunpack.c.l.bf16 %v450
      %v467 = vunpack.c.l.bf16 %v451
      %v468 = vunpack.c.l.bf16 %v452
      %v469 = vunpack.c.l.bf16 %v453
      %v470 = vunpack.c.l.bf16 %v454
      %v471 = vunpack.c.l.bf16 %v455
      %v472 = vunpack.c.l.bf16 %v456
      %v473 = vld [vmem:[%s1] sm:$0x1]
      %v475 = vperm.slane %v473, 0
      %v477 = vmul.f32 %v457, %v475
      %v478 = vmul.f32 %v458, %v475
      %v479 = vmul.f32 %v459, %v475
      %v480 = vmul.f32 %v460, %v475
      %v481 = vmul.f32 %v461, %v475
      %v482 = vmul.f32 %v462, %v475
      %v483 = vmul.f32 %v463, %v475
      %v484 = vmul.f32 %v464, %v475
      %v485 = vmul.f32 %v465, %v475
      %v486 = vmul.f32 %v466, %v475
      %v487 = vmul.f32 %v467, %v475
      %v488 = vmul.f32 %v468, %v475
      %v489 = vmul.f32 %v469, %v475
      %v490 = vmul.f32 %v470, %v475
      %v491 = vmul.f32 %v471, %v475
      %v492 = vmul.f32 %v472, %v475
      %v493 = vld [vmem:[%s2] sm:$0x1]
      %v495 = vperm.slane %v493, 0
      %v497 = vadd.f32 %v477, %v495
      %v498 = vadd.f32 %v478, %v495
      %v499 = vadd.f32 %v479, %v495
      %v500 = vadd.f32 %v480, %v495
      %v501 = vadd.f32 %v481, %v495
      %v502 = vadd.f32 %v482, %v495
      %v503 = vadd.f32 %v483, %v495
      %v504 = vadd.f32 %v484, %v495
      %v505 = vadd.f32 %v485, %v495
      %v506 = vadd.f32 %v486, %v495
      %v507 = vadd.f32 %v487, %v495
      %v508 = vadd.f32 %v488, %v495
      %v509 = vadd.f32 %v489, %v495
      %v510 = vadd.f32 %v490, %v495
      %v511 = vadd.f32 %v491, %v495
      %v512 = vadd.f32 %v492, %v495
      %v513 = vadd.f32 %v497, %v425
      %v514 = vadd.f32 %v498, %v426
      %v515 = vadd.f32 %v499, %v427
      %v516 = vadd.f32 %v500, %v428
      %v517 = vadd.f32 %v501, %v429
      %v518 = vadd.f32 %v502, %v430
      %v519 = vadd.f32 %v503, %v431
      %v520 = vadd.f32 %v504, %v432
      %v521 = vadd.f32 %v505, %v433
      %v522 = vadd.f32 %v506, %v434
      %v523 = vadd.f32 %v507, %v435
      %v524 = vadd.f32 %v508, %v436
      %v525 = vadd.f32 %v509, %v437
      %v526 = vadd.f32 %v510, %v438
      %v527 = vadd.f32 %v511, %v439
      %v528 = vadd.f32 %v512, %v440
      %v529 = vpack.c.bf16 %v514, %v513
      %v530 = vpack.c.bf16 %v516, %v515
      %v531 = vpack.c.bf16 %v518, %v517
      %v532 = vpack.c.bf16 %v520, %v519
      %v533 = vpack.c.bf16 %v522, %v521
      %v534 = vpack.c.bf16 %v524, %v523
      %v535 = vpack.c.bf16 %v526, %v525
      %v536 = vpack.c.bf16 %v528, %v527
      %v537 = vld [vmem:[%s6] sm:$0xf]
      %v538 = vld [vmem:[%s6 + $0x4] sm:$0xf]
      %v539 = vld [vmem:[%s6 + $0x8] sm:$0xf]
      %v540 = vld [vmem:[%s6 + $0xc] sm:$0xf]
      %v541 = vld [vmem:[%s6 + $0x10] sm:$0xf]
      %v542 = vld [vmem:[%s6 + $0x14] sm:$0xf]
      %v543 = vld [vmem:[%s6 + $0x18] sm:$0xf]
      %v544 = vld [vmem:[%s6 + $0x1c] sm:$0xf]
      %v545 = vld [vmem:[%s6 + $0x20] sm:$0xf]
      %v546 = vld [vmem:[%s6 + $0x24] sm:$0xf]
      %v547 = vld [vmem:[%s6 + $0x28] sm:$0xf]
      %v548 = vld [vmem:[%s6 + $0x2c] sm:$0xf]
      %v549 = vld [vmem:[%s6 + $0x30] sm:$0xf]
      %v550 = vld [vmem:[%s6 + $0x34] sm:$0xf]
      %v551 = vld [vmem:[%s6 + $0x38] sm:$0xf]
      %v552 = vld [vmem:[%s6 + $0x3c] sm:$0xf]
      %v553 = vld [vmem:[%s7] sm:$0x1]
      %v555 = vperm.slane %v553, 0
      %v573 = vunpack.c.l.b16 %v537
      %v574 = vunpack.c.l.b16 %v538
      %v575 = vunpack.c.l.b16 %v539
      %v576 = vunpack.c.l.b16 %v540
      %v577 = vunpack.c.l.b16 %v541
      %v578 = vunpack.c.l.b16 %v542
      %v579 = vunpack.c.l.b16 %v543
      %v580 = vunpack.c.l.b16 %v544
      %v581 = vunpack.c.l.b16 %v545
      %v582 = vunpack.c.l.b16 %v546
      %v583 = vunpack.c.l.b16 %v547
      %v584 = vunpack.c.l.b16 %v548
      %v585 = vunpack.c.l.b16 %v549
      %v586 = vunpack.c.l.b16 %v550
      %v587 = vunpack.c.l.b16 %v551
      %v588 = vunpack.c.l.b16 %v552
      %v589 = vpack.c.b16 %v574, %v573
      %v590 = vpack.c.b16 %v576, %v575
      %v591 = vpack.c.b16 %v578, %v577
      %v592 = vpack.c.b16 %v580, %v579
      %v593 = vpack.c.b16 %v582, %v581
      %v594 = vpack.c.b16 %v584, %v583
      %v595 = vpack.c.b16 %v586, %v585
      %v596 = vpack.c.b16 %v588, %v587
      %605 = vmatpush.bf16.msra.mxu0 %v596
      %606 = vmatpush.bf16.msra.mxu0 %v595
      %607 = vmatpush.bf16.msra.mxu0 %v594
      %608 = vmatpush.bf16.msra.mxu0 %v593
      %609 = vmatpush.bf16.msra.mxu0 %v592
      %610 = vmatpush.bf16.msra.mxu0 %v591
      %611 = vmatpush.bf16.msra.mxu0 %v590
      %612 = vmatpush.bf16.msra.mxu0 %v589
      %613 = vmatmul.bf16.gmra.mxu0 %v529
      %v614 = vpop.f32.mrf.mxu0
      %v615 = vadd.f32 %v555, %v614
      %v616 = vpop.f32.mrf.mxu0
      %v617 = vadd.f32 %v555, %v616
      %618 = vmatmul.bf16.gmra.mxu0 %v530
      %v619 = vpop.f32.mrf.mxu0
      %v620 = vadd.f32 %v555, %v619
      %v621 = vpop.f32.mrf.mxu0
      %v622 = vadd.f32 %v555, %v621
      %623 = vmatmul.bf16.gmra.mxu0 %v531
      %v624 = vpop.f32.mrf.mxu0
      %v625 = vadd.f32 %v555, %v624
      %v626 = vpop.f32.mrf.mxu0
      %v627 = vadd.f32 %v555, %v626
      %628 = vmatmul.bf16.gmra.mxu0 %v532
      %v629 = vpop.f32.mrf.mxu0
      %v630 = vadd.f32 %v555, %v629
      %v631 = vpop.f32.mrf.mxu0
      %v632 = vadd.f32 %v555, %v631
      %633 = vmatmul.bf16.gmra.mxu0 %v533
      %v634 = vpop.f32.mrf.mxu0
      %v635 = vadd.f32 %v555, %v634
      %v636 = vpop.f32.mrf.mxu0
      %v637 = vadd.f32 %v555, %v636
      %638 = vmatmul.bf16.gmra.mxu0 %v534
      %v639 = vpop.f32.mrf.mxu0
      %v640 = vadd.f32 %v555, %v639
      %v641 = vpop.f32.mrf.mxu0
      %v642 = vadd.f32 %v555, %v641
      %643 = vmatmul.bf16.gmra.mxu0 %v535
      %v644 = vpop.f32.mrf.mxu0
      %v645 = vadd.f32 %v555, %v644
      %v646 = vpop.f32.mrf.mxu0
      %v647 = vadd.f32 %v555, %v646
      %648 = vmatmul.bf16.gmra.mxu0 %v536
      %v649 = vpop.f32.mrf.mxu0
      %v650 = vadd.f32 %v555, %v649
      %v651 = vpop.f32.mrf.mxu0
      %v652 = vadd.f32 %v555, %v651
      %653 = vdwg.mxu0
      %v654 = vmul.f32 %v615, 0.5
      %v655 = vmul.f32 %v617, 0.5
      %v656 = vmul.f32 %v620, 0.5
      %v657 = vmul.f32 %v622, 0.5
      %v658 = vmul.f32 %v625, 0.5
      %v659 = vmul.f32 %v627, 0.5
      %v660 = vmul.f32 %v630, 0.5
      %v661 = vmul.f32 %v632, 0.5
      %v662 = vmul.f32 %v635, 0.5
      %v663 = vmul.f32 %v637, 0.5
      %v664 = vmul.f32 %v640, 0.5
      %v665 = vmul.f32 %v642, 0.5
      %v666 = vmul.f32 %v645, 0.5
      %v667 = vmul.f32 %v647, 0.5
      %v668 = vmul.f32 %v650, 0.5
      %v669 = vmul.f32 %v652, 0.5
      %v670 = vmul.f32 %v615, 0.044715
      %v671 = vmul.f32 %v617, 0.044715
      %v672 = vmul.f32 %v620, 0.044715
      %v673 = vmul.f32 %v622, 0.044715
      %v674 = vmul.f32 %v625, 0.044715
      %v675 = vmul.f32 %v627, 0.044715
      %v676 = vmul.f32 %v630, 0.044715
      %v677 = vmul.f32 %v632, 0.044715
      %v678 = vmul.f32 %v635, 0.044715
      %v679 = vmul.f32 %v637, 0.044715
      %v680 = vmul.f32 %v640, 0.044715
      %v681 = vmul.f32 %v642, 0.044715
      %v682 = vmul.f32 %v645, 0.044715
      %v683 = vmul.f32 %v647, 0.044715
      %v684 = vmul.f32 %v650, 0.044715
      %v685 = vmul.f32 %v652, 0.044715
      %v686 = vmul.f32 %v670, %v615
      %v687 = vmul.f32 %v671, %v617
      %v688 = vmul.f32 %v672, %v620
      %v689 = vmul.f32 %v673, %v622
      %v690 = vmul.f32 %v674, %v625
      %v691 = vmul.f32 %v675, %v627
      %v692 = vmul.f32 %v676, %v630
      %v693 = vmul.f32 %v677, %v632
      %v694 = vmul.f32 %v678, %v635
      %v695 = vmul.f32 %v679, %v637
      %v696 = vmul.f32 %v680, %v640
      %v697 = vmul.f32 %v681, %v642
      %v698 = vmul.f32 %v682, %v645
      %v699 = vmul.f32 %v683, %v647
      %v700 = vmul.f32 %v684, %v650
      %v701 = vmul.f32 %v685, %v652
      %v702 = vmul.f32 %v686, %v615
      %v703 = vmul.f32 %v687, %v617
      %v704 = vmul.f32 %v688, %v620
      %v705 = vmul.f32 %v689, %v622
      %v706 = vmul.f32 %v690, %v625
      %v707 = vmul.f32 %v691, %v627
      %v708 = vmul.f32 %v692, %v630
      %v709 = vmul.f32 %v693, %v632
      %v710 = vmul.f32 %v694, %v635
      %v711 = vmul.f32 %v695, %v637
      %v712 = vmul.f32 %v696, %v640
      %v713 = vmul.f32 %v697, %v642
      %v714 = vmul.f32 %v698, %v645
      %v715 = vmul.f32 %v699, %v647
      %v716 = vmul.f32 %v700, %v650
      %v717 = vmul.f32 %v701, %v652
      %v718 = vadd.f32 %v615, %v702
      %v719 = vadd.f32 %v617, %v703
      %v720 = vadd.f32 %v620, %v704
      %v721 = vadd.f32 %v622, %v705
      %v722 = vadd.f32 %v625, %v706
      %v723 = vadd.f32 %v627, %v707
      %v724 = vadd.f32 %v630, %v708
      %v725 = vadd.f32 %v632, %v709
      %v726 = vadd.f32 %v635, %v710
      %v727 = vadd.f32 %v637, %v711
      %v728 = vadd.f32 %v640, %v712
      %v729 = vadd.f32 %v642, %v713
      %v730 = vadd.f32 %v645, %v714
      %v731 = vadd.f32 %v647, %v715
      %v732 = vadd.f32 %v650, %v716
      %v733 = vadd.f32 %v652, %v717
      %v734 = vmul.f32 %v718, 0.7978846
      %v735 = vmul.f32 %v719, 0.7978846
      %v736 = vmul.f32 %v720, 0.7978846
      %v737 = vmul.f32 %v721, 0.7978846
      %v738 = vmul.f32 %v722, 0.7978846
      %v739 = vmul.f32 %v723, 0.7978846
      %v740 = vmul.f32 %v724, 0.7978846
      %v741 = vmul.f32 %v725, 0.7978846
      %v742 = vmul.f32 %v726, 0.7978846
      %v743 = vmul.f32 %v727, 0.7978846
      %v744 = vmul.f32 %v728, 0.7978846
      %v745 = vmul.f32 %v729, 0.7978846
      %v746 = vmul.f32 %v730, 0.7978846
      %v747 = vmul.f32 %v731, 0.7978846
      %v748 = vmul.f32 %v732, 0.7978846
      %v749 = vmul.f32 %v733, 0.7978846
      %v750 = vtanh.pop %v734
      %v751 = vtanh.pop %v735
      %v752 = vtanh.pop %v736
      %v753 = vtanh.pop %v737
      %v754 = vtanh.pop %v738
      %v755 = vtanh.pop %v739
      %v756 = vtanh.pop %v740
      %v757 = vtanh.pop %v741
      %v758 = vtanh.pop %v742
      %v759 = vtanh.pop %v743
      %v760 = vtanh.pop %v744
      %v761 = vtanh.pop %v745
      %v762 = vtanh.pop %v746
      %v763 = vtanh.pop %v747
      %v764 = vtanh.pop %v748
      %v765 = vtanh.pop %v749
      %v766 = vadd.f32 %v750, 1.0
      %v767 = vadd.f32 %v751, 1.0
      %v768 = vadd.f32 %v752, 1.0
      %v769 = vadd.f32 %v753, 1.0
      %v770 = vadd.f32 %v754, 1.0
      %v771 = vadd.f32 %v755, 1.0
      %v772 = vadd.f32 %v756, 1.0
      %v773 = vadd.f32 %v757, 1.0
      %v774 = vadd.f32 %v758, 1.0
      %v775 = vadd.f32 %v759, 1.0
      %v776 = vadd.f32 %v760, 1.0
      %v777 = vadd.f32 %v761, 1.0
      %v778 = vadd.f32 %v762, 1.0
      %v779 = vadd.f32 %v763, 1.0
      %v780 = vadd.f32 %v764, 1.0
      %v781 = vadd.f32 %v765, 1.0
      %v782 = vmul.f32 %v654, %v766
      %v783 = vmul.f32 %v655, %v767
      %v784 = vmul.f32 %v656, %v768
      %v785 = vmul.f32 %v657, %v769
      %v786 = vmul.f32 %v658, %v770
      %v787 = vmul.f32 %v659, %v771
      %v788 = vmul.f32 %v660, %v772
      %v789 = vmul.f32 %v661, %v773
      %v790 = vmul.f32 %v662, %v774
      %v791 = vmul.f32 %v663, %v775
      %v792 = vmul.f32 %v664, %v776
      %v793 = vmul.f32 %v665, %v777
      %v794 = vmul.f32 %v666, %v778
      %v795 = vmul.f32 %v667, %v779
      %v796 = vmul.f32 %v668, %v780
      %v797 = vmul.f32 %v669, %v781
      %v798 = vpack.c.bf16 %v782, %v782
      %v799 = vpack.c.bf16 %v783, %v783
      %v800 = vpack.c.bf16 %v784, %v784
      %v801 = vpack.c.bf16 %v785, %v785
      %v802 = vpack.c.bf16 %v786, %v786
      %v803 = vpack.c.bf16 %v787, %v787
      %v804 = vpack.c.bf16 %v788, %v788
      %v805 = vpack.c.bf16 %v789, %v789
      %v806 = vpack.c.bf16 %v790, %v790
      %v807 = vpack.c.bf16 %v791, %v791
      %v808 = vpack.c.bf16 %v792, %v792
      %v809 = vpack.c.bf16 %v793, %v793
      %v810 = vpack.c.bf16 %v794, %v794
      %v811 = vpack.c.bf16 %v795, %v795
      %v812 = vpack.c.bf16 %v796, %v796
      %v813 = vpack.c.bf16 %v797, %v797
      %814 = vst [vmem:[%s363] sm:$0xf] %v798
      %815 = vst [vmem:[%s363 + $0x4] sm:$0xf] %v799
      %816 = vst [vmem:[%s363 + $0x8] sm:$0xf] %v800
      %817 = vst [vmem:[%s363 + $0xc] sm:$0xf] %v801
      %818 = vst [vmem:[%s363 + $0x10] sm:$0xf] %v802
      %819 = vst [vmem:[%s363 + $0x14] sm:$0xf] %v803
      %820 = vst [vmem:[%s363 + $0x18] sm:$0xf] %v804
      %821 = vst [vmem:[%s363 + $0x1c] sm:$0xf] %v805
      %822 = vst [vmem:[%s363 + $0x20] sm:$0xf] %v806
      %823 = vst [vmem:[%s363 + $0x24] sm:$0xf] %v807
      %824 = vst [vmem:[%s363 + $0x28] sm:$0xf] %v808
      %825 = vst [vmem:[%s363 + $0x2c] sm:$0xf] %v809
      %826 = vst [vmem:[%s363 + $0x30] sm:$0xf] %v810
      %827 = vst [vmem:[%s363 + $0x34] sm:$0xf] %v811
      %828 = vst [vmem:[%s363 + $0x38] sm:$0xf] %v812
      %829 = vst [vmem:[%s363 + $0x3c] sm:$0xf] %v813
      %v830 = vunpack.c.l.bf16 %v798
      %v831 = vunpack.c.l.bf16 %v799
      %v832 = vunpack.c.l.bf16 %v800
      %v833 = vunpack.c.l.bf16 %v801
      %v834 = vunpack.c.l.bf16 %v802
      %v835 = vunpack.c.l.bf16 %v803
      %v836 = vunpack.c.l.bf16 %v804
      %v837 = vunpack.c.l.bf16 %v805
      %v838 = vunpack.c.l.bf16 %v806
      %v839 = vunpack.c.l.bf16 %v807
      %v840 = vunpack.c.l.bf16 %v808
      %v841 = vunpack.c.l.bf16 %v809
      %v842 = vunpack.c.l.bf16 %v810
      %v843 = vunpack.c.l.bf16 %v811
      %v844 = vunpack.c.l.bf16 %v812
      %v845 = vunpack.c.l.bf16 %v813
      %s846 = smul.u32 %s21, 128
      %v847 = vlaneseq
      %v848 = vand.u32 %v847, 127
      %v849 = vstv %s846
      %v850 = vadd.s32 %v848, %v849
      %vm851 = vcmp.lt.s32.totalorder %v850, 320
      %v852 = vsel %vm851, 1, 0
      %v853 = vcvt.s32.f32 %v852
      %854 = vmatpush.msra.mxu0 %v845
      %855 = vmatpush.msra.mxu0 %v844
      %856 = vmatpush.msra.mxu0 %v843
      %857 = vmatpush.msra.mxu0 %v842
      %858 = vmatpush.msra.mxu0 %v841
      %859 = vmatpush.msra.mxu0 %v840
      %860 = vmatpush.msra.mxu0 %v839
      %861 = vmatpush.msra.mxu0 %v838
      %862 = vmatpush.msra.mxu0 %v837
      %863 = vmatpush.msra.mxu0 %v836
      %864 = vmatpush.msra.mxu0 %v835
      %865 = vmatpush.msra.mxu0 %v834
      %866 = vmatpush.msra.mxu0 %v833
      %867 = vmatpush.msra.mxu0 %v832
      %868 = vmatpush.msra.mxu0 %v831
      %869 = vmatpush.msra.mxu0 %v830
      %870 = vmatmul.f32.gmra.mxu0 %v853
      %v871 = vpop.f32.mrf.mxu0
      %v872 = vadd.f32 0.0, %v871
      %873 = vdwg.mxu0
      %v874 = vmul.f32 %v830, %v830
      %v875 = vmul.f32 %v831, %v831
      %v876 = vmul.f32 %v832, %v832
      %v877 = vmul.f32 %v833, %v833
      %v878 = vmul.f32 %v834, %v834
      %v879 = vmul.f32 %v835, %v835
      %v880 = vmul.f32 %v836, %v836
      %v881 = vmul.f32 %v837, %v837
      %v882 = vmul.f32 %v838, %v838
      %v883 = vmul.f32 %v839, %v839
      %v884 = vmul.f32 %v840, %v840
      %v885 = vmul.f32 %v841, %v841
      %v886 = vmul.f32 %v842, %v842
      %v887 = vmul.f32 %v843, %v843
      %v888 = vmul.f32 %v844, %v844
      %v889 = vmul.f32 %v845, %v845
      %890 = vmatpush.msra.mxu0 %v889
      %891 = vmatpush.msra.mxu0 %v888
      %892 = vmatpush.msra.mxu0 %v887
      %893 = vmatpush.msra.mxu0 %v886
      %894 = vmatpush.msra.mxu0 %v885
      %895 = vmatpush.msra.mxu0 %v884
      %896 = vmatpush.msra.mxu0 %v883
      %897 = vmatpush.msra.mxu0 %v882
      %898 = vmatpush.msra.mxu0 %v881
      %899 = vmatpush.msra.mxu0 %v880
      %900 = vmatpush.msra.mxu0 %v879
      %901 = vmatpush.msra.mxu0 %v878
      %902 = vmatpush.msra.mxu0 %v877
      %903 = vmatpush.msra.mxu0 %v876
      %904 = vmatpush.msra.mxu0 %v875
      %905 = vmatpush.msra.mxu0 %v874
      %906 = vmatmul.f32.gmra.mxu0 %v853
      %v907 = vpop.f32.mrf.mxu0
      %v908 = vadd.f32 0.0, %v907
      %909 = vdwg.mxu0
      %v910 = vlaneseq
      %v911 = vshrl.u32 %v910, 7
      %vm912 = vcmp.eq.s32.totalorder %v911, 0
      %v913 = vsel %vm912, 1, 0
      %vm914 = vcmp.eq.s32.totalorder %v913, 1
      %v915 = vperm.slane %v872, 0
      %v916 = vsel %vm914, %v915, 0.0
      %vm917 = vcmp.eq.s32.totalorder %v911, 1
      %v918 = vsel %vm917, 1, 0
      %vm919 = vcmp.eq.s32.totalorder %v918, 1
      %v920 = vperm.slane %v908, 0
      %v921 = vsel %vm919, %v920, 0.0
      %v922 = vadd.f32 %v916, %v921
      %923 = vst [vmem:[%s368] sm:$0xff] %v922
      %s924 = smul.u32 16, %s21
      %p925 = scmp.lt.s32.totalorder %s924, 47
      %s926 = scalar_select %p925, %s924, 47
      %s927 = smul.addr %s926, 4
      %s928 = scalar_lea.vmem %s8, %s927
      %p929 = scmp.lt.s32.totalorder %s21, 2
      %s930 = scalar_select %p929, %s21, 2
      %s931 = smul.addr %s930, 8
      %s932 = scalar_lea.vmem %s9, %s931
      // Predicated region
      $region53: #{conv_mixer_forward.8} parent=51 // pred_check
        %p933 = pneg %p217
      $region54: #{conv_mixer_forward.8} parent=51 // pred_check_branch
        %935 = sbr.rel (%p933) target = $region56
      $region55: #{conv_mixer_forward.8} parent=51 // pred_region
        %s936 = smul.u32 16, %s21
      $region56: #{conv_mixer_forward.8} parent=51 // pred_fallthru
        _
      // Predicated region
      $region57: #{conv_mixer_forward.8} parent=51 // pred_check
        %p937 = pneg %p243
      $region58: #{conv_mixer_forward.8} parent=51 // pred_check_branch
        %939 = sbr.rel (%p937) target = $region60
      $region59: #{conv_mixer_forward.8} parent=51 // pred_region
        _
      $region60: #{conv_mixer_forward.8} parent=51 // pred_fallthru
        _
    $region52: #{conv_mixer_forward.8} parent=5 // pred_fallthru
      _
    %p940 = scmp.le.s32.totalorder 2, %s16
    // Predicated region
    $region61: #{conv_mixer_forward.8} parent=5 // pred_check
      %p941 = pneg %p940
    $region62: #{conv_mixer_forward.8} parent=5 // pred_check_branch
      %943 = sbr.rel (%p941) target = $region64
    $region63: #{conv_mixer_forward.8} parent=5 // pred_region
      %s944 = ssub.s32 %s16, 2
      // Predicated region
      $region65: #{conv_mixer_forward.8} parent=63 // pred_check
        %p945 = pneg %p223
      $region66: #{conv_mixer_forward.8} parent=63 // pred_check_branch
        %947 = sbr.rel (%p945) target = $region68
      $region67: #{conv_mixer_forward.8} parent=63 // pred_region
        %s948 = smul.u32 16, %s22
        %p949 = scmp.lt.s32.totalorder %s948, 47
        %s950 = scalar_select %p949, %s948, 47
        %s951 = smul.addr %s950, 4
        %s952 = scalar_lea.vmem %s8, %s951
      $region68: #{conv_mixer_forward.8} parent=63 // pred_fallthru
        _
      // Predicated region
      $region69: #{conv_mixer_forward.8} parent=63 // pred_check
        %p953 = pneg %p249
      $region70: #{conv_mixer_forward.8} parent=63 // pred_check_branch
        %955 = sbr.rel (%p953) target = $region72
      $region71: #{conv_mixer_forward.8} parent=63 // pred_region
        %p956 = scmp.lt.s32.totalorder %s22, 2
        %s957 = scalar_select %p956, %s22, 2
        %s958 = smul.addr %s957, 8
        %s959 = scalar_lea.vmem %s9, %s958
      $region72: #{conv_mixer_forward.8} parent=63 // pred_fallthru
        _
    $region64: #{conv_mixer_forward.8} parent=5 // pred_fallthru
      _
  $region6: #{conv_mixer_forward.8} parent=0 // loop_footer
    %s20 = sadd.s32 1, %s16
  $region7: #{conv_mixer_forward.8} parent=0 // loop_footer_branch
    %15 = sbr.rel target = $region3
  $region8: #{conv_mixer_forward.8} parent=0 // loop_exit
    _

// kernel: conv_mixer_forward.11
$region0: #{conv_mixer_forward.11}
  #allocation0 [shape = 'u32[]', space=smem, size = 0x4, offset = 0x4, fixed_abs, tag = 'smem constant byte address 0x4 - core index']
  #allocation1 [shape = 'u32[72,128]{1,0:T(1,128)}', space=vmem, size = 0x9000, scoped, tag = 'internal scratch']
  %s0 = inlined_call_operand.vmem [shape: bf16[384,128], index: 0, kind: input, shape index: {}]
  %s1 = inlined_call_operand.vmem [shape: f32[1,128], index: 1, kind: input, shape index: {}]
  %s2 = inlined_call_operand.vmem [shape: f32[1,128], index: 2, kind: input, shape index: {}]
  %s3 = inlined_call_operand.vmem [shape: f32[2,128], index: 3, kind: input, shape index: {}]
  %s4 = inlined_call_operand.vmem [shape: bf16[128,128], index: 4, kind: input, shape index: {}]
  %s5 = inlined_call_operand.vmem [shape: f32[1,128], index: 5, kind: input, shape index: {}]
  %s6 = inlined_call_operand.vmem [shape: f32[3,2,128], index: 6, kind: output, shape index: {}]
  %s7 = sld [smem:[#allocation0]]
  $region57: #{conv_mixer_forward.11} parent=0
    _
  %s9 = ssub.s32 1, %s7
  %s10 = scalar_select 0, %s9, %s7
  loop: start=0, step=1, limit=5
  $region2: #{conv_mixer_forward.11} parent=0 // loop_pre_header
    _
  $region3: #{conv_mixer_forward.11} parent=0 // loop_header
    %s12 = sphi 0, %s16
    %p13 = scmp.ge.s32.totalorder %s12, 5
    %s22 = sphi 0, %s24
    %s25 = sphi 0, %s22
    %s26 = sphi 0, %s25
    %s42 = sphi 0, %s26
    %s46 = sphi 0, %s46
    %s48 = sphi 0, %s46
    %s49 = sphi 0, %s48
    %s63 = sphi 0, %s49
    %s67 = sphi 0, %s67
    %s69 = sphi 0, %s67
    %s70 = sphi 0, %s69
    %s84 = sphi 0, %s70
    %s88 = sphi 0, %s88
    %s90 = sphi 0, %s88
    %s91 = sphi 0, %s90
    %s105 = sphi 0, %s91
    %s109 = sphi 0, %s109
    %s111 = sphi 0, %s109
    %s112 = sphi 0, %s111
    %s126 = sphi 0, %s112
    %s130 = sphi 0, %s130
    %s132 = sphi 0, %s130
    %s133 = sphi 0, %s132
    %s147 = sphi 0, %s133
    %s153 = sphi 0, %s155
    %s156 = sphi 0, %s153
    %s157 = sphi 0, %s156
    %s173 = sphi 0, %s157
  $region4: #{conv_mixer_forward.11} parent=0 // loop_header_branch
    %15 = sbr.rel (%p13) target = $region8
  $region5: #{conv_mixer_forward.11} parent=0 // loop_body
    %s17 = ssub.s32 %s12, 1
    %s18 = ssub.s32 %s12, 2
    %s19 = sadd.s32 %s12, 1
    %s20 = ssub.s32 %s12, %s19
    %p21 = scmp.eq.s32.totalorder %s20, 0
    %s23 = sadd.s32 %s22, 1
    %s24 = scalar_select %p21, %s22, %s23
    %p27 = pneg %p21
    %p28 = scmp.eq.s32.totalorder %s12, 2
    %p29 = por %p27, %p28
    %p30 = scmp.ne.s32.totalorder %s22, %s25
    %p31 = scmp.eq.s32.totalorder %s12, 0
    %p32 = por %p30, %p31
    %p33 = scmp.ne.s32.totalorder %s22, %s25
    %p34 = scmp.eq.s32.totalorder %s17, 2
    %p35 = por %p33, %p34
    %p36 = scmp.ne.s32.totalorder %s25, %s26
    %p37 = scmp.eq.s32.totalorder %s17, 0
    %p38 = por %p36, %p37
    %p39 = scmp.ne.s32.totalorder %s25, %s26
    %p40 = scmp.eq.s32.totalorder %s18, 2
    %p41 = por %p39, %p40
    %p43 = scmp.ne.s32.totalorder %s26, %s42
    %p44 = scmp.eq.s32.totalorder %s18, 0
    %p45 = por %p43, %p44
    %s47 = sadd.s32 %s46, 1
    %p50 = scmp.eq.s32.totalorder %s12, 2
    %p51 = scmp.ne.s32.totalorder %s46, %s48
    %p52 = scmp.eq.s32.totalorder %s12, 0
    %p53 = por %p51, %p52
    %p54 = scmp.ne.s32.totalorder %s46, %s48
    %p55 = scmp.eq.s32.totalorder %s17, 2
    %p56 = por %p54, %p55
    %p57 = scmp.ne.s32.totalorder %s48, %s49
    %p58 = scmp.eq.s32.totalorder %s17, 0
    %p59 = por %p57, %p58
    %p60 = scmp.ne.s32.totalorder %s48, %s49
    %p61 = scmp.eq.s32.totalorder %s18, 2
    %p62 = por %p60, %p61
    %p64 = scmp.ne.s32.totalorder %s49, %s63
    %p65 = scmp.eq.s32.totalorder %s18, 0
    %p66 = por %p64, %p65
    %s68 = sadd.s32 %s67, 1
    %p71 = scmp.eq.s32.totalorder %s12, 2
    %p72 = scmp.ne.s32.totalorder %s67, %s69
    %p73 = scmp.eq.s32.totalorder %s12, 0
    %p74 = por %p72, %p73
    %p75 = scmp.ne.s32.totalorder %s67, %s69
    %p76 = scmp.eq.s32.totalorder %s17, 2
    %p77 = por %p75, %p76
    %p78 = scmp.ne.s32.totalorder %s69, %s70
    %p79 = scmp.eq.s32.totalorder %s17, 0
    %p80 = por %p78, %p79
    %p81 = scmp.ne.s32.totalorder %s69, %s70
    %p82 = scmp.eq.s32.totalorder %s18, 2
    %p83 = por %p81, %p82
    %p85 = scmp.ne.s32.totalorder %s70, %s84
    %p86 = scmp.eq.s32.totalorder %s18, 0
    %p87 = por %p85, %p86
    %s89 = sadd.s32 %s88, 1
    %p92 = scmp.eq.s32.totalorder %s12, 2
    %p93 = scmp.ne.s32.totalorder %s88, %s90
    %p94 = scmp.eq.s32.totalorder %s12, 0
    %p95 = por %p93, %p94
    %p96 = scmp.ne.s32.totalorder %s88, %s90
    %p97 = scmp.eq.s32.totalorder %s17, 2
    %p98 = por %p96, %p97
    %p99 = scmp.ne.s32.totalorder %s90, %s91
    %p100 = scmp.eq.s32.totalorder %s17, 0
    %p101 = por %p99, %p100
    %p102 = scmp.ne.s32.totalorder %s90, %s91
    %p103 = scmp.eq.s32.totalorder %s18, 2
    %p104 = por %p102, %p103
    %p106 = scmp.ne.s32.totalorder %s91, %s105
    %p107 = scmp.eq.s32.totalorder %s18, 0
    %p108 = por %p106, %p107
    %s110 = sadd.s32 %s109, 1
    %p113 = scmp.eq.s32.totalorder %s12, 2
    %p114 = scmp.ne.s32.totalorder %s109, %s111
    %p115 = scmp.eq.s32.totalorder %s12, 0
    %p116 = por %p114, %p115
    %p117 = scmp.ne.s32.totalorder %s109, %s111
    %p118 = scmp.eq.s32.totalorder %s17, 2
    %p119 = por %p117, %p118
    %p120 = scmp.ne.s32.totalorder %s111, %s112
    %p121 = scmp.eq.s32.totalorder %s17, 0
    %p122 = por %p120, %p121
    %p123 = scmp.ne.s32.totalorder %s111, %s112
    %p124 = scmp.eq.s32.totalorder %s18, 2
    %p125 = por %p123, %p124
    %p127 = scmp.ne.s32.totalorder %s112, %s126
    %p128 = scmp.eq.s32.totalorder %s18, 0
    %p129 = por %p127, %p128
    %s131 = sadd.s32 %s130, 1
    %p134 = scmp.eq.s32.totalorder %s12, 2
    %p135 = scmp.ne.s32.totalorder %s130, %s132
    %p136 = scmp.eq.s32.totalorder %s12, 0
    %p137 = por %p135, %p136
    %p138 = scmp.ne.s32.totalorder %s130, %s132
    %p139 = scmp.eq.s32.totalorder %s17, 2
    %p140 = por %p138, %p139
    %p141 = scmp.ne.s32.totalorder %s132, %s133
    %p142 = scmp.eq.s32.totalorder %s17, 0
    %p143 = por %p141, %p142
    %p144 = scmp.ne.s32.totalorder %s132, %s133
    %p145 = scmp.eq.s32.totalorder %s18, 2
    %p146 = por %p144, %p145
    %p148 = scmp.ne.s32.totalorder %s133, %s147
    %p149 = scmp.eq.s32.totalorder %s18, 0
    %p150 = por %p148, %p149
    %s151 = ssub.s32 %s12, %s19
    %p152 = scmp.eq.s32.totalorder %s151, 0
    %s154 = sadd.s32 %s153, 1
    %s155 = scalar_select %p152, %s153, %s154
    %p158 = pneg %p152
    %p159 = scmp.eq.s32.totalorder %s12, 2
    %p160 = por %p158, %p159
    %p161 = scmp.ne.s32.totalorder %s153, %s156
    %p162 = scmp.eq.s32.totalorder %s12, 0
    %p163 = por %p161, %p162
    %p164 = scmp.ne.s32.totalorder %s153, %s156
    %p165 = scmp.eq.s32.totalorder %s17, 2
    %p166 = por %p164, %p165
    %p167 = scmp.ne.s32.totalorder %s156, %s157
    %p168 = scmp.eq.s32.totalorder %s17, 0
    %p169 = por %p167, %p168
    %p170 = scmp.ne.s32.totalorder %s156, %s157
    %p171 = scmp.eq.s32.totalorder %s18, 2
    %p172 = por %p170, %p171
    %p174 = scmp.ne.s32.totalorder %s157, %s173
    %p175 = scmp.eq.s32.totalorder %s18, 0
    %p176 = por %p174, %p175
    %p177 = scmp.le.s32.totalorder 1, %s12
    %p178 = scmp.lt.s32.totalorder %s12, 4
    %p179 = pnand %p177, %p178
    %p180 = pneg %p179
    // Predicated region
    $region9: #{conv_mixer_forward.11} parent=5 // pred_check
      _
    $region10: #{conv_mixer_forward.11} parent=5 // pred_check_branch
      %182 = sbr.rel (%p179) target = $region12
    $region11: #{conv_mixer_forward.11} parent=5 // pred_region
      %s183 = ssub.s32 %s12, 1
      // Predicated region
      $region13: #{conv_mixer_forward.11} parent=11 // pred_check
        %p184 = pneg %p59
      $region14: #{conv_mixer_forward.11} parent=11 // pred_check_branch
        %186 = sbr.rel (%p184) target = $region16
      $region15: #{conv_mixer_forward.11} parent=11 // pred_region
        _
      $region16: #{conv_mixer_forward.11} parent=11 // pred_fallthru
        _
      // Predicated region
      $region17: #{conv_mixer_forward.11} parent=11 // pred_check
        %p187 = pneg %p80
      $region18: #{conv_mixer_forward.11} parent=11 // pred_check_branch
        %189 = sbr.rel (%p187) target = $region20
      $region19: #{conv_mixer_forward.11} parent=11 // pred_region
        _
      $region20: #{conv_mixer_forward.11} parent=11 // pred_fallthru
        _
      // Predicated region
      $region21: #{conv_mixer_forward.11} parent=11 // pred_check
        %p190 = pneg %p101
      $region22: #{conv_mixer_forward.11} parent=11 // pred_check_branch
        %192 = sbr.rel (%p190) target = $region24
      $region23: #{conv_mixer_forward.11} parent=11 // pred_region
        _
      $region24: #{conv_mixer_forward.11} parent=11 // pred_fallthru
        _
      // Predicated region
      $region25: #{conv_mixer_forward.11} parent=11 // pred_check
        %p193 = pneg %p122
      $region26: #{conv_mixer_forward.11} parent=11 // pred_check_branch
        %195 = sbr.rel (%p193) target = $region28
      $region27: #{conv_mixer_forward.11} parent=11 // pred_region
        _
      $region28: #{conv_mixer_forward.11} parent=11 // pred_fallthru
        _
      // Predicated region
      $region29: #{conv_mixer_forward.11} parent=11 // pred_check
        %p196 = pneg %p143
      $region30: #{conv_mixer_forward.11} parent=11 // pred_check_branch
        %198 = sbr.rel (%p196) target = $region32
      $region31: #{conv_mixer_forward.11} parent=11 // pred_region
        _
      $region32: #{conv_mixer_forward.11} parent=11 // pred_fallthru
        _
    $region12: #{conv_mixer_forward.11} parent=5 // pred_fallthru
      _
    %p199 = scmp.lt.s32.totalorder %s12, 3
    // Predicated region
    $region33: #{conv_mixer_forward.11} parent=5 // pred_check
      %p200 = pneg %p199
    $region34: #{conv_mixer_forward.11} parent=5 // pred_check_branch
      %202 = sbr.rel (%p200) target = $region36
    $region35: #{conv_mixer_forward.11} parent=5 // pred_region
      // Predicated region
      $region37: #{conv_mixer_forward.11} parent=35 // pred_check
        %p203 = pneg %p32
      $region38: #{conv_mixer_forward.11} parent=35 // pred_check_branch
        %205 = sbr.rel (%p203) target = $region40
      $region39: #{conv_mixer_forward.11} parent=35 // pred_region
        %s206 = smul.u32 16, %s12
        %p207 = scmp.lt.s32.totalorder %s206, 47
        %s208 = scalar_select %p207, %s206, 47
        %s209 = smul.addr %s208, 4
        %s210 = scalar_lea.vmem %s0, %s209
        %s211 = smul.u32 16, %s12
      $region40: #{conv_mixer_forward.11} parent=35 // pred_fallthru
        _
    $region36: #{conv_mixer_forward.11} parent=5 // pred_fallthru
      _
    %p212 = scmp.le.s32.totalorder 1, %s12
    %p213 = scmp.lt.s32.totalorder %s12, 4
    %p214 = pnand %p212, %p213
    %p215 = pneg %p214
    // Predicated region
    $region41: #{conv_mixer_forward.11} parent=5 // pred_check
      _
    $region42: #{conv_mixer_forward.11} parent=5 // pred_check_branch
      %217 = sbr.rel (%p214) target = $region44
    $region43: #{conv_mixer_forward.11} parent=5 // pred_region
      %s218 = ssub.s32 %s12, 1
      %s219 = smul.u32 16, %s17
      %p220 = scmp.lt.s32.totalorder %s219, 47
      %s221 = scalar_select %p220, %s219, 47
      %s222 = smul.addr %s221, 4
      %s223 = scalar_lea.vmem %s0, %s222
      %p224 = pneg %p38
      %p225 = pneg %p35
      %p226 = pneg %p59
      %p227 = pneg %p56
      %p228 = pneg %p80
      %p229 = pneg %p77
      %p230 = pneg %p101
      %p231 = pneg %p98
      %p232 = pneg %p122
      %p233 = pneg %p119
      %p234 = pneg %p143
      %p235 = pneg %p140
      %p236 = pneg %p169
      %p237 = pneg %p166
      %p238 = scmp.lt.s32.totalorder %s17, 2
      %s239 = scalar_select %p238, %s17, 2
      %s240 = smul.addr %s239, 2
      %s241 = scalar_lea.vmem %s6, %s240
      %s242 = smul.u32 16, %s17
      %p243 = scmp.lt.s32.totalorder %s242, 47
      %s244 = scalar_select %p243, %s242, 47
      %s245 = smul.addr %s244, 4
      %s246 = scalar_lea.vmem %s0, %s245
      %s247 = smul.u32 16, %s17
      %p248 = scmp.lt.s32.totalorder %s17, 2
      %s249 = scalar_select %p248, %s17, 2
      %s250 = smul.addr %s249, 2
      %s251 = scalar_lea.vmem %s6, %s250
      %v252 = vld [vmem:[%s246] sm:$0xf]
      %v253 = vld [vmem:[%s246 + $0x4] sm:$0xf]
      %v254 = vld [vmem:[%s246 + $0x8] sm:$0xf]
      %v255 = vld [vmem:[%s246 + $0xc] sm:$0xf]
      %v256 = vld [vmem:[%s246 + $0x10] sm:$0xf]
      %v257 = vld [vmem:[%s246 + $0x14] sm:$0xf]
      %v258 = vld [vmem:[%s246 + $0x18] sm:$0xf]
      %v259 = vld [vmem:[%s246 + $0x1c] sm:$0xf]
      %v260 = vld [vmem:[%s246 + $0x20] sm:$0xf]
      %v261 = vld [vmem:[%s246 + $0x24] sm:$0xf]
      %v262 = vld [vmem:[%s246 + $0x28] sm:$0xf]
      %v263 = vld [vmem:[%s246 + $0x2c] sm:$0xf]
      %v264 = vld [vmem:[%s246 + $0x30] sm:$0xf]
      %v265 = vld [vmem:[%s246 + $0x34] sm:$0xf]
      %v266 = vld [vmem:[%s246 + $0x38] sm:$0xf]
      %v267 = vld [vmem:[%s246 + $0x3c] sm:$0xf]
      %v268 = vunpack.c.l.bf16 %v252
      %v269 = vunpack.c.l.bf16 %v253
      %v270 = vunpack.c.l.bf16 %v254
      %v271 = vunpack.c.l.bf16 %v255
      %v272 = vunpack.c.l.bf16 %v256
      %v273 = vunpack.c.l.bf16 %v257
      %v274 = vunpack.c.l.bf16 %v258
      %v275 = vunpack.c.l.bf16 %v259
      %v276 = vunpack.c.l.bf16 %v260
      %v277 = vunpack.c.l.bf16 %v261
      %v278 = vunpack.c.l.bf16 %v262
      %v279 = vunpack.c.l.bf16 %v263
      %v280 = vunpack.c.l.bf16 %v264
      %v281 = vunpack.c.l.bf16 %v265
      %v282 = vunpack.c.l.bf16 %v266
      %v283 = vunpack.c.l.bf16 %v267
      %v284 = vld [vmem:[%s1] sm:$0x1]
      %v286 = vperm.slane %v284, 0
      %v288 = vmul.f32 %v268, %v286
      %v289 = vmul.f32 %v269, %v286
      %v290 = vmul.f32 %v270, %v286
      %v291 = vmul.f32 %v271, %v286
      %v292 = vmul.f32 %v272, %v286
      %v293 = vmul.f32 %v273, %v286
      %v294 = vmul.f32 %v274, %v286
      %v295 = vmul.f32 %v275, %v286
      %v296 = vmul.f32 %v276, %v286
      %v297 = vmul.f32 %v277, %v286
      %v298 = vmul.f32 %v278, %v286
      %v299 = vmul.f32 %v279, %v286
      %v300 = vmul.f32 %v280, %v286
      %v301 = vmul.f32 %v281, %v286
      %v302 = vmul.f32 %v282, %v286
      %v303 = vmul.f32 %v283, %v286
      %v304 = vld [vmem:[%s2] sm:$0x1]
      %v306 = vperm.slane %v304, 0
      %v308 = vadd.f32 %v288, %v306
      %v309 = vadd.f32 %v289, %v306
      %v310 = vadd.f32 %v290, %v306
      %v311 = vadd.f32 %v291, %v306
      %v312 = vadd.f32 %v292, %v306
      %v313 = vadd.f32 %v293, %v306
      %v314 = vadd.f32 %v294, %v306
      %v315 = vadd.f32 %v295, %v306
      %v316 = vadd.f32 %v296, %v306
      %v317 = vadd.f32 %v297, %v306
      %v318 = vadd.f32 %v298, %v306
      %v319 = vadd.f32 %v299, %v306
      %v320 = vadd.f32 %v300, %v306
      %v321 = vadd.f32 %v301, %v306
      %v322 = vadd.f32 %v302, %v306
      %v323 = vadd.f32 %v303, %v306
      %v324 = vld [vmem:[%s3] sm:$0x3]
      %325 = vmatpush.msra.mxu0 %v323
      %326 = vmatpush.msra.mxu0 %v322
      %327 = vmatpush.msra.mxu0 %v321
      %328 = vmatpush.msra.mxu0 %v320
      %329 = vmatpush.msra.mxu0 %v319
      %330 = vmatpush.msra.mxu0 %v318
      %331 = vmatpush.msra.mxu0 %v317
      %332 = vmatpush.msra.mxu0 %v316
      %333 = vmatpush.msra.mxu0 %v315
      %334 = vmatpush.msra.mxu0 %v314
      %335 = vmatpush.msra.mxu0 %v313
      %336 = vmatpush.msra.mxu0 %v312
      %337 = vmatpush.msra.mxu0 %v311
      %338 = vmatpush.msra.mxu0 %v310
      %339 = vmatpush.msra.mxu0 %v309
      %340 = vmatpush.msra.mxu0 %v308
      %341 = vmatmul.f32.gmra.mxu0 %v324
      %v342 = vpop.f32.mrf.mxu0
      %v343 = vadd.f32 0.0, %v342
      %344 = vdwg.mxu0
      %v345 = vpack.c.bf16 %v343, %v343
      %v346 = vld [vmem:[%s4] sm:$0xf]
      %v347 = vld [vmem:[%s4 + $0x4] sm:$0xf]
      %v348 = vld [vmem:[%s4 + $0x8] sm:$0xf]
      %v349 = vld [vmem:[%s4 + $0xc] sm:$0xf]
      %v350 = vld [vmem:[%s4 + $0x10] sm:$0xf]
      %v351 = vld [vmem:[%s4 + $0x14] sm:$0xf]
      %v352 = vld [vmem:[%s4 + $0x18] sm:$0xf]
      %v353 = vld [vmem:[%s4 + $0x1c] sm:$0xf]
      %v354 = vld [vmem:[%s4 + $0x20] sm:$0xf]
      %v355 = vld [vmem:[%s4 + $0x24] sm:$0xf]
      %v356 = vld [vmem:[%s4 + $0x28] sm:$0xf]
      %v357 = vld [vmem:[%s4 + $0x2c] sm:$0xf]
      %v358 = vld [vmem:[%s4 + $0x30] sm:$0xf]
      %v359 = vld [vmem:[%s4 + $0x34] sm:$0xf]
      %v360 = vld [vmem:[%s4 + $0x38] sm:$0xf]
      %v361 = vld [vmem:[%s4 + $0x3c] sm:$0xf]
      %v362 = vld [vmem:[%s5] sm:$0x1]
      %v364 = vperm.slane %v362, 0
      %v382 = vunpack.c.l.b16 %v346
      %v383 = vunpack.c.l.b16 %v347
      %v384 = vunpack.c.l.b16 %v348
      %v385 = vunpack.c.l.b16 %v349
      %v386 = vunpack.c.l.b16 %v350
      %v387 = vunpack.c.l.b16 %v351
      %v388 = vunpack.c.l.b16 %v352
      %v389 = vunpack.c.l.b16 %v353
      %v390 = vunpack.c.l.b16 %v354
      %v391 = vunpack.c.l.b16 %v355
      %v392 = vunpack.c.l.b16 %v356
      %v393 = vunpack.c.l.b16 %v357
      %v394 = vunpack.c.l.b16 %v358
      %v395 = vunpack.c.l.b16 %v359
      %v396 = vunpack.c.l.b16 %v360
      %v397 = vunpack.c.l.b16 %v361
      %v398 = vpack.c.b16 %v383, %v382
      %v399 = vpack.c.b16 %v385, %v384
      %v400 = vpack.c.b16 %v387, %v386
      %v401 = vpack.c.b16 %v389, %v388
      %v402 = vpack.c.b16 %v391, %v390
      %v403 = vpack.c.b16 %v393, %v392
      %v404 = vpack.c.b16 %v395, %v394
      %v405 = vpack.c.b16 %v397, %v396
      %414 = vmatpush.bf16.msra.mxu0 %v405
      %415 = vmatpush.bf16.msra.mxu0 %v404
      %416 = vmatpush.bf16.msra.mxu0 %v403
      %417 = vmatpush.bf16.msra.mxu0 %v402
      %418 = vmatpush.bf16.msra.mxu0 %v401
      %419 = vmatpush.bf16.msra.mxu0 %v400
      %420 = vmatpush.bf16.msra.mxu0 %v399
      %421 = vmatpush.bf16.msra.mxu0 %v398
      %422 = vmatmul.bf16.gmra.mxu0 %v345
      %v423 = vpop.f32.mrf.mxu0
      %v424 = vadd.f32 %v364, %v423
      %v425 = vpop.f32.mrf.mxu0
      %426 = vdwg.mxu0
      %427 = vst [vmem:[%s251] sm:$0x3] %v424
      %p428 = scmp.lt.s32.totalorder %s17, 2
      %s429 = scalar_select %p428, %s17, 2
      %s430 = smul.addr %s429, 2
      %s431 = scalar_lea.vmem %s6, %s430
      // Predicated region
      $region45: #{conv_mixer_forward.11} parent=43 // pred_check
        %p432 = pneg %p166
      $region46: #{conv_mixer_forward.11} parent=43 // pred_check_branch
        %434 = sbr.rel (%p432) target = $region48
      $region47: #{conv_mixer_forward.11} parent=43 // pred_region
        _
      $region48: #{conv_mixer_forward.11} parent=43 // pred_fallthru
        _
    $region44: #{conv_mixer_forward.11} parent=5 // pred_fallthru
      _
    %p435 = scmp.le.s32.totalorder 2, %s12
    // Predicated region
    $region49: #{conv_mixer_forward.11} parent=5 // pred_check
      %p436 = pneg %p435
    $region50: #{conv_mixer_forward.11} parent=5 // pred_check_branch
      %438 = sbr.rel (%p436) target = $region52
    $region51: #{conv_mixer_forward.11} parent=5 // pred_region
      %s439 = ssub.s32 %s12, 2
      // Predicated region
      $region53: #{conv_mixer_forward.11} parent=51 // pred_check
        %p440 = pneg %p172
      $region54: #{conv_mixer_forward.11} parent=51 // pred_check_branch
        %442 = sbr.rel (%p440) target = $region56
      $region55: #{conv_mixer_forward.11} parent=51 // pred_region
        %p443 = scmp.lt.s32.totalorder %s18, 2
        %s444 = scalar_select %p443, %s18, 2
        %s445 = smul.addr %s444, 2
        %s446 = scalar_lea.vmem %s6, %s445
      $region56: #{conv_mixer_forward.11} parent=51 // pred_fallthru
        _
    $region52: #{conv_mixer_forward.11} parent=5 // pred_fallthru
      _
  $region6: #{conv_mixer_forward.11} parent=0 // loop_footer
    %s16 = sadd.s32 1, %s12
  $region7: #{conv_mixer_forward.11} parent=0 // loop_footer_branch
    %11 = sbr.rel target = $region3
  $region8: #{conv_mixer_forward.11} parent=0 // loop_exit
    _

// kernel: conv_mixer_forward.7
$region0: #{conv_mixer_forward.7}
  #allocation0 [shape = 'u32[]', space=smem, size = 0x4, offset = 0x4, fixed_abs, tag = 'smem constant byte address 0x4 - core index']
  #allocation1 [shape = 'u32[72,128]{1,0:T(1,128)}', space=vmem, size = 0x9000, scoped, tag = 'internal scratch']
  #allocation2 [shape = 'f32[2,12,18,128]{3,2,1,0:T(8,128)}', space=vmem, size = 0x48000, scoped, tag = 'scratch operand']
  %s0 = inlined_call_operand.vmem [shape: bf16[6,8,8,128], index: 0, kind: input, shape index: {}]
  %s1 = inlined_call_operand.vmem [shape: f32[1,128], index: 1, kind: input, shape index: {}]
  %s2 = inlined_call_operand.vmem [shape: f32[1,128], index: 2, kind: input, shape index: {}]
  %s3 = inlined_call_operand.vmem [shape: f32[32,128], index: 3, kind: input, shape index: {}]
  %s4 = inlined_call_operand.vmem [shape: f32[1,128], index: 4, kind: input, shape index: {}]
  %s5 = inlined_call_operand.vmem [shape: bf16[6,8,8,128], index: 5, kind: output, shape index: {0}]
  %s6 = inlined_call_operand.vmem [shape: f32[3,8,128], index: 6, kind: output, shape index: {1}]
  %7 = xla_tuple %s5, %s6
  %s8 = sld [smem:[#allocation0]]
  $region61: #{conv_mixer_forward.7} parent=0
    _
  %s10 = ssub.s32 1, %s8
  %s11 = scalar_select 0, %s10, %s8
  loop: start=0, step=1, limit=5
  $region2: #{conv_mixer_forward.7} parent=0 // loop_pre_header
    _
  $region3: #{conv_mixer_forward.7} parent=0 // loop_header
    %s13 = sphi 0, %s17
    %p14 = scmp.ge.s32.totalorder %s13, 5
    %s20 = sphi 0, %s32
    %s21 = sphi 0, %s28
    %s22 = sphi 0, %s20
    %s23 = sphi 0, %s21
    %s24 = sphi 0, %s22
    %s25 = sphi 0, %s23
    %s37 = sphi 0, %s39
    %s40 = sphi 0, %s37
    %s41 = sphi 0, %s40
    %s57 = sphi 0, %s41
    %s63 = sphi 0, %s65
    %s66 = sphi 0, %s63
    %s67 = sphi 0, %s66
    %s83 = sphi 0, %s67
    %s89 = sphi 0, %s91
    %s92 = sphi 0, %s89
    %s93 = sphi 0, %s92
    %s109 = sphi 0, %s93
    %s115 = sphi 0, %s117
    %s118 = sphi 0, %s115
    %s119 = sphi 0, %s118
    %s135 = sphi 0, %s119
    %s141 = sphi 0, %s143
    %s144 = sphi 0, %s141
    %s145 = sphi 0, %s144
    %s161 = sphi 0, %s145
    %s169 = sphi 0, %s171
    %s172 = sphi 0, %s169
    %s173 = sphi 0, %s172
    %s189 = sphi 0, %s173
    %s197 = sphi 0, %s199
    %s200 = sphi 0, %s197
    %s201 = sphi 0, %s200
    %s217 = sphi 0, %s201
  $region4: #{conv_mixer_forward.7} parent=0 // loop_header_branch
    %16 = sbr.rel (%p14) target = $region8
  $region5: #{conv_mixer_forward.7} parent=0 // loop_body
    %s18 = ssub.s32 %s13, 1
    %s19 = ssub.s32 %s13, 2
    %s26 = sadd.s32 1, %s21
    %p27 = scmp.ge.s32.totalorder %s26, 1
    %s28 = scalar_select %p27, 0, %s26
    %s29 = sadd.s32 1, %s20
    %s30 = scalar_select %p27, %s29, %s20
    %p31 = scmp.ge.s32.totalorder %s30, 3
    %s32 = scalar_select %p31, 0, %s30
    %s33 = ssub.s32 %s20, %s32
    %s34 = ssub.s32 %s21, %s28
    %s35 = sor.u32 %s33, %s34
    %p36 = scmp.eq.s32.totalorder %s35, 0
    %s38 = sadd.s32 %s37, 1
    %s39 = scalar_select %p36, %s37, %s38
    %p42 = pneg %p36
    %p43 = scmp.eq.s32.totalorder %s13, 2
    %p44 = por %p42, %p43
    %p45 = scmp.ne.s32.totalorder %s37, %s40
    %p46 = scmp.eq.s32.totalorder %s13, 0
    %p47 = por %p45, %p46
    %p48 = scmp.ne.s32.totalorder %s37, %s40
    %p49 = scmp.eq.s32.totalorder %s18, 2
    %p50 = por %p48, %p49
    %p51 = scmp.ne.s32.totalorder %s40, %s41
    %p52 = scmp.eq.s32.totalorder %s18, 0
    %p53 = por %p51, %p52
    %p54 = scmp.ne.s32.totalorder %s40, %s41
    %p55 = scmp.eq.s32.totalorder %s19, 2
    %p56 = por %p54, %p55
    %p58 = scmp.ne.s32.totalorder %s41, %s57
    %p59 = scmp.eq.s32.totalorder %s19, 0
    %p60 = por %p58, %p59
    %s61 = ssub.s32 %s21, %s28
    %p62 = scmp.eq.s32.totalorder %s61, 0
    %s64 = sadd.s32 %s63, 1
    %s65 = scalar_select %p62, %s63, %s64
    %p68 = pneg %p62
    %p69 = scmp.eq.s32.totalorder %s13, 2
    %p70 = por %p68, %p69
    %p71 = scmp.ne.s32.totalorder %s63, %s66
    %p72 = scmp.eq.s32.totalorder %s13, 0
    %p73 = por %p71, %p72
    %p74 = scmp.ne.s32.totalorder %s63, %s66
    %p75 = scmp.eq.s32.totalorder %s18, 2
    %p76 = por %p74, %p75
    %p77 = scmp.ne.s32.totalorder %s66, %s67
    %p78 = scmp.eq.s32.totalorder %s18, 0
    %p79 = por %p77, %p78
    %p80 = scmp.ne.s32.totalorder %s66, %s67
    %p81 = scmp.eq.s32.totalorder %s19, 2
    %p82 = por %p80, %p81
    %p84 = scmp.ne.s32.totalorder %s67, %s83
    %p85 = scmp.eq.s32.totalorder %s19, 0
    %p86 = por %p84, %p85
    %s87 = ssub.s32 %s21, %s28
    %p88 = scmp.eq.s32.totalorder %s87, 0
    %s90 = sadd.s32 %s89, 1
    %s91 = scalar_select %p88, %s89, %s90
    %p94 = pneg %p88
    %p95 = scmp.eq.s32.totalorder %s13, 2
    %p96 = por %p94, %p95
    %p97 = scmp.ne.s32.totalorder %s89, %s92
    %p98 = scmp.eq.s32.totalorder %s13, 0
    %p99 = por %p97, %p98
    %p100 = scmp.ne.s32.totalorder %s89, %s92
    %p101 = scmp.eq.s32.totalorder %s18, 2
    %p102 = por %p100, %p101
    %p103 = scmp.ne.s32.totalorder %s92, %s93
    %p104 = scmp.eq.s32.totalorder %s18, 0
    %p105 = por %p103, %p104
    %p106 = scmp.ne.s32.totalorder %s92, %s93
    %p107 = scmp.eq.s32.totalorder %s19, 2
    %p108 = por %p106, %p107
    %p110 = scmp.ne.s32.totalorder %s93, %s109
    %p111 = scmp.eq.s32.totalorder %s19, 0
    %p112 = por %p110, %p111
    %s113 = ssub.s32 %s21, %s28
    %p114 = scmp.eq.s32.totalorder %s113, 0
    %s116 = sadd.s32 %s115, 1
    %s117 = scalar_select %p114, %s115, %s116
    %p120 = pneg %p114
    %p121 = scmp.eq.s32.totalorder %s13, 2
    %p122 = por %p120, %p121
    %p123 = scmp.ne.s32.totalorder %s115, %s118
    %p124 = scmp.eq.s32.totalorder %s13, 0
    %p125 = por %p123, %p124
    %p126 = scmp.ne.s32.totalorder %s115, %s118
    %p127 = scmp.eq.s32.totalorder %s18, 2
    %p128 = por %p126, %p127
    %p129 = scmp.ne.s32.totalorder %s118, %s119
    %p130 = scmp.eq.s32.totalorder %s18, 0
    %p131 = por %p129, %p130
    %p132 = scmp.ne.s32.totalorder %s118, %s119
    %p133 = scmp.eq.s32.totalorder %s19, 2
    %p134 = por %p132, %p133
    %p136 = scmp.ne.s32.totalorder %s119, %s135
    %p137 = scmp.eq.s32.totalorder %s19, 0
    %p138 = por %p136, %p137
    %s139 = ssub.s32 %s21, %s28
    %p140 = scmp.eq.s32.totalorder %s139, 0
    %s142 = sadd.s32 %s141, 1
    %s143 = scalar_select %p140, %s141, %s142
    %p146 = pneg %p140
    %p147 = scmp.eq.s32.totalorder %s13, 2
    %p148 = por %p146, %p147
    %p149 = scmp.ne.s32.totalorder %s141, %s144
    %p150 = scmp.eq.s32.totalorder %s13, 0
    %p151 = por %p149, %p150
    %p152 = scmp.ne.s32.totalorder %s141, %s144
    %p153 = scmp.eq.s32.totalorder %s18, 2
    %p154 = por %p152, %p153
    %p155 = scmp.ne.s32.totalorder %s144, %s145
    %p156 = scmp.eq.s32.totalorder %s18, 0
    %p157 = por %p155, %p156
    %p158 = scmp.ne.s32.totalorder %s144, %s145
    %p159 = scmp.eq.s32.totalorder %s19, 2
    %p160 = por %p158, %p159
    %p162 = scmp.ne.s32.totalorder %s145, %s161
    %p163 = scmp.eq.s32.totalorder %s19, 0
    %p164 = por %p162, %p163
    %s165 = ssub.s32 %s20, %s32
    %s166 = ssub.s32 %s21, %s28
    %s167 = sor.u32 %s165, %s166
    %p168 = scmp.eq.s32.totalorder %s167, 0
    %s170 = sadd.s32 %s169, 1
    %s171 = scalar_select %p168, %s169, %s170
    %p174 = pneg %p168
    %p175 = scmp.eq.s32.totalorder %s13, 2
    %p176 = por %p174, %p175
    %p177 = scmp.ne.s32.totalorder %s169, %s172
    %p178 = scmp.eq.s32.totalorder %s13, 0
    %p179 = por %p177, %p178
    %p180 = scmp.ne.s32.totalorder %s169, %s172
    %p181 = scmp.eq.s32.totalorder %s18, 2
    %p182 = por %p180, %p181
    %p183 = scmp.ne.s32.totalorder %s172, %s173
    %p184 = scmp.eq.s32.totalorder %s18, 0
    %p185 = por %p183, %p184
    %p186 = scmp.ne.s32.totalorder %s172, %s173
    %p187 = scmp.eq.s32.totalorder %s19, 2
    %p188 = por %p186, %p187
    %p190 = scmp.ne.s32.totalorder %s173, %s189
    %p191 = scmp.eq.s32.totalorder %s19, 0
    %p192 = por %p190, %p191
    %s193 = ssub.s32 %s20, %s32
    %s194 = ssub.s32 %s21, %s28
    %s195 = sor.u32 %s193, %s194
    %p196 = scmp.eq.s32.totalorder %s195, 0
    %s198 = sadd.s32 %s197, 1
    %s199 = scalar_select %p196, %s197, %s198
    %p202 = pneg %p196
    %p203 = scmp.eq.s32.totalorder %s13, 2
    %p204 = por %p202, %p203
    %p205 = scmp.ne.s32.totalorder %s197, %s200
    %p206 = scmp.eq.s32.totalorder %s13, 0
    %p207 = por %p205, %p206
    %p208 = scmp.ne.s32.totalorder %s197, %s200
    %p209 = scmp.eq.s32.totalorder %s18, 2
    %p210 = por %p208, %p209
    %p211 = scmp.ne.s32.totalorder %s200, %s201
    %p212 = scmp.eq.s32.totalorder %s18, 0
    %p213 = por %p211, %p212
    %p214 = scmp.ne.s32.totalorder %s200, %s201
    %p215 = scmp.eq.s32.totalorder %s19, 2
    %p216 = por %p214, %p215
    %p218 = scmp.ne.s32.totalorder %s201, %s217
    %p219 = scmp.eq.s32.totalorder %s19, 0
    %p220 = por %p218, %p219
    %p221 = scmp.le.s32.totalorder 1, %s13
    %p222 = scmp.lt.s32.totalorder %s13, 4
    %p223 = pnand %p221, %p222
    %p224 = pneg %p223
    // Predicated region
    $region9: #{conv_mixer_forward.7} parent=5 // pred_check
      _
    $region10: #{conv_mixer_forward.7} parent=5 // pred_check_branch
      %226 = sbr.rel (%p223) target = $region12
    $region11: #{conv_mixer_forward.7} parent=5 // pred_region
      %s227 = ssub.s32 %s13, 1
      // Predicated region
      $region13: #{conv_mixer_forward.7} parent=11 // pred_check
        %p228 = pneg %p79
      $region14: #{conv_mixer_forward.7} parent=11 // pred_check_branch
        %230 = sbr.rel (%p228) target = $region16
      $region15: #{conv_mixer_forward.7} parent=11 // pred_region
        %p231 = scmp.lt.s32.totalorder %s23, 0
        %s232 = scalar_select %p231, %s23, 0
        %s233 = scalar_lea.vmem %s1, %s232
      $region16: #{conv_mixer_forward.7} parent=11 // pred_fallthru
        _
      // Predicated region
      $region17: #{conv_mixer_forward.7} parent=11 // pred_check
        %p234 = pneg %p105
      $region18: #{conv_mixer_forward.7} parent=11 // pred_check_branch
        %236 = sbr.rel (%p234) target = $region20
      $region19: #{conv_mixer_forward.7} parent=11 // pred_region
        %p237 = scmp.lt.s32.totalorder %s23, 0
        %s238 = scalar_select %p237, %s23, 0
        %s239 = scalar_lea.vmem %s2, %s238
      $region20: #{conv_mixer_forward.7} parent=11 // pred_fallthru
        _
      // Predicated region
      $region21: #{conv_mixer_forward.7} parent=11 // pred_check
        %p240 = pneg %p131
      $region22: #{conv_mixer_forward.7} parent=11 // pred_check_branch
        %242 = sbr.rel (%p240) target = $region24
      $region23: #{conv_mixer_forward.7} parent=11 // pred_region
        %p243 = scmp.lt.s32.totalorder %s23, 0
        %s244 = scalar_select %p243, %s23, 0
        %s245 = smul.addr %s244, 8
        %s246 = scalar_lea.vmem %s3, %s245
      $region24: #{conv_mixer_forward.7} parent=11 // pred_fallthru
        _
      // Predicated region
      $region25: #{conv_mixer_forward.7} parent=11 // pred_check
        %p247 = pneg %p157
      $region26: #{conv_mixer_forward.7} parent=11 // pred_check_branch
        %249 = sbr.rel (%p247) target = $region28
      $region27: #{conv_mixer_forward.7} parent=11 // pred_region
        %p250 = scmp.lt.s32.totalorder %s23, 0
        %s251 = scalar_select %p250, %s23, 0
        %s252 = scalar_lea.vmem %s4, %s251
      $region28: #{conv_mixer_forward.7} parent=11 // pred_fallthru
        _
    $region12: #{conv_mixer_forward.7} parent=5 // pred_fallthru
      _
    %p253 = scmp.lt.s32.totalorder %s13, 3
    // Predicated region
    $region29: #{conv_mixer_forward.7} parent=5 // pred_check
      %p254 = pneg %p253
    $region30: #{conv_mixer_forward.7} parent=5 // pred_check_branch
      %256 = sbr.rel (%p254) target = $region32
    $region31: #{conv_mixer_forward.7} parent=5 // pred_region
      // Predicated region
      $region33: #{conv_mixer_forward.7} parent=31 // pred_check
        %p257 = pneg %p47
      $region34: #{conv_mixer_forward.7} parent=31 // pred_check_branch
        %259 = sbr.rel (%p257) target = $region36
      $region35: #{conv_mixer_forward.7} parent=31 // pred_region
        %s260 = smul.u32 2, %s20
        %p261 = scmp.lt.s32.totalorder %s260, 5
        %s262 = scalar_select %p261, %s260, 5
        %p263 = scmp.lt.s32.totalorder %s21, 0
        %s264 = scalar_select %p263, %s21, 0
        %s265 = smul.addr %s262, 8
        %s266 = sadd.s32 %s264, %s265
        %s267 = smul.addr %s266, 4
        %s268 = scalar_lea.vmem %s0, %s267
        %s269 = smul.u32 2, %s20
      $region36: #{conv_mixer_forward.7} parent=31 // pred_fallthru
        _
    $region32: #{conv_mixer_forward.7} parent=5 // pred_fallthru
      _
    %p270 = scmp.le.s32.totalorder 1, %s13
    %p271 = scmp.lt.s32.totalorder %s13, 4
    %p272 = pnand %p270, %p271
    %p273 = pneg %p272
    // Predicated region
    $region37: #{conv_mixer_forward.7} parent=5 // pred_check
      _
    $region38: #{conv_mixer_forward.7} parent=5 // pred_check_branch
      %275 = sbr.rel (%p272) target = $region40
    $region39: #{conv_mixer_forward.7} parent=5 // pred_region
      %s276 = ssub.s32 %s13, 1
      %s277 = smul.u32 2, %s22
      %p278 = scmp.lt.s32.totalorder %s277, 5
      %s279 = scalar_select %p278, %s277, 5
      %p280 = scmp.lt.s32.totalorder %s23, 0
      %s281 = scalar_select %p280, %s23, 0
      %s282 = smul.addr %s279, 8
      %s283 = sadd.s32 %s281, %s282
      %s284 = smul.addr %s283, 4
      %s285 = scalar_lea.vmem %s0, %s284
      %p286 = pneg %p53
      %p287 = pneg %p50
      %p288 = scmp.lt.s32.totalorder %s23, 0
      %s289 = scalar_select %p288, %s23, 0
      %s290 = scalar_lea.vmem %s1, %s289
      %p291 = pneg %p79
      %p292 = pneg %p76
      %p293 = scmp.lt.s32.totalorder %s23, 0
      %s294 = scalar_select %p293, %s23, 0
      %s295 = scalar_lea.vmem %s2, %s294
      %p296 = pneg %p105
      %p297 = pneg %p102
      %p298 = scmp.lt.s32.totalorder %s23, 0
      %s299 = scalar_select %p298, %s23, 0
      %s300 = smul.addr %s299, 8
      %s301 = scalar_lea.vmem %s3, %s300
      %p302 = pneg %p131
      %p303 = pneg %p128
      %p304 = scmp.lt.s32.totalorder %s23, 0
      %s305 = scalar_select %p304, %s23, 0
      %s306 = scalar_lea.vmem %s4, %s305
      %p307 = pneg %p157
      %p308 = pneg %p154
      %p309 = pneg %p185
      %p310 = pneg %p182
      %s311 = smul.u32 2, %s22
      %p312 = scmp.lt.s32.totalorder %s311, 5
      %s313 = scalar_select %p312, %s311, 5
      %p314 = scmp.lt.s32.totalorder %s23, 0
      %s315 = scalar_select %p314, %s23, 0
      %s316 = smul.addr %s313, 8
      %s317 = sadd.s32 %s315, %s316
      %s318 = smul.addr %s317, 4
      %s319 = scalar_lea.vmem %s5, %s318
      %p320 = pneg %p213
      %p321 = pneg %p210
      %p322 = scmp.lt.s32.totalorder %s22, 2
      %s323 = scalar_select %p322, %s22, 2
      %p324 = scmp.lt.s32.totalorder %s23, 0
      %s325 = scalar_select %p324, %s23, 0
      %s326 = sadd.s32 %s325, %s323
      %s327 = smul.addr %s326, 8
      %s328 = scalar_lea.vmem %s6, %s327
      %s329 = smul.u32 2, %s22
      %p330 = scmp.lt.s32.totalorder %s329, 5
      %s331 = scalar_select %p330, %s329, 5
      %p332 = scmp.lt.s32.totalorder %s23, 0
      %s333 = scalar_select %p332, %s23, 0
      %s334 = smul.addr %s331, 8
      %s335 = sadd.s32 %s333, %s334
      %s336 = smul.addr %s335, 4
      %s337 = scalar_lea.vmem %s0, %s336
      %s338 = smul.u32 2, %s22
      %p339 = scmp.lt.s32.totalorder %s23, 0
      %s340 = scalar_select %p339, %s23, 0
      %s341 = scalar_lea.vmem %s1, %s340
      %p342 = scmp.lt.s32.totalorder %s23, 0
      %s343 = scalar_select %p342, %s23, 0
      %s344 = scalar_lea.vmem %s2, %s343
      %p345 = scmp.lt.s32.totalorder %s23, 0
      %s346 = scalar_select %p345, %s23, 0
      %s347 = smul.addr %s346, 8
      %s348 = scalar_lea.vmem %s3, %s347
      %p349 = scmp.lt.s32.totalorder %s23, 0
      %s350 = scalar_select %p349, %s23, 0
      %s351 = scalar_lea.vmem %s4, %s350
      %s352 = smul.u32 2, %s22
      %p353 = scmp.lt.s32.totalorder %s352, 5
      %s354 = scalar_select %p353, %s352, 5
      %p355 = scmp.lt.s32.totalorder %s23, 0
      %s356 = scalar_select %p355, %s23, 0
      %s357 = smul.addr %s354, 8
      %s358 = sadd.s32 %s356, %s357
      %s359 = smul.addr %s358, 4
      %s360 = scalar_lea.vmem %s5, %s359
      %s361 = smul.u32 2, %s22
      %p362 = scmp.lt.s32.totalorder %s22, 2
      %s363 = scalar_select %p362, %s22, 2
      %p364 = scmp.lt.s32.totalorder %s23, 0
      %s365 = scalar_select %p364, %s23, 0
      %s366 = sadd.s32 %s365, %s363
      %s367 = smul.addr %s366, 8
      %s368 = scalar_lea.vmem %s6, %s367
      %v369 = vld [vmem:[%s337] sm:$0xf]
      %v370 = vld [vmem:[%s337 + $0x4] sm:$0xf]
      %v371 = vld [vmem:[%s337 + $0x8] sm:$0xf]
      %v372 = vld [vmem:[%s337 + $0xc] sm:$0xf]
      %v373 = vld [vmem:[%s337 + $0x10] sm:$0xf]
      %v374 = vld [vmem:[%s337 + $0x14] sm:$0xf]
      %v375 = vld [vmem:[%s337 + $0x18] sm:$0xf]
      %v376 = vld [vmem:[%s337 + $0x1c] sm:$0xf]
      %v377 = vld [vmem:[%s337 + $0x20] sm:$0xf]
      %v378 = vld [vmem:[%s337 + $0x24] sm:$0xf]
      %v379 = vld [vmem:[%s337 + $0x28] sm:$0xf]
      %v380 = vld [vmem:[%s337 + $0x2c] sm:$0xf]
      %v381 = vld [vmem:[%s337 + $0x30] sm:$0xf]
      %v382 = vld [vmem:[%s337 + $0x34] sm:$0xf]
      %v383 = vld [vmem:[%s337 + $0x38] sm:$0xf]
      %v384 = vld [vmem:[%s337 + $0x3c] sm:$0xf]
      %v385 = vunpack.c.l.bf16 %v369
      %v386 = vunpack.c.l.bf16 %v370
      %v387 = vunpack.c.l.bf16 %v371
      %v388 = vunpack.c.l.bf16 %v372
      %v389 = vunpack.c.l.bf16 %v373
      %v390 = vunpack.c.l.bf16 %v374
      %v391 = vunpack.c.l.bf16 %v375
      %v392 = vunpack.c.l.bf16 %v376
      %v393 = vunpack.c.l.bf16 %v377
      %v394 = vunpack.c.l.bf16 %v378
      %v395 = vunpack.c.l.bf16 %v379
      %v396 = vunpack.c.l.bf16 %v380
      %v397 = vunpack.c.l.bf16 %v381
      %v398 = vunpack.c.l.bf16 %v382
      %v399 = vunpack.c.l.bf16 %v383
      %v400 = vunpack.c.l.bf16 %v384
      %v401 = vld [vmem:[%s341] sm:$0x1]
      %v403 = vperm.slane %v401, 0
      %v405 = vmul.f32 %v385, %v403
      %v406 = vmul.f32 %v386, %v403
      %v407 = vmul.f32 %v387, %v403
      %v408 = vmul.f32 %v388, %v403
      %v409 = vmul.f32 %v389, %v403
      %v410 = vmul.f32 %v390, %v403
      %v411 = vmul.f32 %v391, %v403
      %v412 = vmul.f32 %v392, %v403
      %v413 = vmul.f32 %v393, %v403
      %v414 = vmul.f32 %v394, %v403
      %v415 = vmul.f32 %v395, %v403
      %v416 = vmul.f32 %v396, %v403
      %v417 = vmul.f32 %v397, %v403
      %v418 = vmul.f32 %v398, %v403
      %v419 = vmul.f32 %v399, %v403
      %v420 = vmul.f32 %v400, %v403
      %v421 = vld [vmem:[%s344] sm:$0x1]
      %v423 = vperm.slane %v421, 0
      %v425 = vadd.f32 %v405, %v423
      %v426 = vadd.f32 %v406, %v423
      %v427 = vadd.f32 %v407, %v423
      %v428 = vadd.f32 %v408, %v423
      %v429 = vadd.f32 %v409, %v423
      %v430 = vadd.f32 %v410, %v423
      %v431 = vadd.f32 %v411, %v423
      %v432 = vadd.f32 %v412, %v423
      %v433 = vadd.f32 %v413, %v423
      %v434 = vadd.f32 %v414, %v423
      %v435 = vadd.f32 %v415, %v423
      %v436 = vadd.f32 %v416, %v423
      %v437 = vadd.f32 %v417, %v423
      %v438 = vadd.f32 %v418, %v423
      %v439 = vadd.f32 %v419, %v423
      %v440 = vadd.f32 %v420, %v423
      %441 = vst [vmem:[#allocation2] sm:$0xff] 0.0
      %442 = vst [vmem:[#allocation2 + $0x8] sm:$0xff] 0.0
      %443 = vst [vmem:[#allocation2 + $0x10] sm:$0x3] 0.0
      %444 = vst [vmem:[#allocation2 + $0x18] sm:$0xff] 0.0
      %445 = vst [vmem:[#allocation2 + $0x20] sm:$0xff] 0.0
      %446 = vst [vmem:[#allocation2 + $0x28] sm:$0x3] 0.0
      %447 = vst [vmem:[#allocation2 + $0x120] sm:$0xff] 0.0
      %448 = vst [vmem:[#allocation2 + $0x128] sm:$0xff] 0.0
      %449 = vst [vmem:[#allocation2 + $0x130] sm:$0x3] 0.0
      %450 = vst [vmem:[#allocation2 + $0x138] sm:$0xff] 0.0
      %451 = vst [vmem:[#allocation2 + $0x140] sm:$0xff] 0.0
      %452 = vst [vmem:[#allocation2 + $0x148] sm:$0x3] 0.0
      %s453 = scalar_lea.vmem [#allocation2], 240
      %454 = vst [vmem:[%s453] sm:$0xff] 0.0
      %455 = vst [vmem:[%s453 + $0x8] sm:$0xff] 0.0
      %456 = vst [vmem:[%s453 + $0x10] sm:$0x3] 0.0
      %457 = vst [vmem:[%s453 + $0x18] sm:$0xff] 0.0
      %458 = vst [vmem:[%s453 + $0x20] sm:$0xff] 0.0
      %459 = vst [vmem:[%s453 + $0x28] sm:$0x3] 0.0
      %460 = vst [vmem:[%s453 + $0x120] sm:$0xff] 0.0
      %461 = vst [vmem:[%s453 + $0x128] sm:$0xff] 0.0
      %462 = vst [vmem:[%s453 + $0x130] sm:$0x3] 0.0
      %463 = vst [vmem:[%s453 + $0x138] sm:$0xff] 0.0
      %464 = vst [vmem:[%s453 + $0x140] sm:$0xff] 0.0
      %465 = vst [vmem:[%s453 + $0x148] sm:$0x3] 0.0
      %s466 = scalar_lea.vmem [#allocation2], 48
      %467 = vst [vmem:[%s466 + $0x6] sm:$0x3] 0.0
      %468 = vst [vmem:[%s466 + $0x1e] sm:$0x3] 0.0
      %469 = vst [vmem:[%s466 + $0x36] sm:$0x3] 0.0
      %470 = vst [vmem:[%s466 + $0x4e] sm:$0x3] 0.0
      %471 = vst [vmem:[%s466 + $0x66] sm:$0x3] 0.0
      %472 = vst [vmem:[%s466 + $0x7e] sm:$0x3] 0.0
      %473 = vst [vmem:[%s466 + $0x96] sm:$0x3] 0.0
      %474 = vst [vmem:[%s466 + $0xae] sm:$0x3] 0.0
      %475 = vst [vmem:[%s466 + $0x126] sm:$0x3] 0.0
      %476 = vst [vmem:[%s466 + $0x13e] sm:$0x3] 0.0
      %477 = vst [vmem:[%s466 + $0x156] sm:$0x3] 0.0
      %478 = vst [vmem:[%s466 + $0x16e] sm:$0x3] 0.0
      %479 = vst [vmem:[%s466 + $0x186] sm:$0x3] 0.0
      %480 = vst [vmem:[%s466 + $0x19e] sm:$0x3] 0.0
      %481 = vst [vmem:[%s466 + $0x1b6] sm:$0x3] 0.0
      %482 = vst [vmem:[%s466 + $0x1ce] sm:$0x3] 0.0
      %483 = vst [vmem:[%s466 + $0x10] sm:$0x3] 0.0
      %484 = vst [vmem:[%s466 + $0x28] sm:$0x3] 0.0
      %485 = vst [vmem:[%s466 + $0x40] sm:$0x3] 0.0
      %486 = vst [vmem:[%s466 + $0x58] sm:$0x3] 0.0
      %487 = vst [vmem:[%s466 + $0x70] sm:$0x3] 0.0
      %488 = vst [vmem:[%s466 + $0x88] sm:$0x3] 0.0
      %489 = vst [vmem:[%s466 + $0xa0] sm:$0x3] 0.0
      %490 = vst [vmem:[%s466 + $0xb8] sm:$0x3] 0.0
      %491 = vst [vmem:[%s466 + $0x130] sm:$0x3] 0.0
      %492 = vst [vmem:[%s466 + $0x148] sm:$0x3] 0.0
      %493 = vst [vmem:[%s466 + $0x160] sm:$0x3] 0.0
      %494 = vst [vmem:[%s466 + $0x178] sm:$0x3] 0.0
      %495 = vst [vmem:[%s466 + $0x190] sm:$0x3] 0.0
      %496 = vst [vmem:[%s466 + $0x1a8] sm:$0x3] 0.0
      %497 = vst [vmem:[%s466 + $0x1c0] sm:$0x3] 0.0
      %498 = vst [vmem:[%s466 + $0x1d8] sm:$0x3] 0.0
      %499 = vst [vmem:[%s466 + $0x8] sm:$0xff] %v425
      %500 = vst [vmem:[%s466 + $0x20] sm:$0xff] %v426
      %501 = vst [vmem:[%s466 + $0x38] sm:$0xff] %v427
      %502 = vst [vmem:[%s466 + $0x50] sm:$0xff] %v428
      %503 = vst [vmem:[%s466 + $0x68] sm:$0xff] %v429
      %504 = vst [vmem:[%s466 + $0x80] sm:$0xff] %v430
      %505 = vst [vmem:[%s466 + $0x98] sm:$0xff] %v431
      %506 = vst [vmem:[%s466 + $0xb0] sm:$0xff] %v432
      %507 = vst [vmem:[%s466 + $0x128] sm:$0xff] %v433
      %508 = vst [vmem:[%s466 + $0x140] sm:$0xff] %v434
      %509 = vst [vmem:[%s466 + $0x158] sm:$0xff] %v435
      %510 = vst [vmem:[%s466 + $0x170] sm:$0xff] %v436
      %511 = vst [vmem:[%s466 + $0x188] sm:$0xff] %v437
      %512 = vst [vmem:[%s466 + $0x1a0] sm:$0xff] %v438
      %513 = vst [vmem:[%s466 + $0x1b8] sm:$0xff] %v439
      %514 = vst [vmem:[%s466 + $0x1d0] sm:$0xff] %v440
      %v515 = vld [vmem:[%s351] sm:$0x1]
      %v516 = vld [vmem:[#allocation2 + $0x6] sm:$0xff]
      %v517 = vld [vmem:[#allocation2 + $0x1e] sm:$0xff]
      %v518 = vld [vmem:[#allocation2 + $0x36] sm:$0xff]
      %v519 = vld [vmem:[#allocation2 + $0x4e] sm:$0xff]
      %v520 = vld [vmem:[#allocation2 + $0x66] sm:$0xff]
      %v521 = vld [vmem:[#allocation2 + $0x7e] sm:$0xff]
      %v522 = vld [vmem:[#allocation2 + $0x96] sm:$0xff]
      %v523 = vld [vmem:[#allocation2 + $0xae] sm:$0xff]
      %v524 = vld [vmem:[#allocation2 + $0x126] sm:$0xff]
      %v525 = vld [vmem:[#allocation2 + $0x13e] sm:$0xff]
      %v526 = vld [vmem:[#allocation2 + $0x156] sm:$0xff]
      %v527 = vld [vmem:[#allocation2 + $0x16e] sm:$0xff]
      %v528 = vld [vmem:[#allocation2 + $0x186] sm:$0xff]
      %v529 = vld [vmem:[#allocation2 + $0x19e] sm:$0xff]
      %v530 = vld [vmem:[#allocation2 + $0x1b6] sm:$0xff]
      %v531 = vld [vmem:[#allocation2 + $0x1ce] sm:$0xff]
      %v532 = vld [vmem:[%s348] sm:$0x1]
      %v533 = vperm.slane %v532, 0
      %v534 = vmul.f32 %v516, %v533
      %v535 = vmul.f32 %v517, %v533
      %v536 = vmul.f32 %v518, %v533
      %v537 = vmul.f32 %v519, %v533
      %v538 = vmul.f32 %v520, %v533
      %v539 = vmul.f32 %v521, %v533
      %v540 = vmul.f32 %v522, %v533
      %v541 = vmul.f32 %v523, %v533
      %v542 = vmul.f32 %v524, %v533
      %v543 = vmul.f32 %v525, %v533
      %v544 = vmul.f32 %v526, %v533
      %v545 = vmul.f32 %v527, %v533
      %v546 = vmul.f32 %v528, %v533
      %v547 = vmul.f32 %v529, %v533
      %v548 = vmul.f32 %v530, %v533
      %v549 = vmul.f32 %v531, %v533
      %v550 = vadd.f32 %v534, 0.0
      %v551 = vadd.f32 %v535, 0.0
      %v552 = vadd.f32 %v536, 0.0
      %v553 = vadd.f32 %v537, 0.0
      %v554 = vadd.f32 %v538, 0.0
      %v555 = vadd.f32 %v539, 0.0
      %v556 = vadd.f32 %v540, 0.0
      %v557 = vadd.f32 %v541, 0.0
      %v558 = vadd.f32 %v542, 0.0
      %v559 = vadd.f32 %v543, 0.0
      %v560 = vadd.f32 %v544, 0.0
      %v561 = vadd.f32 %v545, 0.0
      %v562 = vadd.f32 %v546, 0.0
      %v563 = vadd.f32 %v547, 0.0
      %v564 = vadd.f32 %v548, 0.0
      %v565 = vadd.f32 %v549, 0.0
      %v566 = vld [vmem:[#allocation2 + $0x7] sm:$0xff]
      %v567 = vld [vmem:[#allocation2 + $0x1f] sm:$0xff]
      %v568 = vld [vmem:[#allocation2 + $0x37] sm:$0xff]
      %v569 = vld [vmem:[#allocation2 + $0x4f] sm:$0xff]
      %v570 = vld [vmem:[#allocation2 + $0x67] sm:$0xff]
      %v571 = vld [vmem:[#allocation2 + $0x7f] sm:$0xff]
      %v572 = vld [vmem:[#allocation2 + $0x97] sm:$0xff]
      %v573 = vld [vmem:[#allocation2 + $0xaf] sm:$0xff]
      %v574 = vld [vmem:[#allocation2 + $0x127] sm:$0xff]
      %v575 = vld [vmem:[#allocation2 + $0x13f] sm:$0xff]
      %v576 = vld [vmem:[#allocation2 + $0x157] sm:$0xff]
      %v577 = vld [vmem:[#allocation2 + $0x16f] sm:$0xff]
      %v578 = vld [vmem:[#allocation2 + $0x187] sm:$0xff]
      %v579 = vld [vmem:[#allocation2 + $0x19f] sm:$0xff]
      %v580 = vld [vmem:[#allocation2 + $0x1b7] sm:$0xff]
      %v581 = vld [vmem:[#allocation2 + $0x1cf] sm:$0xff]
      %v582 = vld [vmem:[%s348 + $0x1] sm:$0x1]
      %v583 = vperm.slane %v582, 0
      %v584 = vmul.f32 %v566, %v583
      %v585 = vmul.f32 %v567, %v583
      %v586 = vmul.f32 %v568, %v583
      %v587 = vmul.f32 %v569, %v583
      %v588 = vmul.f32 %v570, %v583
      %v589 = vmul.f32 %v571, %v583
      %v590 = vmul.f32 %v572, %v583
      %v591 = vmul.f32 %v573, %v583
      %v592 = vmul.f32 %v574, %v583
      %v593 = vmul.f32 %v575, %v583
      %v594 = vmul.f32 %v576, %v583
      %v595 = vmul.f32 %v577, %v583
      %v596 = vmul.f32 %v578, %v583
      %v597 = vmul.f32 %v579, %v583
      %v598 = vmul.f32 %v580, %v583
      %v599 = vmul.f32 %v581, %v583
      %v600 = vadd.f32 %v550, %v584
      %v601 = vadd.f32 %v551, %v585
      %v602 = vadd.f32 %v552, %v586
      %v603 = vadd.f32 %v553, %v587
      %v604 = vadd.f32 %v554, %v588
      %v605 = vadd.f32 %v555, %v589
      %v606 = vadd.f32 %v556, %v590
      %v607 = vadd.f32 %v557, %v591
      %v608 = vadd.f32 %v558, %v592
      %v609 = vadd.f32 %v559, %v593
      %v610 = vadd.f32 %v560, %v594
      %v611 = vadd.f32 %v561, %v595
      %v612 = vadd.f32 %v562, %v596
      %v613 = vadd.f32 %v563, %v597
      %v614 = vadd.f32 %v564, %v598
      %v615 = vadd.f32 %v565, %v599
      %v616 = vld [vmem:[#allocation2 + $0x8] sm:$0xff]
      %v617 = vld [vmem:[#allocation2 + $0x20] sm:$0xff]
      %v618 = vld [vmem:[#allocation2 + $0x38] sm:$0xff]
      %v619 = vld [vmem:[#allocation2 + $0x50] sm:$0xff]
      %v620 = vld [vmem:[#allocation2 + $0x68] sm:$0xff]
      %v621 = vld [vmem:[#allocation2 + $0x80] sm:$0xff]
      %v622 = vld [vmem:[#allocation2 + $0x98] sm:$0xff]
      %v623 = vld [vmem:[#allocation2 + $0xb0] sm:$0xff]
      %v624 = vld [vmem:[#allocation2 + $0x128] sm:$0xff]
      %v625 = vld [vmem:[#allocation2 + $0x140] sm:$0xff]
      %v626 = vld [vmem:[#allocation2 + $0x158] sm:$0xff]
      %v627 = vld [vmem:[#allocation2 + $0x170] sm:$0xff]
      %v628 = vld [vmem:[#allocation2 + $0x188] sm:$0xff]
      %v629 = vld [vmem:[#allocation2 + $0x1a0] sm:$0xff]
      %v630 = vld [vmem:[#allocation2 + $0x1b8] sm:$0xff]
      %v631 = vld [vmem:[#allocation2 + $0x1d0] sm:$0xff]
      %v632 = vld [vmem:[%s348 + $0x2] sm:$0x1]
      %v633 = vperm.slane %v632, 0
      %v634 = vmul.f32 %v616, %v633
      %v635 = vmul.f32 %v617, %v633
      %v636 = vmul.f32 %v618, %v633
      %v637 = vmul.f32 %v619, %v633
      %v638 = vmul.f32 %v620, %v633
      %v639 = vmul.f32 %v621, %v633
      %v640 = vmul.f32 %v622, %v633
      %v641 = vmul.f32 %v623, %v633
      %v642 = vmul.f32 %v624, %v633
      %v643 = vmul.f32 %v625, %v633
      %v644 = vmul.f32 %v626, %v633
      %v645 = vmul.f32 %v627, %v633
      %v646 = vmul.f32 %v628, %v633
      %v647 = vmul.f32 %v629, %v633
      %v648 = vmul.f32 %v630, %v633
      %v649 = vmul.f32 %v631, %v633
      %v650 = vadd.f32 %v600, %v634
      %v651 = vadd.f32 %v601, %v635
      %v652 = vadd.f32 %v602, %v636
      %v653 = vadd.f32 %v603, %v637
      %v654 = vadd.f32 %v604, %v638
      %v655 = vadd.f32 %v605, %v639
      %v656 = vadd.f32 %v606, %v640
      %v657 = vadd.f32 %v607, %v641
      %v658 = vadd.f32 %v608, %v642
      %v659 = vadd.f32 %v609, %v643
      %v660 = vadd.f32 %v610, %v644
      %v661 = vadd.f32 %v611, %v645
      %v662 = vadd.f32 %v612, %v646
      %v663 = vadd.f32 %v613, %v647
      %v664 = vadd.f32 %v614, %v648
      %v665 = vadd.f32 %v615, %v649
      %v666 = vld [vmem:[#allocation2 + $0x9] sm:$0xff]
      %v667 = vld [vmem:[#allocation2 + $0x21] sm:$0xff]
      %v668 = vld [vmem:[#allocation2 + $0x39] sm:$0xff]
      %v669 = vld [vmem:[#allocation2 + $0x51] sm:$0xff]
      %v670 = vld [vmem:[#allocation2 + $0x69] sm:$0xff]
      %v671 = vld [vmem:[#allocation2 + $0x81] sm:$0xff]
      %v672 = vld [vmem:[#allocation2 + $0x99] sm:$0xff]
      %v673 = vld [vmem:[#allocation2 + $0xb1] sm:$0xff]
      %v674 = vld [vmem:[#allocation2 + $0x129] sm:$0xff]
      %v675 = vld [vmem:[#allocation2 + $0x141] sm:$0xff]
      %v676 = vld [vmem:[#allocation2 + $0x159] sm:$0xff]
      %v677 = vld [vmem:[#allocation2 + $0x171] sm:$0xff]
      %v678 = vld [vmem:[#allocation2 + $0x189] sm:$0xff]
      %v679 = vld [vmem:[#allocation2 + $0x1a1] sm:$0xff]
      %v680 = vld [vmem:[#allocation2 + $0x1b9] sm:$0xff]
      %v681 = vld [vmem:[#allocation2 + $0x1d1] sm:$0xff]
      %v682 = vld [vmem:[%s348 + $0x3] sm:$0x1]
      %v683 = vperm.slane %v682, 0
      %v684 = vmul.f32 %v666, %v683
      %v685 = vmul.f32 %v667, %v683
      %v686 = vmul.f32 %v668, %v683
      %v687 = vmul.f32 %v669, %v683
      %v688 = vmul.f32 %v670, %v683
      %v689 = vmul.f32 %v671, %v683
      %v690 = vmul.f32 %v672, %v683
      %v691 = vmul.f32 %v673, %v683
      %v692 = vmul.f32 %v674, %v683
      %v693 = vmul.f32 %v675, %v683
      %v694 = vmul.f32 %v676, %v683
      %v695 = vmul.f32 %v677, %v683
      %v696 = vmul.f32 %v678, %v683
      %v697 = vmul.f32 %v679, %v683
      %v698 = vmul.f32 %v680, %v683
      %v699 = vmul.f32 %v681, %v683
      %v700 = vadd.f32 %v650, %v684
      %v701 = vadd.f32 %v651, %v685
      %v702 = vadd.f32 %v652, %v686
      %v703 = vadd.f32 %v653, %v687
      %v704 = vadd.f32 %v654, %v688
      %v705 = vadd.f32 %v655, %v689
      %v706 = vadd.f32 %v656, %v690
      %v707 = vadd.f32 %v657, %v691
      %v708 = vadd.f32 %v658, %v692
      %v709 = vadd.f32 %v659, %v693
      %v710 = vadd.f32 %v660, %v694
      %v711 = vadd.f32 %v661, %v695
      %v712 = vadd.f32 %v662, %v696
      %v713 = vadd.f32 %v663, %v697
      %v714 = vadd.f32 %v664, %v698
      %v715 = vadd.f32 %v665, %v699
      %v716 = vld [vmem:[#allocation2 + $0xa] sm:$0xff]
      %v717 = vld [vmem:[#allocation2 + $0x22] sm:$0xff]
      %v718 = vld [vmem:[#allocation2 + $0x3a] sm:$0xff]
      %v719 = vld [vmem:[#allocation2 + $0x52] sm:$0xff]
      %v720 = vld [vmem:[#allocation2 + $0x6a] sm:$0xff]
      %v721 = vld [vmem:[#allocation2 + $0x82] sm:$0xff]
      %v722 = vld [vmem:[#allocation2 + $0x9a] sm:$0xff]
      %v723 = vld [vmem:[#allocation2 + $0xb2] sm:$0xff]
      %v724 = vld [vmem:[#allocation2 + $0x12a] sm:$0xff]
      %v725 = vld [vmem:[#allocation2 + $0x142] sm:$0xff]
      %v726 = vld [vmem:[#allocation2 + $0x15a] sm:$0xff]
      %v727 = vld [vmem:[#allocation2 + $0x172] sm:$0xff]
      %v728 = vld [vmem:[#allocation2 + $0x18a] sm:$0xff]
      %v729 = vld [vmem:[#allocation2 + $0x1a2] sm:$0xff]
      %v730 = vld [vmem:[#allocation2 + $0x1ba] sm:$0xff]
      %v731 = vld [vmem:[#allocation2 + $0x1d2] sm:$0xff]
      %v732 = vld [vmem:[%s348 + $0x4] sm:$0x1]
      %v733 = vperm.slane %v732, 0
      %v734 = vmul.f32 %v716, %v733
      %v735 = vmul.f32 %v717, %v733
      %v736 = vmul.f32 %v718, %v733
      %v737 = vmul.f32 %v719, %v733
      %v738 = vmul.f32 %v720, %v733
      %v739 = vmul.f32 %v721, %v733
      %v740 = vmul.f32 %v722, %v733
      %v741 = vmul.f32 %v723, %v733
      %v742 = vmul.f32 %v724, %v733
      %v743 = vmul.f32 %v725, %v733
      %v744 = vmul.f32 %v726, %v733
      %v745 = vmul.f32 %v727, %v733
      %v746 = vmul.f32 %v728, %v733
      %v747 = vmul.f32 %v729, %v733
      %v748 = vmul.f32 %v730, %v733
      %v749 = vmul.f32 %v731, %v733
      %v750 = vadd.f32 %v700, %v734
      %v751 = vadd.f32 %v701, %v735
      %v752 = vadd.f32 %v702, %v736
      %v753 = vadd.f32 %v703, %v737
      %v754 = vadd.f32 %v704, %v738
      %v755 = vadd.f32 %v705, %v739
      %v756 = vadd.f32 %v706, %v740
      %v757 = vadd.f32 %v707, %v741
      %v758 = vadd.f32 %v708, %v742
      %v759 = vadd.f32 %v709, %v743
      %v760 = vadd.f32 %v710, %v744
      %v761 = vadd.f32 %v711, %v745
      %v762 = vadd.f32 %v712, %v746
      %v763 = vadd.f32 %v713, %v747
      %v764 = vadd.f32 %v714, %v748
      %v765 = vadd.f32 %v715, %v749
      %s766 = scalar_lea.vmem [#allocation2], 24
      %v767 = vld [vmem:[%s766 + $0x6] sm:$0xff]
      %v768 = vld [vmem:[%s766 + $0x1e] sm:$0xff]
      %v769 = vld [vmem:[%s766 + $0x36] sm:$0xff]
      %v770 = vld [vmem:[%s766 + $0x4e] sm:$0xff]
      %v771 = vld [vmem:[%s766 + $0x66] sm:$0xff]
      %v772 = vld [vmem:[%s766 + $0x7e] sm:$0xff]
      %v773 = vld [vmem:[%s766 + $0x96] sm:$0xff]
      %v774 = vld [vmem:[%s766 + $0xae] sm:$0xff]
      %v775 = vld [vmem:[%s766 + $0x126] sm:$0xff]
      %v776 = vld [vmem:[%s766 + $0x13e] sm:$0xff]
      %v777 = vld [vmem:[%s766 + $0x156] sm:$0xff]
      %v778 = vld [vmem:[%s766 + $0x16e] sm:$0xff]
      %v779 = vld [vmem:[%s766 + $0x186] sm:$0xff]
      %v780 = vld [vmem:[%s766 + $0x19e] sm:$0xff]
      %v781 = vld [vmem:[%s766 + $0x1b6] sm:$0xff]
      %v782 = vld [vmem:[%s766 + $0x1ce] sm:$0xff]
      %v783 = vld [vmem:[%s348 + $0x5] sm:$0x1]
      %v784 = vperm.slane %v783, 0
      %v785 = vmul.f32 %v767, %v784
      %v786 = vmul.f32 %v768, %v784
      %v787 = vmul.f32 %v769, %v784
      %v788 = vmul.f32 %v770, %v784
      %v789 = vmul.f32 %v771, %v784
      %v790 = vmul.f32 %v772, %v784
      %v791 = vmul.f32 %v773, %v784
      %v792 = vmul.f32 %v774, %v784
      %v793 = vmul.f32 %v775, %v784
      %v794 = vmul.f32 %v776, %v784
      %v795 = vmul.f32 %v777, %v784
      %v796 = vmul.f32 %v778, %v784
      %v797 = vmul.f32 %v779, %v784
      %v798 = vmul.f32 %v780, %v784
      %v799 = vmul.f32 %v781, %v784
      %v800 = vmul.f32 %v782, %v784
      %v801 = vadd.f32 %v750, %v785
      %v802 = vadd.f32 %v751, %v786
      %v803 = vadd.f32 %v752, %v787
      %v804 = vadd.f32 %v753, %v788
      %v805 = vadd.f32 %v754, %v789
      %v806 = vadd.f32 %v755, %v790
      %v807 = vadd.f32 %v756, %v791
      %v808 = vadd.f32 %v757, %v792
      %v809 = vadd.f32 %v758, %v793
      %v810 = vadd.f32 %v759, %v794
      %v811 = vadd.f32 %v760, %v795
      %v812 = vadd.f32 %v761, %v796
      %v813 = vadd.f32 %v762, %v797
      %v814 = vadd.f32 %v763, %v798
      %v815 = vadd.f32 %v764, %v799
      %v816 = vadd.f32 %v765, %v800
      %v817 = vld [vmem:[%s766 + $0x7] sm:$0xff]
      %v818 = vld [vmem:[%s766 + $0x1f] sm:$0xff]
      %v819 = vld [vmem:[%s766 + $0x37] sm:$0xff]
      %v820 = vld [vmem:[%s766 + $0x4f] sm:$0xff]
      %v821 = vld [vmem:[%s766 + $0x67] sm:$0xff]
      %v822 = vld [vmem:[%s766 + $0x7f] sm:$0xff]
      %v823 = vld [vmem:[%s766 + $0x97] sm:$0xff]
      %v824 = vld [vmem:[%s766 + $0xaf] sm:$0xff]
      %v825 = vld [vmem:[%s766 + $0x127] sm:$0xff]
      %v826 = vld [vmem:[%s766 + $0x13f] sm:$0xff]
      %v827 = vld [vmem:[%s766 + $0x157] sm:$0xff]
      %v828 = vld [vmem:[%s766 + $0x16f] sm:$0xff]
      %v829 = vld [vmem:[%s766 + $0x187] sm:$0xff]
      %v830 = vld [vmem:[%s766 + $0x19f] sm:$0xff]
      %v831 = vld [vmem:[%s766 + $0x1b7] sm:$0xff]
      %v832 = vld [vmem:[%s766 + $0x1cf] sm:$0xff]
      %v833 = vld [vmem:[%s348 + $0x6] sm:$0x1]
      %v834 = vperm.slane %v833, 0
      %v835 = vmul.f32 %v817, %v834
      %v836 = vmul.f32 %v818, %v834
      %v837 = vmul.f32 %v819, %v834
      %v838 = vmul.f32 %v820, %v834
      %v839 = vmul.f32 %v821, %v834
      %v840 = vmul.f32 %v822, %v834
      %v841 = vmul.f32 %v823, %v834
      %v842 = vmul.f32 %v824, %v834
      %v843 = vmul.f32 %v825, %v834
      %v844 = vmul.f32 %v826, %v834
      %v845 = vmul.f32 %v827, %v834
      %v846 = vmul.f32 %v828, %v834
      %v847 = vmul.f32 %v829, %v834
      %v848 = vmul.f32 %v830, %v834
      %v849 = vmul.f32 %v831, %v834
      %v850 = vmul.f32 %v832, %v834
      %v851 = vadd.f32 %v801, %v835
      %v852 = vadd.f32 %v802, %v836
      %v853 = vadd.f32 %v803, %v837
      %v854 = vadd.f32 %v804, %v838
      %v855 = vadd.f32 %v805, %v839
      %v856 = vadd.f32 %v806, %v840
      %v857 = vadd.f32 %v807, %v841
      %v858 = vadd.f32 %v808, %v842
      %v859 = vadd.f32 %v809, %v843
      %v860 = vadd.f32 %v810, %v844
      %v861 = vadd.f32 %v811, %v845
      %v862 = vadd.f32 %v812, %v846
      %v863 = vadd.f32 %v813, %v847
      %v864 = vadd.f32 %v814, %v848
      %v865 = vadd.f32 %v815, %v849
      %v866 = vadd.f32 %v816, %v850
      %v867 = vld [vmem:[%s766 + $0x8] sm:$0xff]
      %v868 = vld [vmem:[%s766 + $0x20] sm:$0xff]
      %v869 = vld [vmem:[%s766 + $0x38] sm:$0xff]
      %v870 = vld [vmem:[%s766 + $0x50] sm:$0xff]
      %v871 = vld [vmem:[%s766 + $0x68] sm:$0xff]
      %v872 = vld [vmem:[%s766 + $0x80] sm:$0xff]
      %v873 = vld [vmem:[%s766 + $0x98] sm:$0xff]
      %v874 = vld [vmem:[%s766 + $0xb0] sm:$0xff]
      %v875 = vld [vmem:[%s766 + $0x128] sm:$0xff]
      %v876 = vld [vmem:[%s766 + $0x140] sm:$0xff]
      %v877 = vld [vmem:[%s766 + $0x158] sm:$0xff]
      %v878 = vld [vmem:[%s766 + $0x170] sm:$0xff]
      %v879 = vld [vmem:[%s766 + $0x188] sm:$0xff]
      %v880 = vld [vmem:[%s766 + $0x1a0] sm:$0xff]
      %v881 = vld [vmem:[%s766 + $0x1b8] sm:$0xff]
      %v882 = vld [vmem:[%s766 + $0x1d0] sm:$0xff]
      %v883 = vld [vmem:[%s348 + $0x7] sm:$0x1]
      %v884 = vperm.slane %v883, 0
      %v885 = vmul.f32 %v867, %v884
      %v886 = vmul.f32 %v868, %v884
      %v887 = vmul.f32 %v869, %v884
      %v888 = vmul.f32 %v870, %v884
      %v889 = vmul.f32 %v871, %v884
      %v890 = vmul.f32 %v872, %v884
      %v891 = vmul.f32 %v873, %v884
      %v892 = vmul.f32 %v874, %v884
      %v893 = vmul.f32 %v875, %v884
      %v894 = vmul.f32 %v876, %v884
      %v895 = vmul.f32 %v877, %v884
      %v896 = vmul.f32 %v878, %v884
      %v897 = vmul.f32 %v879, %v884
      %v898 = vmul.f32 %v880, %v884
      %v899 = vmul.f32 %v881, %v884
      %v900 = vmul.f32 %v882, %v884
      %v901 = vadd.f32 %v851, %v885
      %v902 = vadd.f32 %v852, %v886
      %v903 = vadd.f32 %v853, %v887
      %v904 = vadd.f32 %v854, %v888
      %v905 = vadd.f32 %v855, %v889
      %v906 = vadd.f32 %v856, %v890
      %v907 = vadd.f32 %v857, %v891
      %v908 = vadd.f32 %v858, %v892
      %v909 = vadd.f32 %v859, %v893
      %v910 = vadd.f32 %v860, %v894
      %v911 = vadd.f32 %v861, %v895
      %v912 = vadd.f32 %v862, %v896
      %v913 = vadd.f32 %v863, %v897
      %v914 = vadd.f32 %v864, %v898
      %v915 = vadd.f32 %v865, %v899
      %v916 = vadd.f32 %v866, %v900
      %v917 = vld [vmem:[%s766 + $0x9] sm:$0xff]
      %v918 = vld [vmem:[%s766 + $0x21] sm:$0xff]
      %v919 = vld [vmem:[%s766 + $0x39] sm:$0xff]
      %v920 = vld [vmem:[%s766 + $0x51] sm:$0xff]
      %v921 = vld [vmem:[%s766 + $0x69] sm:$0xff]
      %v922 = vld [vmem:[%s766 + $0x81] sm:$0xff]
      %v923 = vld [vmem:[%s766 + $0x99] sm:$0xff]
      %v924 = vld [vmem:[%s766 + $0xb1] sm:$0xff]
      %v925 = vld [vmem:[%s766 + $0x129] sm:$0xff]
      %v926 = vld [vmem:[%s766 + $0x141] sm:$0xff]
      %v927 = vld [vmem:[%s766 + $0x159] sm:$0xff]
      %v928 = vld [vmem:[%s766 + $0x171] sm:$0xff]
      %v929 = vld [vmem:[%s766 + $0x189] sm:$0xff]
      %v930 = vld [vmem:[%s766 + $0x1a1] sm:$0xff]
      %v931 = vld [vmem:[%s766 + $0x1b9] sm:$0xff]
      %v932 = vld [vmem:[%s766 + $0x1d1] sm:$0xff]
      %v933 = vld [vmem:[%s348 + $0x8] sm:$0x1]
      %v934 = vperm.slane %v933, 0
      %v935 = vmul.f32 %v917, %v934
      %v936 = vmul.f32 %v918, %v934
      %v937 = vmul.f32 %v919, %v934
      %v938 = vmul.f32 %v920, %v934
      %v939 = vmul.f32 %v921, %v934
      %v940 = vmul.f32 %v922, %v934
      %v941 = vmul.f32 %v923, %v934
      %v942 = vmul.f32 %v924, %v934
      %v943 = vmul.f32 %v925, %v934
      %v944 = vmul.f32 %v926, %v934
      %v945 = vmul.f32 %v927, %v934
      %v946 = vmul.f32 %v928, %v934
      %v947 = vmul.f32 %v929, %v934
      %v948 = vmul.f32 %v930, %v934
      %v949 = vmul.f32 %v931, %v934
      %v950 = vmul.f32 %v932, %v934
      %v951 = vadd.f32 %v901, %v935
      %v952 = vadd.f32 %v902, %v936
      %v953 = vadd.f32 %v903, %v937
      %v954 = vadd.f32 %v904, %v938
      %v955 = vadd.f32 %v905, %v939
      %v956 = vadd.f32 %v906, %v940
      %v957 = vadd.f32 %v907, %v941
      %v958 = vadd.f32 %v908, %v942
      %v959 = vadd.f32 %v909, %v943
      %v960 = vadd.f32 %v910, %v944
      %v961 = vadd.f32 %v911, %v945
      %v962 = vadd.f32 %v912, %v946
      %v963 = vadd.f32 %v913, %v947
      %v964 = vadd.f32 %v914, %v948
      %v965 = vadd.f32 %v915, %v949
      %v966 = vadd.f32 %v916, %v950
      %v967 = vld [vmem:[%s766 + $0xa] sm:$0xff]
      %v968 = vld [vmem:[%s766 + $0x22] sm:$0xff]
      %v969 = vld [vmem:[%s766 + $0x3a] sm:$0xff]
      %v970 = vld [vmem:[%s766 + $0x52] sm:$0xff]
      %v971 = vld [vmem:[%s766 + $0x6a] sm:$0xff]
      %v972 = vld [vmem:[%s766 + $0x82] sm:$0xff]
      %v973 = vld [vmem:[%s766 + $0x9a] sm:$0xff]
      %v974 = vld [vmem:[%s766 + $0xb2] sm:$0xff]
      %v975 = vld [vmem:[%s766 + $0x12a] sm:$0xff]
      %v976 = vld [vmem:[%s766 + $0x142] sm:$0xff]
      %v977 = vld [vmem:[%s766 + $0x15a] sm:$0xff]
      %v978 = vld [vmem:[%s766 + $0x172] sm:$0xff]
      %v979 = vld [vmem:[%s766 + $0x18a] sm:$0xff]
      %v980 = vld [vmem:[%s766 + $0x1a2] sm:$0xff]
      %v981 = vld [vmem:[%s766 + $0x1ba] sm:$0xff]
      %v982 = vld [vmem:[%s766 + $0x1d2] sm:$0xff]
      %v983 = vld [vmem:[%s348 + $0x9] sm:$0x1]
      %v984 = vperm.slane %v983, 0
      %v985 = vmul.f32 %v967, %v984
      %v986 = vmul.f32 %v968, %v984
      %v987 = vmul.f32 %v969, %v984
      %v988 = vmul.f32 %v970, %v984
      %v989 = vmul.f32 %v971, %v984
      %v990 = vmul.f32 %v972, %v984
      %v991 = vmul.f32 %v973, %v984
      %v992 = vmul.f32 %v974, %v984
      %v993 = vmul.f32 %v975, %v984
      %v994 = vmul.f32 %v976, %v984
      %v995 = vmul.f32 %v977, %v984
      %v996 = vmul.f32 %v978, %v984
      %v997 = vmul.f32 %v979, %v984
      %v998 = vmul.f32 %v980, %v984
      %v999 = vmul.f32 %v981, %v984
      %v1000 = vmul.f32 %v982, %v984
      %v1001 = vadd.f32 %v951, %v985
      %v1002 = vadd.f32 %v952, %v986
      %v1003 = vadd.f32 %v953, %v987
      %v1004 = vadd.f32 %v954, %v988
      %v1005 = vadd.f32 %v955, %v989
      %v1006 = vadd.f32 %v956, %v990
      %v1007 = vadd.f32 %v957, %v991
      %v1008 = vadd.f32 %v958, %v992
      %v1009 = vadd.f32 %v959, %v993
      %v1010 = vadd.f32 %v960, %v994
      %v1011 = vadd.f32 %v961, %v995
      %v1012 = vadd.f32 %v962, %v996
      %v1013 = vadd.f32 %v963, %v997
      %v1014 = vadd.f32 %v964, %v998
      %v1015 = vadd.f32 %v965, %v999
      %v1016 = vadd.f32 %v966, %v1000
      %v1017 = vld [vmem:[%s466 + $0x6] sm:$0xff]
      %v1018 = vld [vmem:[%s466 + $0x1e] sm:$0xff]
      %v1019 = vld [vmem:[%s466 + $0x36] sm:$0xff]
      %v1020 = vld [vmem:[%s466 + $0x4e] sm:$0xff]
      %v1021 = vld [vmem:[%s466 + $0x66] sm:$0xff]
      %v1022 = vld [vmem:[%s466 + $0x7e] sm:$0xff]
      %v1023 = vld [vmem:[%s466 + $0x96] sm:$0xff]
      %v1024 = vld [vmem:[%s466 + $0xae] sm:$0xff]
      %v1025 = vld [vmem:[%s466 + $0x126] sm:$0xff]
      %v1026 = vld [vmem:[%s466 + $0x13e] sm:$0xff]
      %v1027 = vld [vmem:[%s466 + $0x156] sm:$0xff]
      %v1028 = vld [vmem:[%s466 + $0x16e] sm:$0xff]
      %v1029 = vld [vmem:[%s466 + $0x186] sm:$0xff]
      %v1030 = vld [vmem:[%s466 + $0x19e] sm:$0xff]
      %v1031 = vld [vmem:[%s466 + $0x1b6] sm:$0xff]
      %v1032 = vld [vmem:[%s466 + $0x1ce] sm:$0xff]
      %v1033 = vld [vmem:[%s348 + $0xa] sm:$0x1]
      %v1034 = vperm.slane %v1033, 0
      %v1035 = vmul.f32 %v1017, %v1034
      %v1036 = vmul.f32 %v1018, %v1034
      %v1037 = vmul.f32 %v1019, %v1034
      %v1038 = vmul.f32 %v1020, %v1034
      %v1039 = vmul.f32 %v1021, %v1034
      %v1040 = vmul.f32 %v1022, %v1034
      %v1041 = vmul.f32 %v1023, %v1034
      %v1042 = vmul.f32 %v1024, %v1034
      %v1043 = vmul.f32 %v1025, %v1034
      %v1044 = vmul.f32 %v1026, %v1034
      %v1045 = vmul.f32 %v1027, %v1034
      %v1046 = vmul.f32 %v1028, %v1034
      %v1047 = vmul.f32 %v1029, %v1034
      %v1048 = vmul.f32 %v1030, %v1034
      %v1049 = vmul.f32 %v1031, %v1034
      %v1050 = vmul.f32 %v1032, %v1034
      %v1051 = vadd.f32 %v1001, %v1035
      %v1052 = vadd.f32 %v1002, %v1036
      %v1053 = vadd.f32 %v1003, %v1037
      %v1054 = vadd.f32 %v1004, %v1038
      %v1055 = vadd.f32 %v1005, %v1039
      %v1056 = vadd.f32 %v1006, %v1040
      %v1057 = vadd.f32 %v1007, %v1041
      %v1058 = vadd.f32 %v1008, %v1042
      %v1059 = vadd.f32 %v1009, %v1043
      %v1060 = vadd.f32 %v1010, %v1044
      %v1061 = vadd.f32 %v1011, %v1045
      %v1062 = vadd.f32 %v1012, %v1046
      %v1063 = vadd.f32 %v1013, %v1047
      %v1064 = vadd.f32 %v1014, %v1048
      %v1065 = vadd.f32 %v1015, %v1049
      %v1066 = vadd.f32 %v1016, %v1050
      %v1067 = vld [vmem:[%s466 + $0x7] sm:$0xff]
      %v1068 = vld [vmem:[%s466 + $0x1f] sm:$0xff]
      %v1069 = vld [vmem:[%s466 + $0x37] sm:$0xff]
      %v1070 = vld [vmem:[%s466 + $0x4f] sm:$0xff]
      %v1071 = vld [vmem:[%s466 + $0x67] sm:$0xff]
      %v1072 = vld [vmem:[%s466 + $0x7f] sm:$0xff]
      %v1073 = vld [vmem:[%s466 + $0x97] sm:$0xff]
      %v1074 = vld [vmem:[%s466 + $0xaf] sm:$0xff]
      %v1075 = vld [vmem:[%s466 + $0x127] sm:$0xff]
      %v1076 = vld [vmem:[%s466 + $0x13f] sm:$0xff]
      %v1077 = vld [vmem:[%s466 + $0x157] sm:$0xff]
      %v1078 = vld [vmem:[%s466 + $0x16f] sm:$0xff]
      %v1079 = vld [vmem:[%s466 + $0x187] sm:$0xff]
      %v1080 = vld [vmem:[%s466 + $0x19f] sm:$0xff]
      %v1081 = vld [vmem:[%s466 + $0x1b7] sm:$0xff]
      %v1082 = vld [vmem:[%s466 + $0x1cf] sm:$0xff]
      %v1083 = vld [vmem:[%s348 + $0xb] sm:$0x1]
      %v1084 = vperm.slane %v1083, 0
      %v1085 = vmul.f32 %v1067, %v1084
      %v1086 = vmul.f32 %v1068, %v1084
      %v1087 = vmul.f32 %v1069, %v1084
      %v1088 = vmul.f32 %v1070, %v1084
      %v1089 = vmul.f32 %v1071, %v1084
      %v1090 = vmul.f32 %v1072, %v1084
      %v1091 = vmul.f32 %v1073, %v1084
      %v1092 = vmul.f32 %v1074, %v1084
      %v1093 = vmul.f32 %v1075, %v1084
      %v1094 = vmul.f32 %v1076, %v1084
      %v1095 = vmul.f32 %v1077, %v1084
      %v1096 = vmul.f32 %v1078, %v1084
      %v1097 = vmul.f32 %v1079, %v1084
      %v1098 = vmul.f32 %v1080, %v1084
      %v1099 = vmul.f32 %v1081, %v1084
      %v1100 = vmul.f32 %v1082, %v1084
      %v1101 = vadd.f32 %v1051, %v1085
      %v1102 = vadd.f32 %v1052, %v1086
      %v1103 = vadd.f32 %v1053, %v1087
      %v1104 = vadd.f32 %v1054, %v1088
      %v1105 = vadd.f32 %v1055, %v1089
      %v1106 = vadd.f32 %v1056, %v1090
      %v1107 = vadd.f32 %v1057, %v1091
      %v1108 = vadd.f32 %v1058, %v1092
      %v1109 = vadd.f32 %v1059, %v1093
      %v1110 = vadd.f32 %v1060, %v1094
      %v1111 = vadd.f32 %v1061, %v1095
      %v1112 = vadd.f32 %v1062, %v1096
      %v1113 = vadd.f32 %v1063, %v1097
      %v1114 = vadd.f32 %v1064, %v1098
      %v1115 = vadd.f32 %v1065, %v1099
      %v1116 = vadd.f32 %v1066, %v1100
      %v1117 = vld [vmem:[%s466 + $0x8] sm:$0xff]
      %v1118 = vld [vmem:[%s466 + $0x20] sm:$0xff]
      %v1119 = vld [vmem:[%s466 + $0x38] sm:$0xff]
      %v1120 = vld [vmem:[%s466 + $0x50] sm:$0xff]
      %v1121 = vld [vmem:[%s466 + $0x68] sm:$0xff]
      %v1122 = vld [vmem:[%s466 + $0x80] sm:$0xff]
      %v1123 = vld [vmem:[%s466 + $0x98] sm:$0xff]
      %v1124 = vld [vmem:[%s466 + $0xb0] sm:$0xff]
      %v1125 = vld [vmem:[%s466 + $0x128] sm:$0xff]
      %v1126 = vld [vmem:[%s466 + $0x140] sm:$0xff]
      %v1127 = vld [vmem:[%s466 + $0x158] sm:$0xff]
      %v1128 = vld [vmem:[%s466 + $0x170] sm:$0xff]
      %v1129 = vld [vmem:[%s466 + $0x188] sm:$0xff]
      %v1130 = vld [vmem:[%s466 + $0x1a0] sm:$0xff]
      %v1131 = vld [vmem:[%s466 + $0x1b8] sm:$0xff]
      %v1132 = vld [vmem:[%s466 + $0x1d0] sm:$0xff]
      %v1133 = vld [vmem:[%s348 + $0xc] sm:$0x1]
      %v1134 = vperm.slane %v1133, 0
      %v1135 = vmul.f32 %v1117, %v1134
      %v1136 = vmul.f32 %v1118, %v1134
      %v1137 = vmul.f32 %v1119, %v1134
      %v1138 = vmul.f32 %v1120, %v1134
      %v1139 = vmul.f32 %v1121, %v1134
      %v1140 = vmul.f32 %v1122, %v1134
      %v1141 = vmul.f32 %v1123, %v1134
      %v1142 = vmul.f32 %v1124, %v1134
      %v1143 = vmul.f32 %v1125, %v1134
      %v1144 = vmul.f32 %v1126, %v1134
      %v1145 = vmul.f32 %v1127, %v1134
      %v1146 = vmul.f32 %v1128, %v1134
      %v1147 = vmul.f32 %v1129, %v1134
      %v1148 = vmul.f32 %v1130, %v1134
      %v1149 = vmul.f32 %v1131, %v1134
      %v1150 = vmul.f32 %v1132, %v1134
      %v1151 = vadd.f32 %v1101, %v1135
      %v1152 = vadd.f32 %v1102, %v1136
      %v1153 = vadd.f32 %v1103, %v1137
      %v1154 = vadd.f32 %v1104, %v1138
      %v1155 = vadd.f32 %v1105, %v1139
      %v1156 = vadd.f32 %v1106, %v1140
      %v1157 = vadd.f32 %v1107, %v1141
      %v1158 = vadd.f32 %v1108, %v1142
      %v1159 = vadd.f32 %v1109, %v1143
      %v1160 = vadd.f32 %v1110, %v1144
      %v1161 = vadd.f32 %v1111, %v1145
      %v1162 = vadd.f32 %v1112, %v1146
      %v1163 = vadd.f32 %v1113, %v1147
      %v1164 = vadd.f32 %v1114, %v1148
      %v1165 = vadd.f32 %v1115, %v1149
      %v1166 = vadd.f32 %v1116, %v1150
      %v1167 = vld [vmem:[%s466 + $0x9] sm:$0xff]
      %v1168 = vld [vmem:[%s466 + $0x21] sm:$0xff]
      %v1169 = vld [vmem:[%s466 + $0x39] sm:$0xff]
      %v1170 = vld [vmem:[%s466 + $0x51] sm:$0xff]
      %v1171 = vld [vmem:[%s466 + $0x69] sm:$0xff]
      %v1172 = vld [vmem:[%s466 + $0x81] sm:$0xff]
      %v1173 = vld [vmem:[%s466 + $0x99] sm:$0xff]
      %v1174 = vld [vmem:[%s466 + $0xb1] sm:$0xff]
      %v1175 = vld [vmem:[%s466 + $0x129] sm:$0xff]
      %v1176 = vld [vmem:[%s466 + $0x141] sm:$0xff]
      %v1177 = vld [vmem:[%s466 + $0x159] sm:$0xff]
      %v1178 = vld [vmem:[%s466 + $0x171] sm:$0xff]
      %v1179 = vld [vmem:[%s466 + $0x189] sm:$0xff]
      %v1180 = vld [vmem:[%s466 + $0x1a1] sm:$0xff]
      %v1181 = vld [vmem:[%s466 + $0x1b9] sm:$0xff]
      %v1182 = vld [vmem:[%s466 + $0x1d1] sm:$0xff]
      %v1183 = vld [vmem:[%s348 + $0xd] sm:$0x1]
      %v1184 = vperm.slane %v1183, 0
      %v1185 = vmul.f32 %v1167, %v1184
      %v1186 = vmul.f32 %v1168, %v1184
      %v1187 = vmul.f32 %v1169, %v1184
      %v1188 = vmul.f32 %v1170, %v1184
      %v1189 = vmul.f32 %v1171, %v1184
      %v1190 = vmul.f32 %v1172, %v1184
      %v1191 = vmul.f32 %v1173, %v1184
      %v1192 = vmul.f32 %v1174, %v1184
      %v1193 = vmul.f32 %v1175, %v1184
      %v1194 = vmul.f32 %v1176, %v1184
      %v1195 = vmul.f32 %v1177, %v1184
      %v1196 = vmul.f32 %v1178, %v1184
      %v1197 = vmul.f32 %v1179, %v1184
      %v1198 = vmul.f32 %v1180, %v1184
      %v1199 = vmul.f32 %v1181, %v1184
      %v1200 = vmul.f32 %v1182, %v1184
      %v1201 = vadd.f32 %v1151, %v1185
      %v1202 = vadd.f32 %v1152, %v1186
      %v1203 = vadd.f32 %v1153, %v1187
      %v1204 = vadd.f32 %v1154, %v1188
      %v1205 = vadd.f32 %v1155, %v1189
      %v1206 = vadd.f32 %v1156, %v1190
      %v1207 = vadd.f32 %v1157, %v1191
      %v1208 = vadd.f32 %v1158, %v1192
      %v1209 = vadd.f32 %v1159, %v1193
      %v1210 = vadd.f32 %v1160, %v1194
      %v1211 = vadd.f32 %v1161, %v1195
      %v1212 = vadd.f32 %v1162, %v1196
      %v1213 = vadd.f32 %v1163, %v1197
      %v1214 = vadd.f32 %v1164, %v1198
      %v1215 = vadd.f32 %v1165, %v1199
      %v1216 = vadd.f32 %v1166, %v1200
      %v1217 = vld [vmem:[%s466 + $0xa] sm:$0xff]
      %v1218 = vld [vmem:[%s466 + $0x22] sm:$0xff]
      %v1219 = vld [vmem:[%s466 + $0x3a] sm:$0xff]
      %v1220 = vld [vmem:[%s466 + $0x52] sm:$0xff]
      %v1221 = vld [vmem:[%s466 + $0x6a] sm:$0xff]
      %v1222 = vld [vmem:[%s466 + $0x82] sm:$0xff]
      %v1223 = vld [vmem:[%s466 + $0x9a] sm:$0xff]
      %v1224 = vld [vmem:[%s466 + $0xb2] sm:$0xff]
      %v1225 = vld [vmem:[%s466 + $0x12a] sm:$0xff]
      %v1226 = vld [vmem:[%s466 + $0x142] sm:$0xff]
      %v1227 = vld [vmem:[%s466 + $0x15a] sm:$0xff]
      %v1228 = vld [vmem:[%s466 + $0x172] sm:$0xff]
      %v1229 = vld [vmem:[%s466 + $0x18a] sm:$0xff]
      %v1230 = vld [vmem:[%s466 + $0x1a2] sm:$0xff]
      %v1231 = vld [vmem:[%s466 + $0x1ba] sm:$0xff]
      %v1232 = vld [vmem:[%s466 + $0x1d2] sm:$0xff]
      %v1233 = vld [vmem:[%s348 + $0xe] sm:$0x1]
      %v1234 = vperm.slane %v1233, 0
      %v1235 = vmul.f32 %v1217, %v1234
      %v1236 = vmul.f32 %v1218, %v1234
      %v1237 = vmul.f32 %v1219, %v1234
      %v1238 = vmul.f32 %v1220, %v1234
      %v1239 = vmul.f32 %v1221, %v1234
      %v1240 = vmul.f32 %v1222, %v1234
      %v1241 = vmul.f32 %v1223, %v1234
      %v1242 = vmul.f32 %v1224, %v1234
      %v1243 = vmul.f32 %v1225, %v1234
      %v1244 = vmul.f32 %v1226, %v1234
      %v1245 = vmul.f32 %v1227, %v1234
      %v1246 = vmul.f32 %v1228, %v1234
      %v1247 = vmul.f32 %v1229, %v1234
      %v1248 = vmul.f32 %v1230, %v1234
      %v1249 = vmul.f32 %v1231, %v1234
      %v1250 = vmul.f32 %v1232, %v1234
      %v1251 = vadd.f32 %v1201, %v1235
      %v1252 = vadd.f32 %v1202, %v1236
      %v1253 = vadd.f32 %v1203, %v1237
      %v1254 = vadd.f32 %v1204, %v1238
      %v1255 = vadd.f32 %v1205, %v1239
      %v1256 = vadd.f32 %v1206, %v1240
      %v1257 = vadd.f32 %v1207, %v1241
      %v1258 = vadd.f32 %v1208, %v1242
      %v1259 = vadd.f32 %v1209, %v1243
      %v1260 = vadd.f32 %v1210, %v1244
      %v1261 = vadd.f32 %v1211, %v1245
      %v1262 = vadd.f32 %v1212, %v1246
      %v1263 = vadd.f32 %v1213, %v1247
      %v1264 = vadd.f32 %v1214, %v1248
      %v1265 = vadd.f32 %v1215, %v1249
      %v1266 = vadd.f32 %v1216, %v1250
      %s1267 = scalar_lea.vmem [#allocation2], 72
      %v1268 = vld [vmem:[%s1267 + $0x6] sm:$0xff]
      %v1269 = vld [vmem:[%s1267 + $0x1e] sm:$0xff]
      %v1270 = vld [vmem:[%s1267 + $0x36] sm:$0xff]
      %v1271 = vld [vmem:[%s1267 + $0x4e] sm:$0xff]
      %v1272 = vld [vmem:[%s1267 + $0x66] sm:$0xff]
      %v1273 = vld [vmem:[%s1267 + $0x7e] sm:$0xff]
      %v1274 = vld [vmem:[%s1267 + $0x96] sm:$0xff]
      %v1275 = vld [vmem:[%s1267 + $0xae] sm:$0xff]
      %v1276 = vld [vmem:[%s1267 + $0x126] sm:$0xff]
      %v1277 = vld [vmem:[%s1267 + $0x13e] sm:$0xff]
      %v1278 = vld [vmem:[%s1267 + $0x156] sm:$0xff]
      %v1279 = vld [vmem:[%s1267 + $0x16e] sm:$0xff]
      %v1280 = vld [vmem:[%s1267 + $0x186] sm:$0xff]
      %v1281 = vld [vmem:[%s1267 + $0x19e] sm:$0xff]
      %v1282 = vld [vmem:[%s1267 + $0x1b6] sm:$0xff]
      %v1283 = vld [vmem:[%s1267 + $0x1ce] sm:$0xff]
      %v1284 = vld [vmem:[%s348 + $0xf] sm:$0x1]
      %v1285 = vperm.slane %v1284, 0
      %v1286 = vmul.f32 %v1268, %v1285
      %v1287 = vmul.f32 %v1269, %v1285
      %v1288 = vmul.f32 %v1270, %v1285
      %v1289 = vmul.f32 %v1271, %v1285
      %v1290 = vmul.f32 %v1272, %v1285
      %v1291 = vmul.f32 %v1273, %v1285
      %v1292 = vmul.f32 %v1274, %v1285
      %v1293 = vmul.f32 %v1275, %v1285
      %v1294 = vmul.f32 %v1276, %v1285
      %v1295 = vmul.f32 %v1277, %v1285
      %v1296 = vmul.f32 %v1278, %v1285
      %v1297 = vmul.f32 %v1279, %v1285
      %v1298 = vmul.f32 %v1280, %v1285
      %v1299 = vmul.f32 %v1281, %v1285
      %v1300 = vmul.f32 %v1282, %v1285
      %v1301 = vmul.f32 %v1283, %v1285
      %v1302 = vadd.f32 %v1251, %v1286
      %v1303 = vadd.f32 %v1252, %v1287
      %v1304 = vadd.f32 %v1253, %v1288
      %v1305 = vadd.f32 %v1254, %v1289
      %v1306 = vadd.f32 %v1255, %v1290
      %v1307 = vadd.f32 %v1256, %v1291
      %v1308 = vadd.f32 %v1257, %v1292
      %v1309 = vadd.f32 %v1258, %v1293
      %v1310 = vadd.f32 %v1259, %v1294
      %v1311 = vadd.f32 %v1260, %v1295
      %v1312 = vadd.f32 %v1261, %v1296
      %v1313 = vadd.f32 %v1262, %v1297
      %v1314 = vadd.f32 %v1263, %v1298
      %v1315 = vadd.f32 %v1264, %v1299
      %v1316 = vadd.f32 %v1265, %v1300
      %v1317 = vadd.f32 %v1266, %v1301
      %v1318 = vld [vmem:[%s1267 + $0x7] sm:$0xff]
      %v1319 = vld [vmem:[%s1267 + $0x1f] sm:$0xff]
      %v1320 = vld [vmem:[%s1267 + $0x37] sm:$0xff]
      %v1321 = vld [vmem:[%s1267 + $0x4f] sm:$0xff]
      %v1322 = vld [vmem:[%s1267 + $0x67] sm:$0xff]
      %v1323 = vld [vmem:[%s1267 + $0x7f] sm:$0xff]
      %v1324 = vld [vmem:[%s1267 + $0x97] sm:$0xff]
      %v1325 = vld [vmem:[%s1267 + $0xaf] sm:$0xff]
      %v1326 = vld [vmem:[%s1267 + $0x127] sm:$0xff]
      %v1327 = vld [vmem:[%s1267 + $0x13f] sm:$0xff]
      %v1328 = vld [vmem:[%s1267 + $0x157] sm:$0xff]
      %v1329 = vld [vmem:[%s1267 + $0x16f] sm:$0xff]
      %v1330 = vld [vmem:[%s1267 + $0x187] sm:$0xff]
      %v1331 = vld [vmem:[%s1267 + $0x19f] sm:$0xff]
      %v1332 = vld [vmem:[%s1267 + $0x1b7] sm:$0xff]
      %v1333 = vld [vmem:[%s1267 + $0x1cf] sm:$0xff]
      %v1334 = vld [vmem:[%s348 + $0x10] sm:$0x1]
      %v1335 = vperm.slane %v1334, 0
      %v1336 = vmul.f32 %v1318, %v1335
      %v1337 = vmul.f32 %v1319, %v1335
      %v1338 = vmul.f32 %v1320, %v1335
      %v1339 = vmul.f32 %v1321, %v1335
      %v1340 = vmul.f32 %v1322, %v1335
      %v1341 = vmul.f32 %v1323, %v1335
      %v1342 = vmul.f32 %v1324, %v1335
      %v1343 = vmul.f32 %v1325, %v1335
      %v1344 = vmul.f32 %v1326, %v1335
      %v1345 = vmul.f32 %v1327, %v1335
      %v1346 = vmul.f32 %v1328, %v1335
      %v1347 = vmul.f32 %v1329, %v1335
      %v1348 = vmul.f32 %v1330, %v1335
      %v1349 = vmul.f32 %v1331, %v1335
      %v1350 = vmul.f32 %v1332, %v1335
      %v1351 = vmul.f32 %v1333, %v1335
      %v1352 = vadd.f32 %v1302, %v1336
      %v1353 = vadd.f32 %v1303, %v1337
      %v1354 = vadd.f32 %v1304, %v1338
      %v1355 = vadd.f32 %v1305, %v1339
      %v1356 = vadd.f32 %v1306, %v1340
      %v1357 = vadd.f32 %v1307, %v1341
      %v1358 = vadd.f32 %v1308, %v1342
      %v1359 = vadd.f32 %v1309, %v1343
      %v1360 = vadd.f32 %v1310, %v1344
      %v1361 = vadd.f32 %v1311, %v1345
      %v1362 = vadd.f32 %v1312, %v1346
      %v1363 = vadd.f32 %v1313, %v1347
      %v1364 = vadd.f32 %v1314, %v1348
      %v1365 = vadd.f32 %v1315, %v1349
      %v1366 = vadd.f32 %v1316, %v1350
      %v1367 = vadd.f32 %v1317, %v1351
      %v1368 = vld [vmem:[%s1267 + $0x8] sm:$0xff]
      %v1369 = vld [vmem:[%s1267 + $0x20] sm:$0xff]
      %v1370 = vld [vmem:[%s1267 + $0x38] sm:$0xff]
      %v1371 = vld [vmem:[%s1267 + $0x50] sm:$0xff]
      %v1372 = vld [vmem:[%s1267 + $0x68] sm:$0xff]
      %v1373 = vld [vmem:[%s1267 + $0x80] sm:$0xff]
      %v1374 = vld [vmem:[%s1267 + $0x98] sm:$0xff]
      %v1375 = vld [vmem:[%s1267 + $0xb0] sm:$0xff]
      %v1376 = vld [vmem:[%s1267 + $0x128] sm:$0xff]
      %v1377 = vld [vmem:[%s1267 + $0x140] sm:$0xff]
      %v1378 = vld [vmem:[%s1267 + $0x158] sm:$0xff]
      %v1379 = vld [vmem:[%s1267 + $0x170] sm:$0xff]
      %v1380 = vld [vmem:[%s1267 + $0x188] sm:$0xff]
      %v1381 = vld [vmem:[%s1267 + $0x1a0] sm:$0xff]
      %v1382 = vld [vmem:[%s1267 + $0x1b8] sm:$0xff]
      %v1383 = vld [vmem:[%s1267 + $0x1d0] sm:$0xff]
      %v1384 = vld [vmem:[%s348 + $0x11] sm:$0x1]
      %v1385 = vperm.slane %v1384, 0
      %v1386 = vmul.f32 %v1368, %v1385
      %v1387 = vmul.f32 %v1369, %v1385
      %v1388 = vmul.f32 %v1370, %v1385
      %v1389 = vmul.f32 %v1371, %v1385
      %v1390 = vmul.f32 %v1372, %v1385
      %v1391 = vmul.f32 %v1373, %v1385
      %v1392 = vmul.f32 %v1374, %v1385
      %v1393 = vmul.f32 %v1375, %v1385
      %v1394 = vmul.f32 %v1376, %v1385
      %v1395 = vmul.f32 %v1377, %v1385
      %v1396 = vmul.f32 %v1378, %v1385
      %v1397 = vmul.f32 %v1379, %v1385
      %v1398 = vmul.f32 %v1380, %v1385
      %v1399 = vmul.f32 %v1381, %v1385
      %v1400 = vmul.f32 %v1382, %v1385
      %v1401 = vmul.f32 %v1383, %v1385
      %v1402 = vadd.f32 %v1352, %v1386
      %v1403 = vadd.f32 %v1353, %v1387
      %v1404 = vadd.f32 %v1354, %v1388
      %v1405 = vadd.f32 %v1355, %v1389
      %v1406 = vadd.f32 %v1356, %v1390
      %v1407 = vadd.f32 %v1357, %v1391
      %v1408 = vadd.f32 %v1358, %v1392
      %v1409 = vadd.f32 %v1359, %v1393
      %v1410 = vadd.f32 %v1360, %v1394
      %v1411 = vadd.f32 %v1361, %v1395
      %v1412 = vadd.f32 %v1362, %v1396
      %v1413 = vadd.f32 %v1363, %v1397
      %v1414 = vadd.f32 %v1364, %v1398
      %v1415 = vadd.f32 %v1365, %v1399
      %v1416 = vadd.f32 %v1366, %v1400
      %v1417 = vadd.f32 %v1367, %v1401
      %v1418 = vld [vmem:[%s1267 + $0x9] sm:$0xff]
      %v1419 = vld [vmem:[%s1267 + $0x21] sm:$0xff]
      %v1420 = vld [vmem:[%s1267 + $0x39] sm:$0xff]
      %v1421 = vld [vmem:[%s1267 + $0x51] sm:$0xff]
      %v1422 = vld [vmem:[%s1267 + $0x69] sm:$0xff]
      %v1423 = vld [vmem:[%s1267 + $0x81] sm:$0xff]
      %v1424 = vld [vmem:[%s1267 + $0x99] sm:$0xff]
      %v1425 = vld [vmem:[%s1267 + $0xb1] sm:$0xff]
      %v1426 = vld [vmem:[%s1267 + $0x129] sm:$0xff]
      %v1427 = vld [vmem:[%s1267 + $0x141] sm:$0xff]
      %v1428 = vld [vmem:[%s1267 + $0x159] sm:$0xff]
      %v1429 = vld [vmem:[%s1267 + $0x171] sm:$0xff]
      %v1430 = vld [vmem:[%s1267 + $0x189] sm:$0xff]
      %v1431 = vld [vmem:[%s1267 + $0x1a1] sm:$0xff]
      %v1432 = vld [vmem:[%s1267 + $0x1b9] sm:$0xff]
      %v1433 = vld [vmem:[%s1267 + $0x1d1] sm:$0xff]
      %v1434 = vld [vmem:[%s348 + $0x12] sm:$0x1]
      %v1435 = vperm.slane %v1434, 0
      %v1436 = vmul.f32 %v1418, %v1435
      %v1437 = vmul.f32 %v1419, %v1435
      %v1438 = vmul.f32 %v1420, %v1435
      %v1439 = vmul.f32 %v1421, %v1435
      %v1440 = vmul.f32 %v1422, %v1435
      %v1441 = vmul.f32 %v1423, %v1435
      %v1442 = vmul.f32 %v1424, %v1435
      %v1443 = vmul.f32 %v1425, %v1435
      %v1444 = vmul.f32 %v1426, %v1435
      %v1445 = vmul.f32 %v1427, %v1435
      %v1446 = vmul.f32 %v1428, %v1435
      %v1447 = vmul.f32 %v1429, %v1435
      %v1448 = vmul.f32 %v1430, %v1435
      %v1449 = vmul.f32 %v1431, %v1435
      %v1450 = vmul.f32 %v1432, %v1435
      %v1451 = vmul.f32 %v1433, %v1435
      %v1452 = vadd.f32 %v1402, %v1436
      %v1453 = vadd.f32 %v1403, %v1437
      %v1454 = vadd.f32 %v1404, %v1438
      %v1455 = vadd.f32 %v1405, %v1439
      %v1456 = vadd.f32 %v1406, %v1440
      %v1457 = vadd.f32 %v1407, %v1441
      %v1458 = vadd.f32 %v1408, %v1442
      %v1459 = vadd.f32 %v1409, %v1443
      %v1460 = vadd.f32 %v1410, %v1444
      %v1461 = vadd.f32 %v1411, %v1445
      %v1462 = vadd.f32 %v1412, %v1446
      %v1463 = vadd.f32 %v1413, %v1447
      %v1464 = vadd.f32 %v1414, %v1448
      %v1465 = vadd.f32 %v1415, %v1449
      %v1466 = vadd.f32 %v1416, %v1450
      %v1467 = vadd.f32 %v1417, %v1451
      %v1468 = vld [vmem:[%s1267 + $0xa] sm:$0xff]
      %v1469 = vld [vmem:[%s1267 + $0x22] sm:$0xff]
      %v1470 = vld [vmem:[%s1267 + $0x3a] sm:$0xff]
      %v1471 = vld [vmem:[%s1267 + $0x52] sm:$0xff]
      %v1472 = vld [vmem:[%s1267 + $0x6a] sm:$0xff]
      %v1473 = vld [vmem:[%s1267 + $0x82] sm:$0xff]
      %v1474 = vld [vmem:[%s1267 + $0x9a] sm:$0xff]
      %v1475 = vld [vmem:[%s1267 + $0xb2] sm:$0xff]
      %v1476 = vld [vmem:[%s1267 + $0x12a] sm:$0xff]
      %v1477 = vld [vmem:[%s1267 + $0x142] sm:$0xff]
      %v1478 = vld [vmem:[%s1267 + $0x15a] sm:$0xff]
      %v1479 = vld [vmem:[%s1267 + $0x172] sm:$0xff]
      %v1480 = vld [vmem:[%s1267 + $0x18a] sm:$0xff]
      %v1481 = vld [vmem:[%s1267 + $0x1a2] sm:$0xff]
      %v1482 = vld [vmem:[%s1267 + $0x1ba] sm:$0xff]
      %v1483 = vld [vmem:[%s1267 + $0x1d2] sm:$0xff]
      %v1484 = vld [vmem:[%s348 + $0x13] sm:$0x1]
      %v1485 = vperm.slane %v1484, 0
      %v1486 = vmul.f32 %v1468, %v1485
      %v1487 = vmul.f32 %v1469, %v1485
      %v1488 = vmul.f32 %v1470, %v1485
      %v1489 = vmul.f32 %v1471, %v1485
      %v1490 = vmul.f32 %v1472, %v1485
      %v1491 = vmul.f32 %v1473, %v1485
      %v1492 = vmul.f32 %v1474, %v1485
      %v1493 = vmul.f32 %v1475, %v1485
      %v1494 = vmul.f32 %v1476, %v1485
      %v1495 = vmul.f32 %v1477, %v1485
      %v1496 = vmul.f32 %v1478, %v1485
      %v1497 = vmul.f32 %v1479, %v1485
      %v1498 = vmul.f32 %v1480, %v1485
      %v1499 = vmul.f32 %v1481, %v1485
      %v1500 = vmul.f32 %v1482, %v1485
      %v1501 = vmul.f32 %v1483, %v1485
      %v1502 = vadd.f32 %v1452, %v1486
      %v1503 = vadd.f32 %v1453, %v1487
      %v1504 = vadd.f32 %v1454, %v1488
      %v1505 = vadd.f32 %v1455, %v1489
      %v1506 = vadd.f32 %v1456, %v1490
      %v1507 = vadd.f32 %v1457, %v1491
      %v1508 = vadd.f32 %v1458, %v1492
      %v1509 = vadd.f32 %v1459, %v1493
      %v1510 = vadd.f32 %v1460, %v1494
      %v1511 = vadd.f32 %v1461, %v1495
      %v1512 = vadd.f32 %v1462, %v1496
      %v1513 = vadd.f32 %v1463, %v1497
      %v1514 = vadd.f32 %v1464, %v1498
      %v1515 = vadd.f32 %v1465, %v1499
      %v1516 = vadd.f32 %v1466, %v1500
      %v1517 = vadd.f32 %v1467, %v1501
      %s1518 = scalar_lea.vmem [#allocation2], 96
      %v1519 = vld [vmem:[%s1518 + $0x6] sm:$0xff]
      %v1520 = vld [vmem:[%s1518 + $0x1e] sm:$0xff]
      %v1521 = vld [vmem:[%s1518 + $0x36] sm:$0xff]
      %v1522 = vld [vmem:[%s1518 + $0x4e] sm:$0xff]
      %v1523 = vld [vmem:[%s1518 + $0x66] sm:$0xff]
      %v1524 = vld [vmem:[%s1518 + $0x7e] sm:$0xff]
      %v1525 = vld [vmem:[%s1518 + $0x96] sm:$0xff]
      %v1526 = vld [vmem:[%s1518 + $0xae] sm:$0xff]
      %v1527 = vld [vmem:[%s1518 + $0x126] sm:$0xff]
      %v1528 = vld [vmem:[%s1518 + $0x13e] sm:$0xff]
      %v1529 = vld [vmem:[%s1518 + $0x156] sm:$0xff]
      %v1530 = vld [vmem:[%s1518 + $0x16e] sm:$0xff]
      %v1531 = vld [vmem:[%s1518 + $0x186] sm:$0xff]
      %v1532 = vld [vmem:[%s1518 + $0x19e] sm:$0xff]
      %v1533 = vld [vmem:[%s1518 + $0x1b6] sm:$0xff]
      %v1534 = vld [vmem:[%s1518 + $0x1ce] sm:$0xff]
      %v1535 = vld [vmem:[%s348 + $0x14] sm:$0x1]
      %v1536 = vperm.slane %v1535, 0
      %v1537 = vmul.f32 %v1519, %v1536
      %v1538 = vmul.f32 %v1520, %v1536
      %v1539 = vmul.f32 %v1521, %v1536
      %v1540 = vmul.f32 %v1522, %v1536
      %v1541 = vmul.f32 %v1523, %v1536
      %v1542 = vmul.f32 %v1524, %v1536
      %v1543 = vmul.f32 %v1525, %v1536
      %v1544 = vmul.f32 %v1526, %v1536
      %v1545 = vmul.f32 %v1527, %v1536
      %v1546 = vmul.f32 %v1528, %v1536
      %v1547 = vmul.f32 %v1529, %v1536
      %v1548 = vmul.f32 %v1530, %v1536
      %v1549 = vmul.f32 %v1531, %v1536
      %v1550 = vmul.f32 %v1532, %v1536
      %v1551 = vmul.f32 %v1533, %v1536
      %v1552 = vmul.f32 %v1534, %v1536
      %v1553 = vadd.f32 %v1502, %v1537
      %v1554 = vadd.f32 %v1503, %v1538
      %v1555 = vadd.f32 %v1504, %v1539
      %v1556 = vadd.f32 %v1505, %v1540
      %v1557 = vadd.f32 %v1506, %v1541
      %v1558 = vadd.f32 %v1507, %v1542
      %v1559 = vadd.f32 %v1508, %v1543
      %v1560 = vadd.f32 %v1509, %v1544
      %v1561 = vadd.f32 %v1510, %v1545
      %v1562 = vadd.f32 %v1511, %v1546
      %v1563 = vadd.f32 %v1512, %v1547
      %v1564 = vadd.f32 %v1513, %v1548
      %v1565 = vadd.f32 %v1514, %v1549
      %v1566 = vadd.f32 %v1515, %v1550
      %v1567 = vadd.f32 %v1516, %v1551
      %v1568 = vadd.f32 %v1517, %v1552
      %v1569 = vld [vmem:[%s1518 + $0x7] sm:$0xff]
      %v1570 = vld [vmem:[%s1518 + $0x1f] sm:$0xff]
      %v1571 = vld [vmem:[%s1518 + $0x37] sm:$0xff]
      %v1572 = vld [vmem:[%s1518 + $0x4f] sm:$0xff]
      %v1573 = vld [vmem:[%s1518 + $0x67] sm:$0xff]
      %v1574 = vld [vmem:[%s1518 + $0x7f] sm:$0xff]
      %v1575 = vld [vmem:[%s1518 + $0x97] sm:$0xff]
      %v1576 = vld [vmem:[%s1518 + $0xaf] sm:$0xff]
      %v1577 = vld [vmem:[%s1518 + $0x127] sm:$0xff]
      %v1578 = vld [vmem:[%s1518 + $0x13f] sm:$0xff]
      %v1579 = vld [vmem:[%s1518 + $0x157] sm:$0xff]
      %v1580 = vld [vmem:[%s1518 + $0x16f] sm:$0xff]
      %v1581 = vld [vmem:[%s1518 + $0x187] sm:$0xff]
      %v1582 = vld [vmem:[%s1518 + $0x19f] sm:$0xff]
      %v1583 = vld [vmem:[%s1518 + $0x1b7] sm:$0xff]
      %v1584 = vld [vmem:[%s1518 + $0x1cf] sm:$0xff]
      %v1585 = vld [vmem:[%s348 + $0x15] sm:$0x1]
      %v1586 = vperm.slane %v1585, 0
      %v1587 = vmul.f32 %v1569, %v1586
      %v1588 = vmul.f32 %v1570, %v1586
      %v1589 = vmul.f32 %v1571, %v1586
      %v1590 = vmul.f32 %v1572, %v1586
      %v1591 = vmul.f32 %v1573, %v1586
      %v1592 = vmul.f32 %v1574, %v1586
      %v1593 = vmul.f32 %v1575, %v1586
      %v1594 = vmul.f32 %v1576, %v1586
      %v1595 = vmul.f32 %v1577, %v1586
      %v1596 = vmul.f32 %v1578, %v1586
      %v1597 = vmul.f32 %v1579, %v1586
      %v1598 = vmul.f32 %v1580, %v1586
      %v1599 = vmul.f32 %v1581, %v1586
      %v1600 = vmul.f32 %v1582, %v1586
      %v1601 = vmul.f32 %v1583, %v1586
      %v1602 = vmul.f32 %v1584, %v1586
      %v1603 = vadd.f32 %v1553, %v1587
      %v1604 = vadd.f32 %v1554, %v1588
      %v1605 = vadd.f32 %v1555, %v1589
      %v1606 = vadd.f32 %v1556, %v1590
      %v1607 = vadd.f32 %v1557, %v1591
      %v1608 = vadd.f32 %v1558, %v1592
      %v1609 = vadd.f32 %v1559, %v1593
      %v1610 = vadd.f32 %v1560, %v1594
      %v1611 = vadd.f32 %v1561, %v1595
      %v1612 = vadd.f32 %v1562, %v1596
      %v1613 = vadd.f32 %v1563, %v1597
      %v1614 = vadd.f32 %v1564, %v1598
      %v1615 = vadd.f32 %v1565, %v1599
      %v1616 = vadd.f32 %v1566, %v1600
      %v1617 = vadd.f32 %v1567, %v1601
      %v1618 = vadd.f32 %v1568, %v1602
      %v1619 = vld [vmem:[%s1518 + $0x8] sm:$0xff]
      %v1620 = vld [vmem:[%s1518 + $0x20] sm:$0xff]
      %v1621 = vld [vmem:[%s1518 + $0x38] sm:$0xff]
      %v1622 = vld [vmem:[%s1518 + $0x50] sm:$0xff]
      %v1623 = vld [vmem:[%s1518 + $0x68] sm:$0xff]
      %v1624 = vld [vmem:[%s1518 + $0x80] sm:$0xff]
      %v1625 = vld [vmem:[%s1518 + $0x98] sm:$0xff]
      %v1626 = vld [vmem:[%s1518 + $0xb0] sm:$0xff]
      %v1627 = vld [vmem:[%s1518 + $0x128] sm:$0xff]
      %v1628 = vld [vmem:[%s1518 + $0x140] sm:$0xff]
      %v1629 = vld [vmem:[%s1518 + $0x158] sm:$0xff]
      %v1630 = vld [vmem:[%s1518 + $0x170] sm:$0xff]
      %v1631 = vld [vmem:[%s1518 + $0x188] sm:$0xff]
      %v1632 = vld [vmem:[%s1518 + $0x1a0] sm:$0xff]
      %v1633 = vld [vmem:[%s1518 + $0x1b8] sm:$0xff]
      %v1634 = vld [vmem:[%s1518 + $0x1d0] sm:$0xff]
      %v1635 = vld [vmem:[%s348 + $0x16] sm:$0x1]
      %v1636 = vperm.slane %v1635, 0
      %v1637 = vmul.f32 %v1619, %v1636
      %v1638 = vmul.f32 %v1620, %v1636
      %v1639 = vmul.f32 %v1621, %v1636
      %v1640 = vmul.f32 %v1622, %v1636
      %v1641 = vmul.f32 %v1623, %v1636
      %v1642 = vmul.f32 %v1624, %v1636
      %v1643 = vmul.f32 %v1625, %v1636
      %v1644 = vmul.f32 %v1626, %v1636
      %v1645 = vmul.f32 %v1627, %v1636
      %v1646 = vmul.f32 %v1628, %v1636
      %v1647 = vmul.f32 %v1629, %v1636
      %v1648 = vmul.f32 %v1630, %v1636
      %v1649 = vmul.f32 %v1631, %v1636
      %v1650 = vmul.f32 %v1632, %v1636
      %v1651 = vmul.f32 %v1633, %v1636
      %v1652 = vmul.f32 %v1634, %v1636
      %v1653 = vadd.f32 %v1603, %v1637
      %v1654 = vadd.f32 %v1604, %v1638
      %v1655 = vadd.f32 %v1605, %v1639
      %v1656 = vadd.f32 %v1606, %v1640
      %v1657 = vadd.f32 %v1607, %v1641
      %v1658 = vadd.f32 %v1608, %v1642
      %v1659 = vadd.f32 %v1609, %v1643
      %v1660 = vadd.f32 %v1610, %v1644
      %v1661 = vadd.f32 %v1611, %v1645
      %v1662 = vadd.f32 %v1612, %v1646
      %v1663 = vadd.f32 %v1613, %v1647
      %v1664 = vadd.f32 %v1614, %v1648
      %v1665 = vadd.f32 %v1615, %v1649
      %v1666 = vadd.f32 %v1616, %v1650
      %v1667 = vadd.f32 %v1617, %v1651
      %v1668 = vadd.f32 %v1618, %v1652
      %v1669 = vld [vmem:[%s1518 + $0x9] sm:$0xff]
      %v1670 = vld [vmem:[%s1518 + $0x21] sm:$0xff]
      %v1671 = vld [vmem:[%s1518 + $0x39] sm:$0xff]
      %v1672 = vld [vmem:[%s1518 + $0x51] sm:$0xff]
      %v1673 = vld [vmem:[%s1518 + $0x69] sm:$0xff]
      %v1674 = vld [vmem:[%s1518 + $0x81] sm:$0xff]
      %v1675 = vld [vmem:[%s1518 + $0x99] sm:$0xff]
      %v1676 = vld [vmem:[%s1518 + $0xb1] sm:$0xff]
      %v1677 = vld [vmem:[%s1518 + $0x129] sm:$0xff]
      %v1678 = vld [vmem:[%s1518 + $0x141] sm:$0xff]
      %v1679 = vld [vmem:[%s1518 + $0x159] sm:$0xff]
      %v1680 = vld [vmem:[%s1518 + $0x171] sm:$0xff]
      %v1681 = vld [vmem:[%s1518 + $0x189] sm:$0xff]
      %v1682 = vld [vmem:[%s1518 + $0x1a1] sm:$0xff]
      %v1683 = vld [vmem:[%s1518 + $0x1b9] sm:$0xff]
      %v1684 = vld [vmem:[%s1518 + $0x1d1] sm:$0xff]
      %v1685 = vld [vmem:[%s348 + $0x17] sm:$0x1]
      %v1686 = vperm.slane %v1685, 0
      %v1687 = vmul.f32 %v1669, %v1686
      %v1688 = vmul.f32 %v1670, %v1686
      %v1689 = vmul.f32 %v1671, %v1686
      %v1690 = vmul.f32 %v1672, %v1686
      %v1691 = vmul.f32 %v1673, %v1686
      %v1692 = vmul.f32 %v1674, %v1686
      %v1693 = vmul.f32 %v1675, %v1686
      %v1694 = vmul.f32 %v1676, %v1686
      %v1695 = vmul.f32 %v1677, %v1686
      %v1696 = vmul.f32 %v1678, %v1686
      %v1697 = vmul.f32 %v1679, %v1686
      %v1698 = vmul.f32 %v1680, %v1686
      %v1699 = vmul.f32 %v1681, %v1686
      %v1700 = vmul.f32 %v1682, %v1686
      %v1701 = vmul.f32 %v1683, %v1686
      %v1702 = vmul.f32 %v1684, %v1686
      %v1703 = vadd.f32 %v1653, %v1687
      %v1704 = vadd.f32 %v1654, %v1688
      %v1705 = vadd.f32 %v1655, %v1689
      %v1706 = vadd.f32 %v1656, %v1690
      %v1707 = vadd.f32 %v1657, %v1691
      %v1708 = vadd.f32 %v1658, %v1692
      %v1709 = vadd.f32 %v1659, %v1693
      %v1710 = vadd.f32 %v1660, %v1694
      %v1711 = vadd.f32 %v1661, %v1695
      %v1712 = vadd.f32 %v1662, %v1696
      %v1713 = vadd.f32 %v1663, %v1697
      %v1714 = vadd.f32 %v1664, %v1698
      %v1715 = vadd.f32 %v1665, %v1699
      %v1716 = vadd.f32 %v1666, %v1700
      %v1717 = vadd.f32 %v1667, %v1701
      %v1718 = vadd.f32 %v1668, %v1702
      %v1719 = vld [vmem:[%s1518 + $0xa] sm:$0xff]
      %v1720 = vld [vmem:[%s1518 + $0x22] sm:$0xff]
      %v1721 = vld [vmem:[%s1518 + $0x3a] sm:$0xff]
      %v1722 = vld [vmem:[%s1518 + $0x52] sm:$0xff]
      %v1723 = vld [vmem:[%s1518 + $0x6a] sm:$0xff]
      %v1724 = vld [vmem:[%s1518 + $0x82] sm:$0xff]
      %v1725 = vld [vmem:[%s1518 + $0x9a] sm:$0xff]
      %v1726 = vld [vmem:[%s1518 + $0xb2] sm:$0xff]
      %v1727 = vld [vmem:[%s1518 + $0x12a] sm:$0xff]
      %v1728 = vld [vmem:[%s1518 + $0x142] sm:$0xff]
      %v1729 = vld [vmem:[%s1518 + $0x15a] sm:$0xff]
      %v1730 = vld [vmem:[%s1518 + $0x172] sm:$0xff]
      %v1731 = vld [vmem:[%s1518 + $0x18a] sm:$0xff]
      %v1732 = vld [vmem:[%s1518 + $0x1a2] sm:$0xff]
      %v1733 = vld [vmem:[%s1518 + $0x1ba] sm:$0xff]
      %v1734 = vld [vmem:[%s1518 + $0x1d2] sm:$0xff]
      %v1735 = vld [vmem:[%s348 + $0x18] sm:$0x1]
      %v1736 = vperm.slane %v1735, 0
      %v1737 = vmul.f32 %v1719, %v1736
      %v1738 = vmul.f32 %v1720, %v1736
      %v1739 = vmul.f32 %v1721, %v1736
      %v1740 = vmul.f32 %v1722, %v1736
      %v1741 = vmul.f32 %v1723, %v1736
      %v1742 = vmul.f32 %v1724, %v1736
      %v1743 = vmul.f32 %v1725, %v1736
      %v1744 = vmul.f32 %v1726, %v1736
      %v1745 = vmul.f32 %v1727, %v1736
      %v1746 = vmul.f32 %v1728, %v1736
      %v1747 = vmul.f32 %v1729, %v1736
      %v1748 = vmul.f32 %v1730, %v1736
      %v1749 = vmul.f32 %v1731, %v1736
      %v1750 = vmul.f32 %v1732, %v1736
      %v1751 = vmul.f32 %v1733, %v1736
      %v1752 = vmul.f32 %v1734, %v1736
      %v1753 = vadd.f32 %v1703, %v1737
      %v1754 = vadd.f32 %v1704, %v1738
      %v1755 = vadd.f32 %v1705, %v1739
      %v1756 = vadd.f32 %v1706, %v1740
      %v1757 = vadd.f32 %v1707, %v1741
      %v1758 = vadd.f32 %v1708, %v1742
      %v1759 = vadd.f32 %v1709, %v1743
      %v1760 = vadd.f32 %v1710, %v1744
      %v1761 = vadd.f32 %v1711, %v1745
      %v1762 = vadd.f32 %v1712, %v1746
      %v1763 = vadd.f32 %v1713, %v1747
      %v1764 = vadd.f32 %v1714, %v1748
      %v1765 = vadd.f32 %v1715, %v1749
      %v1766 = vadd.f32 %v1716, %v1750
      %v1767 = vadd.f32 %v1717, %v1751
      %v1768 = vadd.f32 %v1718, %v1752
      %v1770 = vperm.slane %v515, 0
      %v1772 = vadd.f32 %v1753, %v1770
      %v1773 = vadd.f32 %v1754, %v1770
      %v1774 = vadd.f32 %v1755, %v1770
      %v1775 = vadd.f32 %v1756, %v1770
      %v1776 = vadd.f32 %v1757, %v1770
      %v1777 = vadd.f32 %v1758, %v1770
      %v1778 = vadd.f32 %v1759, %v1770
      %v1779 = vadd.f32 %v1760, %v1770
      %v1780 = vadd.f32 %v1761, %v1770
      %v1781 = vadd.f32 %v1762, %v1770
      %v1782 = vadd.f32 %v1763, %v1770
      %v1783 = vadd.f32 %v1764, %v1770
      %v1784 = vadd.f32 %v1765, %v1770
      %v1785 = vadd.f32 %v1766, %v1770
      %v1786 = vadd.f32 %v1767, %v1770
      %v1787 = vadd.f32 %v1768, %v1770
      %v1788 = vmul.f32 %v1772, 0.5
      %v1789 = vmul.f32 %v1773, 0.5
      %v1790 = vmul.f32 %v1774, 0.5
      %v1791 = vmul.f32 %v1775, 0.5
      %v1792 = vmul.f32 %v1776, 0.5
      %v1793 = vmul.f32 %v1777, 0.5
      %v1794 = vmul.f32 %v1778, 0.5
      %v1795 = vmul.f32 %v1779, 0.5
      %v1796 = vmul.f32 %v1780, 0.5
      %v1797 = vmul.f32 %v1781, 0.5
      %v1798 = vmul.f32 %v1782, 0.5
      %v1799 = vmul.f32 %v1783, 0.5
      %v1800 = vmul.f32 %v1784, 0.5
      %v1801 = vmul.f32 %v1785, 0.5
      %v1802 = vmul.f32 %v1786, 0.5
      %v1803 = vmul.f32 %v1787, 0.5
      %v1804 = vmul.f32 %v1772, 0.044715
      %v1805 = vmul.f32 %v1773, 0.044715
      %v1806 = vmul.f32 %v1774, 0.044715
      %v1807 = vmul.f32 %v1775, 0.044715
      %v1808 = vmul.f32 %v1776, 0.044715
      %v1809 = vmul.f32 %v1777, 0.044715
      %v1810 = vmul.f32 %v1778, 0.044715
      %v1811 = vmul.f32 %v1779, 0.044715
      %v1812 = vmul.f32 %v1780, 0.044715
      %v1813 = vmul.f32 %v1781, 0.044715
      %v1814 = vmul.f32 %v1782, 0.044715
      %v1815 = vmul.f32 %v1783, 0.044715
      %v1816 = vmul.f32 %v1784, 0.044715
      %v1817 = vmul.f32 %v1785, 0.044715
      %v1818 = vmul.f32 %v1786, 0.044715
      %v1819 = vmul.f32 %v1787, 0.044715
      %v1820 = vmul.f32 %v1804, %v1772
      %v1821 = vmul.f32 %v1805, %v1773
      %v1822 = vmul.f32 %v1806, %v1774
      %v1823 = vmul.f32 %v1807, %v1775
      %v1824 = vmul.f32 %v1808, %v1776
      %v1825 = vmul.f32 %v1809, %v1777
      %v1826 = vmul.f32 %v1810, %v1778
      %v1827 = vmul.f32 %v1811, %v1779
      %v1828 = vmul.f32 %v1812, %v1780
      %v1829 = vmul.f32 %v1813, %v1781
      %v1830 = vmul.f32 %v1814, %v1782
      %v1831 = vmul.f32 %v1815, %v1783
      %v1832 = vmul.f32 %v1816, %v1784
      %v1833 = vmul.f32 %v1817, %v1785
      %v1834 = vmul.f32 %v1818, %v1786
      %v1835 = vmul.f32 %v1819, %v1787
      %v1836 = vmul.f32 %v1820, %v1772
      %v1837 = vmul.f32 %v1821, %v1773
      %v1838 = vmul.f32 %v1822, %v1774
      %v1839 = vmul.f32 %v1823, %v1775
      %v1840 = vmul.f32 %v1824, %v1776
      %v1841 = vmul.f32 %v1825, %v1777
      %v1842 = vmul.f32 %v1826, %v1778
      %v1843 = vmul.f32 %v1827, %v1779
      %v1844 = vmul.f32 %v1828, %v1780
      %v1845 = vmul.f32 %v1829, %v1781
      %v1846 = vmul.f32 %v1830, %v1782
      %v1847 = vmul.f32 %v1831, %v1783
      %v1848 = vmul.f32 %v1832, %v1784
      %v1849 = vmul.f32 %v1833, %v1785
      %v1850 = vmul.f32 %v1834, %v1786
      %v1851 = vmul.f32 %v1835, %v1787
      %v1852 = vadd.f32 %v1772, %v1836
      %v1853 = vadd.f32 %v1773, %v1837
      %v1854 = vadd.f32 %v1774, %v1838
      %v1855 = vadd.f32 %v1775, %v1839
      %v1856 = vadd.f32 %v1776, %v1840
      %v1857 = vadd.f32 %v1777, %v1841
      %v1858 = vadd.f32 %v1778, %v1842
      %v1859 = vadd.f32 %v1779, %v1843
      %v1860 = vadd.f32 %v1780, %v1844
      %v1861 = vadd.f32 %v1781, %v1845
      %v1862 = vadd.f32 %v1782, %v1846
      %v1863 = vadd.f32 %v1783, %v1847
      %v1864 = vadd.f32 %v1784, %v1848
      %v1865 = vadd.f32 %v1785, %v1849
      %v1866 = vadd.f32 %v1786, %v1850
      %v1867 = vadd.f32 %v1787, %v1851
      %v1868 = vmul.f32 %v1852, 0.7978846
      %v1869 = vmul.f32 %v1853, 0.7978846
      %v1870 = vmul.f32 %v1854, 0.7978846
      %v1871 = vmul.f32 %v1855, 0.7978846
      %v1872 = vmul.f32 %v1856, 0.7978846
      %v1873 = vmul.f32 %v1857, 0.7978846
      %v1874 = vmul.f32 %v1858, 0.7978846
      %v1875 = vmul.f32 %v1859, 0.7978846
      %v1876 = vmul.f32 %v1860, 0.7978846
      %v1877 = vmul.f32 %v1861, 0.7978846
      %v1878 = vmul.f32 %v1862, 0.7978846
      %v1879 = vmul.f32 %v1863, 0.7978846
      %v1880 = vmul.f32 %v1864, 0.7978846
      %v1881 = vmul.f32 %v1865, 0.7978846
      %v1882 = vmul.f32 %v1866, 0.7978846
      %v1883 = vmul.f32 %v1867, 0.7978846
      %v1884 = vtanh.pop %v1868
      %v1885 = vtanh.pop %v1869
      %v1886 = vtanh.pop %v1870
      %v1887 = vtanh.pop %v1871
      %v1888 = vtanh.pop %v1872
      %v1889 = vtanh.pop %v1873
      %v1890 = vtanh.pop %v1874
      %v1891 = vtanh.pop %v1875
      %v1892 = vtanh.pop %v1876
      %v1893 = vtanh.pop %v1877
      %v1894 = vtanh.pop %v1878
      %v1895 = vtanh.pop %v1879
      %v1896 = vtanh.pop %v1880
      %v1897 = vtanh.pop %v1881
      %v1898 = vtanh.pop %v1882
      %v1899 = vtanh.pop %v1883
      %v1900 = vadd.f32 %v1884, 1.0
      %v1901 = vadd.f32 %v1885, 1.0
      %v1902 = vadd.f32 %v1886, 1.0
      %v1903 = vadd.f32 %v1887, 1.0
      %v1904 = vadd.f32 %v1888, 1.0
      %v1905 = vadd.f32 %v1889, 1.0
      %v1906 = vadd.f32 %v1890, 1.0
      %v1907 = vadd.f32 %v1891, 1.0
      %v1908 = vadd.f32 %v1892, 1.0
      %v1909 = vadd.f32 %v1893, 1.0
      %v1910 = vadd.f32 %v1894, 1.0
      %v1911 = vadd.f32 %v1895, 1.0
      %v1912 = vadd.f32 %v1896, 1.0
      %v1913 = vadd.f32 %v1897, 1.0
      %v1914 = vadd.f32 %v1898, 1.0
      %v1915 = vadd.f32 %v1899, 1.0
      %v1916 = vmul.f32 %v1788, %v1900
      %v1917 = vmul.f32 %v1789, %v1901
      %v1918 = vmul.f32 %v1790, %v1902
      %v1919 = vmul.f32 %v1791, %v1903
      %v1920 = vmul.f32 %v1792, %v1904
      %v1921 = vmul.f32 %v1793, %v1905
      %v1922 = vmul.f32 %v1794, %v1906
      %v1923 = vmul.f32 %v1795, %v1907
      %v1924 = vmul.f32 %v1796, %v1908
      %v1925 = vmul.f32 %v1797, %v1909
      %v1926 = vmul.f32 %v1798, %v1910
      %v1927 = vmul.f32 %v1799, %v1911
      %v1928 = vmul.f32 %v1800, %v1912
      %v1929 = vmul.f32 %v1801, %v1913
      %v1930 = vmul.f32 %v1802, %v1914
      %v1931 = vmul.f32 %v1803, %v1915
      %v1932 = vpack.c.bf16 %v1916, %v1916
      %v1933 = vpack.c.bf16 %v1917, %v1917
      %v1934 = vpack.c.bf16 %v1918, %v1918
      %v1935 = vpack.c.bf16 %v1919, %v1919
      %v1936 = vpack.c.bf16 %v1920, %v1920
      %v1937 = vpack.c.bf16 %v1921, %v1921
      %v1938 = vpack.c.bf16 %v1922, %v1922
      %v1939 = vpack.c.bf16 %v1923, %v1923
      %v1940 = vpack.c.bf16 %v1924, %v1924
      %v1941 = vpack.c.bf16 %v1925, %v1925
      %v1942 = vpack.c.bf16 %v1926, %v1926
      %v1943 = vpack.c.bf16 %v1927, %v1927
      %v1944 = vpack.c.bf16 %v1928, %v1928
      %v1945 = vpack.c.bf16 %v1929, %v1929
      %v1946 = vpack.c.bf16 %v1930, %v1930
      %v1947 = vpack.c.bf16 %v1931, %v1931
      %1948 = vst [vmem:[%s360] sm:$0xf] %v1932
      %1949 = vst [vmem:[%s360 + $0x4] sm:$0xf] %v1933
      %1950 = vst [vmem:[%s360 + $0x8] sm:$0xf] %v1934
      %1951 = vst [vmem:[%s360 + $0xc] sm:$0xf] %v1935
      %1952 = vst [vmem:[%s360 + $0x10] sm:$0xf] %v1936
      %1953 = vst [vmem:[%s360 + $0x14] sm:$0xf] %v1937
      %1954 = vst [vmem:[%s360 + $0x18] sm:$0xf] %v1938
      %1955 = vst [vmem:[%s360 + $0x1c] sm:$0xf] %v1939
      %1956 = vst [vmem:[%s360 + $0x20] sm:$0xf] %v1940
      %1957 = vst [vmem:[%s360 + $0x24] sm:$0xf] %v1941
      %1958 = vst [vmem:[%s360 + $0x28] sm:$0xf] %v1942
      %1959 = vst [vmem:[%s360 + $0x2c] sm:$0xf] %v1943
      %1960 = vst [vmem:[%s360 + $0x30] sm:$0xf] %v1944
      %1961 = vst [vmem:[%s360 + $0x34] sm:$0xf] %v1945
      %1962 = vst [vmem:[%s360 + $0x38] sm:$0xf] %v1946
      %1963 = vst [vmem:[%s360 + $0x3c] sm:$0xf] %v1947
      %v1964 = vld [vmem:[%s360] sm:$0xf]
      %v1965 = vld [vmem:[%s360 + $0x4] sm:$0xf]
      %v1966 = vld [vmem:[%s360 + $0x8] sm:$0xf]
      %v1967 = vld [vmem:[%s360 + $0xc] sm:$0xf]
      %v1968 = vld [vmem:[%s360 + $0x10] sm:$0xf]
      %v1969 = vld [vmem:[%s360 + $0x14] sm:$0xf]
      %v1970 = vld [vmem:[%s360 + $0x18] sm:$0xf]
      %v1971 = vld [vmem:[%s360 + $0x1c] sm:$0xf]
      %v1972 = vld [vmem:[%s360 + $0x20] sm:$0xf]
      %v1973 = vld [vmem:[%s360 + $0x24] sm:$0xf]
      %v1974 = vld [vmem:[%s360 + $0x28] sm:$0xf]
      %v1975 = vld [vmem:[%s360 + $0x2c] sm:$0xf]
      %v1976 = vld [vmem:[%s360 + $0x30] sm:$0xf]
      %v1977 = vld [vmem:[%s360 + $0x34] sm:$0xf]
      %v1978 = vld [vmem:[%s360 + $0x38] sm:$0xf]
      %v1979 = vld [vmem:[%s360 + $0x3c] sm:$0xf]
      %v1980 = vunpack.c.l.bf16 %v1964
      %v1981 = vunpack.c.l.bf16 %v1965
      %v1982 = vunpack.c.l.bf16 %v1966
      %v1983 = vunpack.c.l.bf16 %v1967
      %v1984 = vunpack.c.l.bf16 %v1968
      %v1985 = vunpack.c.l.bf16 %v1969
      %v1986 = vunpack.c.l.bf16 %v1970
      %v1987 = vunpack.c.l.bf16 %v1971
      %v1988 = vunpack.c.l.bf16 %v1972
      %v1989 = vunpack.c.l.bf16 %v1973
      %v1990 = vunpack.c.l.bf16 %v1974
      %v1991 = vunpack.c.l.bf16 %v1975
      %v1992 = vunpack.c.l.bf16 %v1976
      %v1993 = vunpack.c.l.bf16 %v1977
      %v1994 = vunpack.c.l.bf16 %v1978
      %v1995 = vunpack.c.l.bf16 %v1979
      %s1996 = smul.u32 %s22, 128
      %v1997 = vlaneseq
      %v1998 = vand.u32 %v1997, 127
      %v1999 = vstv %s1996
      %v2000 = vadd.s32 %v1998, %v1999
      %vm2001 = vcmp.lt.s32.totalorder %v2000, 320
      %v2002 = vsel %vm2001, 1, 0
      %v2003 = vcvt.s32.f32 %v2002
      %2004 = vmatpush.msra.mxu0 %v1995
      %2005 = vmatpush.msra.mxu0 %v1994
      %2006 = vmatpush.msra.mxu0 %v1993
      %2007 = vmatpush.msra.mxu0 %v1992
      %2008 = vmatpush.msra.mxu0 %v1991
      %2009 = vmatpush.msra.mxu0 %v1990
      %2010 = vmatpush.msra.mxu0 %v1989
      %2011 = vmatpush.msra.mxu0 %v1988
      %2012 = vmatpush.msra.mxu0 %v1987
      %2013 = vmatpush.msra.mxu0 %v1986
      %2014 = vmatpush.msra.mxu0 %v1985
      %2015 = vmatpush.msra.mxu0 %v1984
      %2016 = vmatpush.msra.mxu0 %v1983
      %2017 = vmatpush.msra.mxu0 %v1982
      %2018 = vmatpush.msra.mxu0 %v1981
      %2019 = vmatpush.msra.mxu0 %v1980
      %2020 = vmatmul.f32.gmra.mxu0 %v2003
      %v2021 = vpop.f32.mrf.mxu0
      %v2022 = vadd.f32 0.0, %v2021
      %2023 = vdwg.mxu0
      %v2024 = vmul.f32 %v1980, %v1980
      %v2025 = vmul.f32 %v1981, %v1981
      %v2026 = vmul.f32 %v1982, %v1982
      %v2027 = vmul.f32 %v1983, %v1983
      %v2028 = vmul.f32 %v1984, %v1984
      %v2029 = vmul.f32 %v1985, %v1985
      %v2030 = vmul.f32 %v1986, %v1986
      %v2031 = vmul.f32 %v1987, %v1987
      %v2032 = vmul.f32 %v1988, %v1988
      %v2033 = vmul.f32 %v1989, %v1989
      %v2034 = vmul.f32 %v1990, %v1990
      %v2035 = vmul.f32 %v1991, %v1991
      %v2036 = vmul.f32 %v1992, %v1992
      %v2037 = vmul.f32 %v1993, %v1993
      %v2038 = vmul.f32 %v1994, %v1994
      %v2039 = vmul.f32 %v1995, %v1995
      %2040 = vmatpush.msra.mxu0 %v2039
      %2041 = vmatpush.msra.mxu0 %v2038
      %2042 = vmatpush.msra.mxu0 %v2037
      %2043 = vmatpush.msra.mxu0 %v2036
      %2044 = vmatpush.msra.mxu0 %v2035
      %2045 = vmatpush.msra.mxu0 %v2034
      %2046 = vmatpush.msra.mxu0 %v2033
      %2047 = vmatpush.msra.mxu0 %v2032
      %2048 = vmatpush.msra.mxu0 %v2031
      %2049 = vmatpush.msra.mxu0 %v2030
      %2050 = vmatpush.msra.mxu0 %v2029
      %2051 = vmatpush.msra.mxu0 %v2028
      %2052 = vmatpush.msra.mxu0 %v2027
      %2053 = vmatpush.msra.mxu0 %v2026
      %2054 = vmatpush.msra.mxu0 %v2025
      %2055 = vmatpush.msra.mxu0 %v2024
      %2056 = vmatmul.f32.gmra.mxu0 %v2003
      %v2057 = vpop.f32.mrf.mxu0
      %v2058 = vadd.f32 0.0, %v2057
      %2059 = vdwg.mxu0
      %v2060 = vlaneseq
      %v2061 = vshrl.u32 %v2060, 7
      %vm2062 = vcmp.eq.s32.totalorder %v2061, 0
      %v2063 = vsel %vm2062, 1, 0
      %vm2064 = vcmp.eq.s32.totalorder %v2063, 1
      %v2065 = vperm.slane %v2022, 0
      %v2066 = vsel %vm2064, %v2065, 0.0
      %vm2067 = vcmp.eq.s32.totalorder %v2061, 1
      %v2068 = vsel %vm2067, 1, 0
      %vm2069 = vcmp.eq.s32.totalorder %v2068, 1
      %v2070 = vperm.slane %v2058, 0
      %v2071 = vsel %vm2069, %v2070, 0.0
      %v2072 = vadd.f32 %v2066, %v2071
      %2073 = vst [vmem:[%s368] sm:$0xff] %v2072
      %s2074 = smul.u32 2, %s22
      %p2075 = scmp.lt.s32.totalorder %s2074, 5
      %s2076 = scalar_select %p2075, %s2074, 5
      %p2077 = scmp.lt.s32.totalorder %s23, 0
      %s2078 = scalar_select %p2077, %s23, 0
      %s2079 = smul.addr %s2076, 8
      %s2080 = sadd.s32 %s2078, %s2079
      %s2081 = smul.addr %s2080, 4
      %s2082 = scalar_lea.vmem %s5, %s2081
      %p2083 = scmp.lt.s32.totalorder %s22, 2
      %s2084 = scalar_select %p2083, %s22, 2
      %p2085 = scmp.lt.s32.totalorder %s23, 0
      %s2086 = scalar_select %p2085, %s23, 0
      %s2087 = sadd.s32 %s2086, %s2084
      %s2088 = smul.addr %s2087, 8
      %s2089 = scalar_lea.vmem %s6, %s2088
      // Predicated region
      $region41: #{conv_mixer_forward.7} parent=39 // pred_check
        %p2090 = pneg %p182
      $region42: #{conv_mixer_forward.7} parent=39 // pred_check_branch
        %2092 = sbr.rel (%p2090) target = $region44
      $region43: #{conv_mixer_forward.7} parent=39 // pred_region
        %s2093 = smul.u32 2, %s22
      $region44: #{conv_mixer_forward.7} parent=39 // pred_fallthru
        _
      // Predicated region
      $region45: #{conv_mixer_forward.7} parent=39 // pred_check
        %p2094 = pneg %p210
      $region46: #{conv_mixer_forward.7} parent=39 // pred_check_branch
        %2096 = sbr.rel (%p2094) target = $region48
      $region47: #{conv_mixer_forward.7} parent=39 // pred_region
        _
      $region48: #{conv_mixer_forward.7} parent=39 // pred_fallthru
        _
    $region40: #{conv_mixer_forward.7} parent=5 // pred_fallthru
      _
    %p2097 = scmp.le.s32.totalorder 2, %s13
    // Predicated region
    $region49: #{conv_mixer_forward.7} parent=5 // pred_check
      %p2098 = pneg %p2097
    $region50: #{conv_mixer_forward.7} parent=5 // pred_check_branch
      %2100 = sbr.rel (%p2098) target = $region52
    $region51: #{conv_mixer_forward.7} parent=5 // pred_region
      %s2101 = ssub.s32 %s13, 2
      // Predicated region
      $region53: #{conv_mixer_forward.7} parent=51 // pred_check
        %p2102 = pneg %p188
      $region54: #{conv_mixer_forward.7} parent=51 // pred_check_branch
        %2104 = sbr.rel (%p2102) target = $region56
      $region55: #{conv_mixer_forward.7} parent=51 // pred_region
        %s2105 = smul.u32 2, %s24
        %p2106 = scmp.lt.s32.totalorder %s2105, 5
        %s2107 = scalar_select %p2106, %s2105, 5
        %p2108 = scmp.lt.s32.totalorder %s25, 0
        %s2109 = scalar_select %p2108, %s25, 0
        %s2110 = smul.addr %s2107, 8
        %s2111 = sadd.s32 %s2109, %s2110
        %s2112 = smul.addr %s2111, 4
        %s2113 = scalar_lea.vmem %s5, %s2112
      $region56: #{conv_mixer_forward.7} parent=51 // pred_fallthru
        _
      // Predicated region
      $region57: #{conv_mixer_forward.7} parent=51 // pred_check
        %p2114 = pneg %p216
      $region58: #{conv_mixer_forward.7} parent=51 // pred_check_branch
        %2116 = sbr.rel (%p2114) target = $region60
      $region59: #{conv_mixer_forward.7} parent=51 // pred_region
        %p2117 = scmp.lt.s32.totalorder %s24, 2
        %s2118 = scalar_select %p2117, %s24, 2
        %p2119 = scmp.lt.s32.totalorder %s25, 0
        %s2120 = scalar_select %p2119, %s25, 0
        %s2121 = sadd.s32 %s2120, %s2118
        %s2122 = smul.addr %s2121, 8
        %s2123 = scalar_lea.vmem %s6, %s2122
      $region60: #{conv_mixer_forward.7} parent=51 // pred_fallthru
        _
    $region52: #{conv_mixer_forward.7} parent=5 // pred_fallthru
      _
  $region6: #{conv_mixer_forward.7} parent=0 // loop_footer
    %s17 = sadd.s32 1, %s13
  $region7: #{conv_mixer_forward.7} parent=0 // loop_footer_branch
    %12 = sbr.rel target = $region3
  $region8: #{conv_mixer_forward.7} parent=0 // loop_exit
    _

</llo_original>
